<compile_context>
chip_gen: v7x
topology: tpu7x:2x2x1
jax: 0.10.0
libtpu: 0.0.40
codegen_flags: <defaults>
</compile_context>

<pallas_src>
import functools

import jax
import jax.numpy as jnp
from jax.experimental import pallas as pl
from jax.experimental.pallas import tpu as pltpu

_BOTTLENECK_EXPANSION = 4
_BN_EPS = 1e-5
_LANE = 128


# ----------------------------- small helpers -----------------------------

def _round_up(x, m):
    return ((x + m - 1) // m) * m


@functools.lru_cache(maxsize=None)
def _vmem_budget_and_tm_cap():
    """Generation-aware (vmem_limit_bytes, max row tile).

    v5e/v6e have 128 MiB physical VMEM -> larger budget and tm up to 512;
    v7x has 64 MiB per TensorCore -> conservative budget and tm <= 256.
    """
    try:
        cap = int(getattr(pltpu.get_tpu_info(), "vmem_capacity_bytes", 0))
    except Exception:  # conservative fallback if the query is unavailable
        cap = 0
    if cap >= 100 * 1024 * 1024:            # v5e / v6e
        return 64 * 1024 * 1024, 512
    return 40 * 1024 * 1024, 256            # v7x (64 MiB) or unknown


def _choose_tm(m, cap):
    """Row tile: multiple of 8, capped, >= 2 grid steps when possible."""
    if m <= 8:
        return 8
    return min(cap, _round_up((m + 1) // 2, 8))


def _choose_tk(k):
    for tk in (512, 256, 128):
        if k % tk == 0:
            return tk
    return k


def _choose_tn(n):
    """Lane-dense output-channel tile (128 on v5e-friendly sizes, 256 otherwise)."""
    return 256 if (n % 256 == 0) else n


def _pad_axis(a, axis, target):
    cur = a.shape[axis]
    if cur == target:
        return a
    pads = [(0, 0)] * a.ndim
    pads[axis] = (0, target - cur)
    return jnp.pad(a, pads)


# ----------------------------- Pallas kernels -----------------------------

def _reduce_kernel(x_ref, w_ref, b_ref, o_ref, acc_ref):
    """relu(x @ w + b) with K-tiled accumulation in f32 VMEM scratch."""
    @pl.when(pl.program_id(1) == 0)
    def _():
        acc_ref[...] = jnp.zeros_like(acc_ref)

    acc_ref[...] += jnp.dot(x_ref[...], w_ref[...],
                            preferred_element_type=jnp.float32)

    @pl.when(pl.program_id(1) == pl.num_programs(1) - 1)
    def _():
        o_ref[...] = jnp.maximum(acc_ref[...] + b_ref[...], 0.0).astype(o_ref.dtype)


def _conv3x3_kernel(x_ref, w_ref, b_ref, o_ref, acc_ref, *, h_out, w_out, dilation):
    """Dilated 3x3 conv + BN + ReLU for one (batch, c_out-tile) grid step.

    x_ref holds the whole spatially padded image of one batch element
    (1, Hp, Wp, C_in); the nine tap contributions are M = H*W matmuls
    accumulated into an f32 VMEM scratch ref (no chained value accumulator).
    """
    d = dilation
    x = x_ref[0]                                        # (Hp, Wp, C_in) bf16
    acc_ref[...] = jnp.zeros_like(acc_ref)
    for kh in range(3):
        row = x[kh * d:kh * d + h_out]                  # (H, Wp, C_in) major-dim slice
        for kw in range(3):
            # TODO(synk): unaligned sublane slice; could become pltpu.roll (XLU).
            xs = row[:, kw * d:kw * d + w_out, :].reshape(h_out * w_out, -1)
            acc_ref[...] += jnp.dot(xs, w_ref[kh * 3 + kw],
                                    preferred_element_type=jnp.float32)
    out = jnp.maximum(acc_ref[...] + b_ref[...], 0.0)
    o_ref[...] = out.reshape(o_ref.shape).astype(o_ref.dtype)


def _increase_residual_kernel(h_ref, s_ref, wi_ref, bi_ref, ws_ref, bs_ref, o_ref):
    """relu(h @ w_inc + b_inc + s @ w_sc + b_sc) — increase + shortcut fused."""
    acc = jnp.dot(h_ref[...], wi_ref[...], preferred_element_type=jnp.float32)
    acc += jnp.dot(s_ref[...], ws_ref[...], preferred_element_type=jnp.float32)
    acc += bi_ref[...] + bs_ref[...]
    o_ref[...] = jnp.maximum(acc, 0.0).astype(o_ref.dtype)


def _increase_identity_kernel(h_ref, s_ref, wi_ref, bi_ref, o_ref):
    """relu(h @ w_inc + b_inc + s) — increase + identity residual fused.

    Note: the identity residual is the bf16-cast input (deliberate precision
    loss, within the stated tolerance)."""
    acc = jnp.dot(h_ref[...], wi_ref[...], preferred_element_type=jnp.float32)
    acc += bi_ref[...] + s_ref[...].astype(jnp.float32)
    o_ref[...] = jnp.maximum(acc, 0.0).astype(o_ref.dtype)


# ----------------------------- kernel wrappers -----------------------------

def matmul_bn_relu(x2d, w, b, out_dtype=jnp.bfloat16):
    """relu(x2d @ w + b), M- and K-tiled (x2d bf16 (M,K), w bf16 (K,N), b f32 (1,N))."""
    vmem_limit, tm_cap = _vmem_budget_and_tm_cap()
    m, k = x2d.shape
    n = w.shape[1]
    tm = _choose_tm(m, tm_cap)
    mp = _round_up(m, tm)
    x2d = _pad_axis(x2d, 0, mp)
    tk = _choose_tk(k)
    grid = (mp // tm, k // tk)

    cost = pl.CostEstimate(
        flops=2 * mp * k * n, transcendentals=0,
        bytes_accessed=x2d.size * 2 + w.size * 2 + b.size * 4 + mp * n * 2)

    out = pl.pallas_call(
        _reduce_kernel,
        out_shape=jax.ShapeDtypeStruct((mp, n), out_dtype),
        grid=grid,
        in_specs=[pl.BlockSpec((tm, tk), lambda i, kk: (i, kk)),
                  pl.BlockSpec((tk, n), lambda i, kk: (kk, 0)),
                  pl.BlockSpec((1, n), lambda i, kk: (0, 0))],
        out_specs=pl.BlockSpec((tm, n), lambda i, kk: (i, 0)),
        scratch_shapes=[pltpu.VMEM((tm, n), jnp.float32)],
        compiler_params=pltpu.CompilerParams(
            dimension_semantics=("parallel", "arbitrary"),
            vmem_limit_bytes=vmem_limit),
        cost_estimate=cost,
    )(x2d, w, b)
    # Padded M-tail rows hold relu(bias) garbage -> always slice before reuse.
    return out[:m]


def conv3x3_bn_relu(h_nhwc, w_taps, b, dilation):
    """Dilated 3x3 conv (stride 1, pad=dilation) + BN + ReLU.

    One grid step = one batch element x one c_out tile; the activation halo is
    read once per step and the nine tap matmuls accumulate into VMEM scratch.
    """
    vmem_limit, _ = _vmem_budget_and_tm_cap()
    n, hh, ww, c_in = h_nhwc.shape
    c_out = w_taps.shape[-1]
    d = dilation
    xp = jnp.pad(h_nhwc, ((0, 0), (d, d), (d, d), (0, 0)))   # (N, H+2d, W+2d, C)
    hp, wp = hh + 2 * d, ww + 2 * d

    tco = _choose_tn(c_out)
    n_co = c_out // tco

    kern = functools.partial(_conv3x3_kernel, h_out=hh, w_out=ww, dilation=d)

    cost = pl.CostEstimate(
        flops=2 * n * hh * ww * 9 * c_in * c_out, transcendentals=0,
        bytes_accessed=n_co * xp.size * 2 + w_taps.size * 2 + b.size * 4
        + n * hh * ww * c_out * 2)

    out = pl.pallas_call(
        kern,
        out_shape=jax.ShapeDtypeStruct((n, hh, ww, c_out), jnp.bfloat16),
        grid=(n, n_co),
        in_specs=[
            pl.BlockSpec((1, hp, wp, c_in), lambda ni, ci: (ni, 0, 0, 0)),
            # TODO(synk): constant-index weight block is still double-buffered;
            # pl.Buffered(1) / a one-shot DMA would save VMEM on v7x.
            pl.BlockSpec((9, c_in, tco), lambda ni, ci: (0, 0, ci)),
            pl.BlockSpec((1, tco), lambda ni, ci: (0, ci)),
        ],
        out_specs=pl.BlockSpec((1, hh, ww, tco), lambda ni, ci: (ni, 0, 0, ci)),
        scratch_shapes=[pltpu.VMEM((hh * ww, tco), jnp.float32)],
        compiler_params=pltpu.CompilerParams(
            dimension_semantics=("parallel", "parallel"),
            vmem_limit_bytes=vmem_limit),
        cost_estimate=cost,
    )(xp, w_taps, b)
    return out.reshape(n * hh * ww, c_out)


def increase_add_relu(h2d, sc2d, wi, bi, ws=None, bs=None, out_dtype=jnp.bfloat16):
    """Fused: relu(h2d @ wi + bi + shortcut); shortcut is either sc2d @ ws + bs
    (downsample) or sc2d itself (identity).  M- and N-tiled."""
    vmem_limit, tm_cap = _vmem_budget_and_tm_cap()
    m, k_h = h2d.shape
    n_out = wi.shape[1]
    tm = _choose_tm(m, tm_cap)
    mp = _round_up(m, tm)
    h2d = _pad_axis(h2d, 0, mp)
    sc2d = _pad_axis(sc2d, 0, mp)
    k_s = sc2d.shape[1]
    tn = _choose_tn(n_out)
    grid = (mp // tm, n_out // tn)

    h_spec = pl.BlockSpec((tm, k_h), lambda i, j: (i, 0))
    wi_spec = pl.BlockSpec((k_h, tn), lambda i, j: (0, j))
    bias_spec = pl.BlockSpec((1, tn), lambda i, j: (0, j))
    o_spec = pl.BlockSpec((tm, tn), lambda i, j: (i, j))
    cp = pltpu.CompilerParams(dimension_semantics=("parallel", "parallel"),
                              vmem_limit_bytes=vmem_limit)

    if ws is not None:
        s_spec = pl.BlockSpec((tm, k_s), lambda i, j: (i, 0))
        ws_spec = pl.BlockSpec((k_s, tn), lambda i, j: (0, j))
        cost = pl.CostEstimate(
            flops=2 * mp * n_out * (k_h + k_s), transcendentals=0,
            bytes_accessed=(h2d.size + sc2d.size) * 2 * (n_out // tn)
            + (wi.size + ws.size) * 2 + (bi.size + bs.size) * 4 + mp * n_out * 2)
        out = pl.pallas_call(
            _increase_residual_kernel,
            out_shape=jax.ShapeDtypeStruct((mp, n_out), out_dtype),
            grid=grid,
            in_specs=[h_spec, s_spec, wi_spec, bias_spec, ws_spec, bias_spec],
            out_specs=o_spec,
            compiler_params=cp, cost_estimate=cost,
        )(h2d, sc2d, wi, bi, ws, bs)
    else:
        # Identity residual: the shortcut block must be the same (i, j) channel
        # tile as the output (c_in_p == c_out_p is asserted in the wrapper).
        s_spec = pl.BlockSpec((tm, tn), lambda i, j: (i, j))
        cost = pl.CostEstimate(
            flops=2 * mp * n_out * k_h, transcendentals=0,
            bytes_accessed=h2d.size * 2 * (n_out // tn) + sc2d.size * 2
            + wi.size * 2 + bi.size * 4 + mp * n_out * 2)
        out = pl.pallas_call(
            _increase_identity_kernel,
            out_shape=jax.ShapeDtypeStruct((mp, n_out), out_dtype),
            grid=grid,
            in_specs=[h_spec, s_spec, wi_spec, bias_spec],
            out_specs=o_spec,
            compiler_params=cp, cost_estimate=cost,
        )(h2d, sc2d, wi, bi)
    # Padded M-tail rows hold relu(bias) garbage -> always slice before reuse.
    return out[:m]


# ----------------------------- BN folding / weight prep -----------------------------

def fold_bn(w_oihw, gamma, beta, mean, var):
    """Fold inference-mode BatchNorm into conv weight + bias."""
    scale = gamma / jnp.sqrt(var + _BN_EPS)
    return w_oihw * scale[:, None, None, None], beta - mean * scale


def _prep_1x1(params, c_in_p, c_out_p):
    w, b = fold_bn(*params)
    w2 = w[:, :, 0, 0].T                                    # (c_in, c_out)
    w2 = _pad_axis(_pad_axis(w2, 0, c_in_p), 1, c_out_p).astype(jnp.bfloat16)
    b2 = _pad_axis(b.reshape(1, -1), 1, c_out_p).astype(jnp.float32)
    return w2, b2


def _prep_3x3(params, c_in_p, c_out_p):
    w, b = fold_bn(*params)
    w4 = jnp.transpose(w, (2, 3, 1, 0))                     # (3, 3, c_in, c_out)
    w4 = _pad_axis(_pad_axis(w4, 2, c_in_p), 3, c_out_p).astype(jnp.bfloat16)
    w4 = w4.reshape(9, c_in_p, c_out_p)                     # taps flattened
    b2 = _pad_axis(b.reshape(1, -1), 1, c_out_p).astype(jnp.float32)
    return w4, b2


# ----------------------------- bottleneck forward -----------------------------

def bottleneck_forward(x_nchw, params, *, stride, dilation, downsample):
    n = x_nchw.shape[0]
    c_in = x_nchw.shape[1]
    mid = params["reduce"][0].shape[0]
    c_out = params["increase"][0].shape[0]
    if not downsample:
        # PyTorch identity shortcut only type-checks when shapes match.
        assert stride == 1 and c_in == c_out, \
            "identity shortcut requires stride == 1 and c_in == c_out"

    c_in_p = _round_up(c_in, _LANE)
    mid_p = _round_up(mid, _LANE)
    c_out_p = _round_up(c_out, _LANE)

    # TODO(synk): this NCHW->NHWC + ::stride + pad + bf16 chain (and the final
    # NHWC->NCHW transpose below) stays as a fused XLA pass rather than being
    # folded into the first/last pallas_call.
    x = jnp.transpose(x_nchw, (0, 2, 3, 1))                 # NCHW -> NHWC
    xs = x[:, ::stride, ::stride, :]
    ho, wo = xs.shape[1], xs.shape[2]
    m = n * ho * wo
    xs2d = _pad_axis(xs, 3, c_in_p).reshape(m, c_in_p).astype(jnp.bfloat16)

    # --- reduce: 1x1 conv (stride) + BN + ReLU (M/K-tiled matmul) ---
    w_r, b_r = _prep_1x1(params["reduce"], c_in_p, mid_p)
    h2d = matmul_bn_relu(xs2d, w_r, b_r)                    # (m, mid_p) bf16

    # --- conv3x3: dilated 3x3 conv + BN + ReLU (halo read + scratch acc) ---
    w_c, b_c = _prep_3x3(params["conv3x3"], mid_p, mid_p)
    h_img = h2d.reshape(n, ho, wo, mid_p)
    h2d = conv3x3_bn_relu(h_img, w_c, b_c, dilation)        # (m, mid_p) bf16

    # --- increase 1x1 conv + shortcut + residual add + ReLU, fused ---
    w_i, b_i = _prep_1x1(params["increase"], mid_p, c_out_p)
    if downsample:
        w_s, b_s = _prep_1x1(params["shortcut"], c_in_p, c_out_p)
        out2d = increase_add_relu(h2d, xs2d, w_i, b_i, w_s, b_s)
    else:
        out2d = increase_add_relu(h2d, xs2d, w_i, b_i)      # c_in_p == c_out_p

    out = out2d[:, :c_out].reshape(n, ho, wo, c_out)
    return jnp.transpose(out, (0, 3, 1, 2)).astype(x_nchw.dtype)


# ----------------------------- pure-JAX reference -----------------------------

def _conv_bn_ref(x, w, gamma, beta, mean, var, stride, padding, dilation, relu):
    y = jax.lax.conv_general_dilated(
        x, w, (stride, stride), [(padding, padding), (padding, padding)],
        rhs_dilation=(dilation, dilation),
        dimension_numbers=("NCHW", "OIHW", "NCHW"))
    scale = gamma / jnp.sqrt(var + _BN_EPS)
    y = y * scale[None, :, None, None] + (beta - mean * scale)[None, :, None, None]
    return jnp.maximum(y, 0.0) if relu else y


def bottleneck_ref(x, params, *, stride, dilation, downsample):
    h = _conv_bn_ref(x, *params["reduce"], stride, 0, 1, True)
    h = _conv_bn_ref(h, *params["conv3x3"], 1, dilation, dilation, True)
    h = _conv_bn_ref(h, *params["increase"], 1, 0, 1, False)
    sc = _conv_bn_ref(x, *params["shortcut"], stride, 0, 1, False) if downsample else x
    return jnp.maximum(h + sc, 0.0)


# ----------------------------- parameter init -----------------------------

def _make_conv_bn_params(key, c_in, c_out, ksize):
    kw, kg, kb, km, kv = jax.random.split(key, 5)
    w = 0.1 * jax.random.normal(kw, (c_out, c_in, ksize, ksize), jnp.float32)
    gamma = 1.0 + 0.1 * jax.random.normal(kg, (c_out,), jnp.float32)
    beta = 0.1 * jax.random.normal(kb, (c_out,), jnp.float32)
    mean = 0.1 * jax.random.normal(km, (c_out,), jnp.float32)
    var = jax.random.uniform(kv, (c_out,), jnp.float32, 0.5, 1.5)
    return (w, gamma, beta, mean, var)


def make_bottleneck_params(key, in_ch, out_ch, downsample):
    mid_ch = out_ch // _BOTTLENECK_EXPANSION
    k1, k2, k3, k4 = jax.random.split(key, 4)
    params = {
        "reduce":   _make_conv_bn_params(k1, in_ch, mid_ch, 1),
        "conv3x3":  _make_conv_bn_params(k2, mid_ch, mid_ch, 3),
        "increase": _make_conv_bn_params(k3, mid_ch, out_ch, 1),
    }
    if downsample:
        params["shortcut"] = _make_conv_bn_params(k4, in_ch, out_ch, 1)
    return params


# ----------------------------- main -----------------------------

def _run_case(key, *, n, in_ch, out_ch, hw, stride, dilation, downsample):
    kx, kp = jax.random.split(key)
    x = jax.random.normal(kx, (n, in_ch, hw, hw), jnp.float32)
    params = make_bottleneck_params(kp, in_ch, out_ch, downsample)

    fwd = jax.jit(functools.partial(bottleneck_forward, stride=stride,
                                    dilation=dilation, downsample=downsample))
    out = jax.block_until_ready(fwd(x, params))
    ref = jax.block_until_ready(
        bottleneck_ref(x, params, stride=stride, dilation=dilation,
                       downsample=downsample))

    assert out.shape == ref.shape, (out.shape, ref.shape)
    max_err = float(jnp.max(jnp.abs(out - ref)))
    # bf16 MXU inputs with f32 accumulation + bf16 writeback -> few e-3 abs error.
    assert jnp.allclose(out, ref, atol=5e-2, rtol=5e-2), max_err
    return out.shape, max_err


if __name__ == "__main__":
    key = jax.random.PRNGKey(0)
    k1, k2 = jax.random.split(key)

    # Case 1: downsample bottleneck (stride 2, dilation 2, projection shortcut).
    shape1, _ = _run_case(k1, n=2, in_ch=8, out_ch=16, hw=16,
                          stride=2, dilation=2, downsample=True)
    assert shape1 == (2, 16, 8, 8), shape1

    # Case 2: identity bottleneck (stride 1, dilation 1, in_ch == out_ch).
    shape2, _ = _run_case(k2, n=2, in_ch=16, out_ch=16, hw=16,
                          stride=1, dilation=1, downsample=False)
    assert shape2 == (2, 16, 16, 16), shape2

    print("KERNEL_OK")
</pallas_src>

<mosaic_0001>
module attributes {stable_mosaic.version = 11 : i64} {
  func.func @_reduce_kernel(%arg0: i32, %arg1: i32, %arg2: memref<64x128xbf16, #tpu.memory_space<vmem>>, %arg3: memref<128x128xbf16, #tpu.memory_space<vmem>>, %arg4: memref<1x128xf32, #tpu.memory_space<vmem>>, %arg5: memref<64x128xbf16, #tpu.memory_space<vmem>>, %arg6: memref<64x128xf32, #tpu.memory_space<vmem>>) attributes {dimension_semantics = [#tpu.dimension_semantics<parallel>, #tpu.dimension_semantics<arbitrary>], iteration_bounds = array<i64: 2, 1>, scalar_prefetch = 0 : i64, scratch_operands = 1 : i64, tpu.core_type = #tpu.core_type<tc>, window_params = [{transform_indices = @transform_0, window_bounds = array<i64: 64, 128>}, {transform_indices = @transform_1, window_bounds = array<i64: 128, 128>}, {pipeline_mode = #tpu.pipeline_mode<synchronous>, transform_indices = @transform_2, window_bounds = array<i64: 1, 128>}, {transform_indices = @transform_3, window_bounds = array<i64: 64, 128>}]} {
    %c0_i32 = arith.constant 0 : i32
    %0 = arith.cmpi eq, %arg1, %c0_i32 : i32
    %1 = arith.extui %0 : i1 to i32
    %c0_i32_0 = arith.constant 0 : i32
    %2 = arith.cmpi ne, %1, %c0_i32_0 : i32
    scf.if %2 {
      %cst_10 = arith.constant 0.000000e+00 : f32
      %12 = vector.broadcast %cst_10 : f32 to vector<64x128xf32>
      %c0_11 = arith.constant 0 : index
      %c0_12 = arith.constant 0 : index
      %13 = vector.load %arg6[%c0_11, %c0_12] : memref<64x128xf32, #tpu.memory_space<vmem>>, vector<64x128xf32>
      tpu.vector_store %arg6[%c0_11, %c0_12], %12 {strides = array<i32>} : memref<64x128xf32, #tpu.memory_space<vmem>>, vector<64x128xf32>,
    } else {
    }
    %c0 = arith.constant 0 : index
    %c0_1 = arith.constant 0 : index
    %3 = vector.load %arg6[%c0, %c0_1] : memref<64x128xf32, #tpu.memory_space<vmem>>, vector<64x128xf32>
    %c0_2 = arith.constant 0 : index
    %c0_3 = arith.constant 0 : index
    %4 = vector.load %arg2[%c0_2, %c0_3] : memref<64x128xbf16, #tpu.memory_space<vmem>>, vector<64x128xbf16>
    %c0_4 = arith.constant 0 : index
    %c0_5 = arith.constant 0 : index
    %5 = vector.load %arg3[%c0_4, %c0_5] : memref<128x128xbf16, #tpu.memory_space<vmem>>, vector<128x128xbf16>
    %cst = arith.constant dense<0.000000e+00> : vector<64x128xf32>
    %6 = tpu.matmul %4, %5, %cst {dimension_numbers = #tpu.dot_dimension_numbers<[1], [0], [0], [1], [0, 0, 1, 1], [], []>} : vector<64x128xbf16>, vector<128x128xbf16>, vector<64x128xf32> -> vector<64x128xf32>
    %7 = arith.addf %3, %6 : vector<64x128xf32>
    %c0_6 = arith.constant 0 : index
    %c0_7 = arith.constant 0 : index
    %8 = vector.load %arg6[%c0_6, %c0_7] : memref<64x128xf32, #tpu.memory_space<vmem>>, vector<64x128xf32>
    tpu.vector_store %arg6[%c0_6, %c0_7], %7 {strides = array<i32>} : memref<64x128xf32, #tpu.memory_space<vmem>>, vector<64x128xf32>,
    %c0_i32_8 = arith.constant 0 : i32
    %9 = arith.cmpi eq, %arg1, %c0_i32_8 : i32
    %10 = arith.extui %9 : i1 to i32
    %c0_i32_9 = arith.constant 0 : i32
    %11 = arith.cmpi ne, %10, %c0_i32_9 : i32
    scf.if %11 {
      %c0_10 = arith.constant 0 : index
      %c0_11 = arith.constant 0 : index
      %12 = vector.load %arg6[%c0_10, %c0_11] : memref<64x128xf32, #tpu.memory_space<vmem>>, vector<64x128xf32>
      %c0_12 = arith.constant 0 : index
      %c0_13 = arith.constant 0 : index
      %13 = vector.load %arg4[%c0_12, %c0_13] : memref<1x128xf32, #tpu.memory_space<vmem>>, vector<1x128xf32>
      %14 = vector.broadcast %13 : vector<1x128xf32> to vector<64x128xf32>
      %15 = arith.addf %12, %14 : vector<64x128xf32>
      %cst_14 = arith.constant 0.000000e+00 : f32
      %16 = vector.broadcast %cst_14 : f32 to vector<64x128xf32>
      %17 = arith.maximumf %15, %16 : vector<64x128xf32>
      %18 = arith.truncf %17 : vector<64x128xf32> to vector<64x128xbf16>
      %c0_15 = arith.constant 0 : index
      %c0_16 = arith.constant 0 : index
      %19 = vector.load %arg5[%c0_15, %c0_16] : memref<64x128xbf16, #tpu.memory_space<vmem>>, vector<64x128xbf16>
      tpu.vector_store %arg5[%c0_15, %c0_16], %18 {strides = array<i32>} : memref<64x128xbf16, #tpu.memory_space<vmem>>, vector<64x128xbf16>,
    } else {
    }
    return
  }
  func.func @transform_0(%arg0: i32, %arg1: i32) -> (i32, i32) {
    %c0_i32 = arith.constant 0 : i32
    return %arg0, %arg1 : i32, i32
  }
  func.func @transform_1(%arg0: i32, %arg1: i32) -> (i32, i32) {
    %c0_i32 = arith.constant 0 : i32
    %c0_i32_0 = arith.constant 0 : i32
    return %arg1, %c0_i32 : i32, i32
  }
  func.func @transform_2(%arg0: i32, %arg1: i32) -> (i32, i32) {
    %c0_i32 = arith.constant 0 : i32
    %c0_i32_0 = arith.constant 0 : i32
    %c0_i32_1 = arith.constant 0 : i32
    return %c0_i32, %c0_i32_0 : i32, i32
  }
  func.func @transform_3(%arg0: i32, %arg1: i32) -> (i32, i32) {
    %c0_i32 = arith.constant 0 : i32
    %c0_i32_0 = arith.constant 0 : i32
    return %arg0, %c0_i32 : i32, i32
  }
}

module attributes {stable_mosaic.version = 11 : i64} {
  func.func @_conv3x3_kernel(%arg0: i32, %arg1: i32, %arg2: memref<1x12x12x128xbf16, #tpu.memory_space<vmem>>, %arg3: memref<9x128x128xbf16, #tpu.memory_space<vmem>>, %arg4: memref<1x128xf32, #tpu.memory_space<vmem>>, %arg5: memref<1x8x8x128xbf16, #tpu.memory_space<vmem>>, %arg6: memref<64x128xf32, #tpu.memory_space<vmem>>) attributes {dimension_semantics = [#tpu.dimension_semantics<parallel>, #tpu.dimension_semantics<parallel>], iteration_bounds = array<i64: 2, 1>, scalar_prefetch = 0 : i64, scratch_operands = 1 : i64, tpu.core_type = #tpu.core_type<tc>, window_params = [{transform_indices = @transform_0, window_bounds = array<i64: 1, 12, 12, 128>}, {transform_indices = @transform_1, window_bounds = array<i64: 9, 128, 128>}, {transform_indices = @transform_2, window_bounds = array<i64: 1, 128>}, {transform_indices = @transform_3, window_bounds = array<i64: 1, 8, 8, 128>}]} {
    %c0 = arith.constant 0 : index
    %c0_0 = arith.constant 0 : index
    %c0_1 = arith.constant 0 : index
    %c0_2 = arith.constant 0 : index
    %0 = vector.load %arg2[%c0, %c0_0, %c0_1, %c0_2] : memref<1x12x12x128xbf16, #tpu.memory_space<vmem>>, vector<1x12x12x128xbf16>
    %1 = vector.shape_cast %0 : vector<1x12x12x128xbf16> to vector<12x12x128xbf16>
    %cst = arith.constant 0.000000e+00 : f32
    %2 = vector.broadcast %cst : f32 to vector<64x128xf32>
    %c0_3 = arith.constant 0 : index
    %c0_4 = arith.constant 0 : index
    %3 = vector.load %arg6[%c0_3, %c0_4] : memref<64x128xf32, #tpu.memory_space<vmem>>, vector<64x128xf32>
    tpu.vector_store %arg6[%c0_3, %c0_4], %2 {strides = array<i32>} : memref<64x128xf32, #tpu.memory_space<vmem>>, vector<64x128xf32>,
    %4 = vector.extract_strided_slice %1 {offsets = [0, 0, 0], sizes = [8, 12, 128], strides = [1, 1, 1]} : vector<12x12x128xbf16> to vector<8x12x128xbf16>
    %5 = vector.extract_strided_slice %4 {offsets = [0, 0, 0], sizes = [8, 8, 128], strides = [1, 1, 1]} : vector<8x12x128xbf16> to vector<8x8x128xbf16>
    %6 = vector.shape_cast %5 : vector<8x8x128xbf16> to vector<64x128xbf16>
    %c0_5 = arith.constant 0 : index
    %c0_6 = arith.constant 0 : index
    %7 = vector.load %arg6[%c0_5, %c0_6] : memref<64x128xf32, #tpu.memory_space<vmem>>, vector<64x128xf32>
    %c0_7 = arith.constant 0 : index
    %c0_8 = arith.constant 0 : index
    %c0_9 = arith.constant 0 : index
    %8 = vector.load %arg3[%c0_7, %c0_8, %c0_9] : memref<9x128x128xbf16, #tpu.memory_space<vmem>>, vector<1x128x128xbf16>
    %9 = vector.shape_cast %8 : vector<1x128x128xbf16> to vector<128x128xbf16>
    %cst_10 = arith.constant dense<0.000000e+00> : vector<64x128xf32>
    %10 = tpu.matmul %6, %9, %cst_10 {dimension_numbers = #tpu.dot_dimension_numbers<[1], [0], [0], [1], [0, 0, 1, 1], [], []>} : vector<64x128xbf16>, vector<128x128xbf16>, vector<64x128xf32> -> vector<64x128xf32>
    %11 = arith.addf %7, %10 : vector<64x128xf32>
    %c0_11 = arith.constant 0 : index
    %c0_12 = arith.constant 0 : index
    %12 = vector.load %arg6[%c0_11, %c0_12] : memref<64x128xf32, #tpu.memory_space<vmem>>, vector<64x128xf32>
    tpu.vector_store %arg6[%c0_11, %c0_12], %11 {strides = array<i32>} : memref<64x128xf32, #tpu.memory_space<vmem>>, vector<64x128xf32>,
    %13 = vector.extract_strided_slice %4 {offsets = [0, 2, 0], sizes = [8, 8, 128], strides = [1, 1, 1]} : vector<8x12x128xbf16> to vector<8x8x128xbf16>
    %14 = vector.shape_cast %13 : vector<8x8x128xbf16> to vector<64x128xbf16>
    %c0_13 = arith.constant 0 : index
    %c0_14 = arith.constant 0 : index
    %15 = vector.load %arg6[%c0_13, %c0_14] : memref<64x128xf32, #tpu.memory_space<vmem>>, vector<64x128xf32>
    %c1 = arith.constant 1 : index
    %c0_15 = arith.constant 0 : index
    %c0_16 = arith.constant 0 : index
    %16 = vector.load %arg3[%c1, %c0_15, %c0_16] : memref<9x128x128xbf16, #tpu.memory_space<vmem>>, vector<1x128x128xbf16>
    %17 = vector.shape_cast %16 : vector<1x128x128xbf16> to vector<128x128xbf16>
    %cst_17 = arith.constant dense<0.000000e+00> : vector<64x128xf32>
    %18 = tpu.matmul %14, %17, %cst_17 {dimension_numbers = #tpu.dot_dimension_numbers<[1], [0], [0], [1], [0, 0, 1, 1], [], []>} : vector<64x128xbf16>, vector<128x128xbf16>, vector<64x128xf32> -> vector<64x128xf32>
    %19 = arith.addf %15, %18 : vector<64x128xf32>
    %c0_18 = arith.constant 0 : index
    %c0_19 = arith.constant 0 : index
    %20 = vector.load %arg6[%c0_18, %c0_19] : memref<64x128xf32, #tpu.memory_space<vmem>>, vector<64x128xf32>
    tpu.vector_store %arg6[%c0_18, %c0_19], %19 {strides = array<i32>} : memref<64x128xf32, #tpu.memory_space<vmem>>, vector<64x128xf32>,
    %21 = vector.extract_strided_slice %4 {offsets = [0, 4, 0], sizes = [8, 8, 128], strides = [1, 1, 1]} : vector<8x12x128xbf16> to vector<8x8x128xbf16>
    %22 = vector.shape_cast %21 : vector<8x8x128xbf16> to vector<64x128xbf16>
    %c0_20 = arith.constant 0 : index
    %c0_21 = arith.constant 0 : index
    %23 = vector.load %arg6[%c0_20, %c0_21] : memref<64x128xf32, #tpu.memory_space<vmem>>, vector<64x128xf32>
    %c2 = arith.constant 2 : index
    %c0_22 = arith.constant 0 : index
    %c0_23 = arith.constant 0 : index
    %24 = vector.load %arg3[%c2, %c0_22, %c0_23] : memref<9x128x128xbf16, #tpu.memory_space<vmem>>, vector<1x128x128xbf16>
    %25 = vector.shape_cast %24 : vector<1x128x128xbf16> to vector<128x128xbf16>
    %cst_24 = arith.constant dense<0.000000e+00> : vector<64x128xf32>
    %26 = tpu.matmul %22, %25, %cst_24 {dimension_numbers = #tpu.dot_dimension_numbers<[1], [0], [0], [1], [0, 0, 1, 1], [], []>} : vector<64x128xbf16>, vector<128x128xbf16>, vector<64x128xf32> -> vector<64x128xf32>
    %27 = arith.addf %23, %26 : vector<64x128xf32>
    %c0_25 = arith.constant 0 : index
    %c0_26 = arith.constant 0 : index
    %28 = vector.load %arg6[%c0_25, %c0_26] : memref<64x128xf32, #tpu.memory_space<vmem>>, vector<64x128xf32>
    tpu.vector_store %arg6[%c0_25, %c0_26], %27 {strides = array<i32>} : memref<64x128xf32, #tpu.memory_space<vmem>>, vector<64x128xf32>,
    %29 = vector.extract_strided_slice %1 {offsets = [2, 0, 0], sizes = [8, 12, 128], strides = [1, 1, 1]} : vector<12x12x128xbf16> to vector<8x12x128xbf16>
    %30 = vector.extract_strided_slice %29 {offsets = [0, 0, 0], sizes = [8, 8, 128], strides = [1, 1, 1]} : vector<8x12x128xbf16> to vector<8x8x128xbf16>
    %31 = vector.shape_cast %30 : vector<8x8x128xbf16> to vector<64x128xbf16>
    %c0_27 = arith.constant 0 : index
    %c0_28 = arith.constant 0 : index
    %32 = vector.load %arg6[%c0_27, %c0_28] : memref<64x128xf32, #tpu.memory_space<vmem>>, vector<64x128xf32>
    %c3 = arith.constant 3 : index
    %c0_29 = arith.constant 0 : index
    %c0_30 = arith.constant 0 : index
    %33 = vector.load %arg3[%c3, %c0_29, %c0_30] : memref<9x128x128xbf16, #tpu.memory_space<vmem>>, vector<1x128x128xbf16>
    %34 = vector.shape_cast %33 : vector<1x128x128xbf16> to vector<128x128xbf16>
    %cst_31 = arith.constant dense<0.000000e+00> : vector<64x128xf32>
    %35 = tpu.matmul %31, %34, %cst_31 {dimension_numbers = #tpu.dot_dimension_numbers<[1], [0], [0], [1], [0, 0, 1, 1], [], []>} : vector<64x128xbf16>, vector<128x128xbf16>, vector<64x128xf32> -> vector<64x128xf32>
    %36 = arith.addf %32, %35 : vector<64x128xf32>
    %c0_32 = arith.constant 0 : index
    %c0_33 = arith.constant 0 : index
    %37 = vector.load %arg6[%c0_32, %c0_33] : memref<64x128xf32, #tpu.memory_space<vmem>>, vector<64x128xf32>
    tpu.vector_store %arg6[%c0_32, %c0_33], %36 {strides = array<i32>} : memref<64x128xf32, #tpu.memory_space<vmem>>, vector<64x128xf32>,
    %38 = vector.extract_strided_slice %29 {offsets = [0, 2, 0], sizes = [8, 8, 128], strides = [1, 1, 1]} : vector<8x12x128xbf16> to vector<8x8x128xbf16>
    %39 = vector.shape_cast %38 : vector<8x8x128xbf16> to vector<64x128xbf16>
    %c0_34 = arith.constant 0 : index
    %c0_35 = arith.constant 0 : index
    %40 = vector.load %arg6[%c0_34, %c0_35] : memref<64x128xf32, #tpu.memory_space<vmem>>, vector<64x128xf32>
    %c4 = arith.constant 4 : index
    %c0_36 = arith.constant 0 : index
    %c0_37 = arith.constant 0 : index
    %41 = vector.load %arg3[%c4, %c0_36, %c0_37] : memref<9x128x128xbf16, #tpu.memory_space<vmem>>, vector<1x128x128xbf16>
    %42 = vector.shape_cast %41 : vector<1x128x128xbf16> to vector<128x128xbf16>
    %cst_38 = arith.constant dense<0.000000e+00> : vector<64x128xf32>
    %43 = tpu.matmul %39, %42, %cst_38 {dimension_numbers = #tpu.dot_dimension_numbers<[1], [0], [0], [1], [0, 0, 1, 1], [], []>} : vector<64x128xbf16>, vector<128x128xbf16>, vector<64x128xf32> -> vector<64x128xf32>
    %44 = arith.addf %40, %43 : vector<64x128xf32>
    %c0_39 = arith.constant 0 : index
    %c0_40 = arith.constant 0 : index
    %45 = vector.load %arg6[%c0_39, %c0_40] : memref<64x128xf32, #tpu.memory_space<vmem>>, vector<64x128xf32>
    tpu.vector_store %arg6[%c0_39, %c0_40], %44 {strides = array<i32>} : memref<64x128xf32, #tpu.memory_space<vmem>>, vector<64x128xf32>,
    %46 = vector.extract_strided_slice %29 {offsets = [0, 4, 0], sizes = [8, 8, 128], strides = [1, 1, 1]} : vector<8x12x128xbf16> to vector<8x8x128xbf16>
    %47 = vector.shape_cast %46 : vector<8x8x128xbf16> to vector<64x128xbf16>
    %c0_41 = arith.constant 0 : index
    %c0_42 = arith.constant 0 : index
    %48 = vector.load %arg6[%c0_41, %c0_42] : memref<64x128xf32, #tpu.memory_space<vmem>>, vector<64x128xf32>
    %c5 = arith.constant 5 : index
    %c0_43 = arith.constant 0 : index
    %c0_44 = arith.constant 0 : index
    %49 = vector.load %arg3[%c5, %c0_43, %c0_44] : memref<9x128x128xbf16, #tpu.memory_space<vmem>>, vector<1x128x128xbf16>
    %50 = vector.shape_cast %49 : vector<1x128x128xbf16> to vector<128x128xbf16>
    %cst_45 = arith.constant dense<0.000000e+00> : vector<64x128xf32>
    %51 = tpu.matmul %47, %50, %cst_45 {dimension_numbers = #tpu.dot_dimension_numbers<[1], [0], [0], [1], [0, 0, 1, 1], [], []>} : vector<64x128xbf16>, vector<128x128xbf16>, vector<64x128xf32> -> vector<64x128xf32>
    %52 = arith.addf %48, %51 : vector<64x128xf32>
    %c0_46 = arith.constant 0 : index
    %c0_47 = arith.constant 0 : index
    %53 = vector.load %arg6[%c0_46, %c0_47] : memref<64x128xf32, #tpu.memory_space<vmem>>, vector<64x128xf32>
    tpu.vector_store %arg6[%c0_46, %c0_47], %52 {strides = array<i32>} : memref<64x128xf32, #tpu.memory_space<vmem>>, vector<64x128xf32>,
    %54 = vector.extract_strided_slice %1 {offsets = [4, 0, 0], sizes = [8, 12, 128], strides = [1, 1, 1]} : vector<12x12x128xbf16> to vector<8x12x128xbf16>
    %55 = vector.extract_strided_slice %54 {offsets = [0, 0, 0], sizes = [8, 8, 128], strides = [1, 1, 1]} : vector<8x12x128xbf16> to vector<8x8x128xbf16>
    %56 = vector.shape_cast %55 : vector<8x8x128xbf16> to vector<64x128xbf16>
    %c0_48 = arith.constant 0 : index
    %c0_49 = arith.constant 0 : index
    %57 = vector.load %arg6[%c0_48, %c0_49] : memref<64x128xf32, #tpu.memory_space<vmem>>, vector<64x128xf32>
    %c6 = arith.constant 6 : index
    %c0_50 = arith.constant 0 : index
    %c0_51 = arith.constant 0 : index
    %58 = vector.load %arg3[%c6, %c0_50, %c0_51] : memref<9x128x128xbf16, #tpu.memory_space<vmem>>, vector<1x128x128xbf16>
    %59 = vector.shape_cast %58 : vector<1x128x128xbf16> to vector<128x128xbf16>
    %cst_52 = arith.constant dense<0.000000e+00> : vector<64x128xf32>
    %60 = tpu.matmul %56, %59, %cst_52 {dimension_numbers = #tpu.dot_dimension_numbers<[1], [0], [0], [1], [0, 0, 1, 1], [], []>} : vector<64x128xbf16>, vector<128x128xbf16>, vector<64x128xf32> -> vector<64x128xf32>
    %61 = arith.addf %57, %60 : vector<64x128xf32>
    %c0_53 = arith.constant 0 : index
    %c0_54 = arith.constant 0 : index
    %62 = vector.load %arg6[%c0_53, %c0_54] : memref<64x128xf32, #tpu.memory_space<vmem>>, vector<64x128xf32>
    tpu.vector_store %arg6[%c0_53, %c0_54], %61 {strides = array<i32>} : memref<64x128xf32, #tpu.memory_space<vmem>>, vector<64x128xf32>,
    %63 = vector.extract_strided_slice %54 {offsets = [0, 2, 0], sizes = [8, 8, 128], strides = [1, 1, 1]} : vector<8x12x128xbf16> to vector<8x8x128xbf16>
    %64 = vector.shape_cast %63 : vector<8x8x128xbf16> to vector<64x128xbf16>
    %c0_55 = arith.constant 0 : index
    %c0_56 = arith.constant 0 : index
    %65 = vector.load %arg6[%c0_55, %c0_56] : memref<64x128xf32, #tpu.memory_space<vmem>>, vector<64x128xf32>
    %c7 = arith.constant 7 : index
    %c0_57 = arith.constant 0 : index
    %c0_58 = arith.constant 0 : index
    %66 = vector.load %arg3[%c7, %c0_57, %c0_58] : memref<9x128x128xbf16, #tpu.memory_space<vmem>>, vector<1x128x128xbf16>
    %67 = vector.shape_cast %66 : vector<1x128x128xbf16> to vector<128x128xbf16>
    %cst_59 = arith.constant dense<0.000000e+00> : vector<64x128xf32>
    %68 = tpu.matmul %64, %67, %cst_59 {dimension_numbers = #tpu.dot_dimension_numbers<[1], [0], [0], [1], [0, 0, 1, 1], [], []>} : vector<64x128xbf16>, vector<128x128xbf16>, vector<64x128xf32> -> vector<64x128xf32>
    %69 = arith.addf %65, %68 : vector<64x128xf32>
    %c0_60 = arith.constant 0 : index
    %c0_61 = arith.constant 0 : index
    %70 = vector.load %arg6[%c0_60, %c0_61] : memref<64x128xf32, #tpu.memory_space<vmem>>, vector<64x128xf32>
    tpu.vector_store %arg6[%c0_60, %c0_61], %69 {strides = array<i32>} : memref<64x128xf32, #tpu.memory_space<vmem>>, vector<64x128xf32>,
    %71 = vector.extract_strided_slice %54 {offsets = [0, 4, 0], sizes = [8, 8, 128], strides = [1, 1, 1]} : vector<8x12x128xbf16> to vector<8x8x128xbf16>
    %72 = vector.shape_cast %71 : vector<8x8x128xbf16> to vector<64x128xbf16>
    %c0_62 = arith.constant 0 : index
    %c0_63 = arith.constant 0 : index
    %73 = vector.load %arg6[%c0_62, %c0_63] : memref<64x128xf32, #tpu.memory_space<vmem>>, vector<64x128xf32>
    %c8 = arith.constant 8 : index
    %c0_64 = arith.constant 0 : index
    %c0_65 = arith.constant 0 : index
    %74 = vector.load %arg3[%c8, %c0_64, %c0_65] : memref<9x128x128xbf16, #tpu.memory_space<vmem>>, vector<1x128x128xbf16>
    %75 = vector.shape_cast %74 : vector<1x128x128xbf16> to vector<128x128xbf16>
    %cst_66 = arith.constant dense<0.000000e+00> : vector<64x128xf32>
    %76 = tpu.matmul %72, %75, %cst_66 {dimension_numbers = #tpu.dot_dimension_numbers<[1], [0], [0], [1], [0, 0, 1, 1], [], []>} : vector<64x128xbf16>, vector<128x128xbf16>, vector<64x128xf32> -> vector<64x128xf32>
    %77 = arith.addf %73, %76 : vector<64x128xf32>
    %c0_67 = arith.constant 0 : index
    %c0_68 = arith.constant 0 : index
    %78 = vector.load %arg6[%c0_67, %c0_68] : memref<64x128xf32, #tpu.memory_space<vmem>>, vector<64x128xf32>
    tpu.vector_store %arg6[%c0_67, %c0_68], %77 {strides = array<i32>} : memref<64x128xf32, #tpu.memory_space<vmem>>, vector<64x128xf32>,
    %c0_69 = arith.constant 0 : index
    %c0_70 = arith.constant 0 : index
    %79 = vector.load %arg6[%c0_69, %c0_70] : memref<64x128xf32, #tpu.memory_space<vmem>>, vector<64x128xf32>
    %c0_71 = arith.constant 0 : index
    %c0_72 = arith.constant 0 : index
    %80 = vector.load %arg4[%c0_71, %c0_72] : memref<1x128xf32, #tpu.memory_space<vmem>>, vector<1x128xf32>
    %81 = vector.broadcast %80 : vector<1x128xf32> to vector<64x128xf32>
    %82 = arith.addf %79, %81 : vector<64x128xf32>
    %cst_73 = arith.constant 0.000000e+00 : f32
    %83 = vector.broadcast %cst_73 : f32 to vector<64x128xf32>
    %84 = arith.maximumf %82, %83 : vector<64x128xf32>
    %85 = vector.shape_cast %84 : vector<64x128xf32> to vector<1x8x8x128xf32>
    %86 = arith.truncf %85 : vector<1x8x8x128xf32> to vector<1x8x8x128xbf16>
    %c0_74 = arith.constant 0 : index
    %c0_75 = arith.constant 0 : index
    %c0_76 = arith.constant 0 : index
    %c0_77 = arith.constant 0 : index
    %87 = vector.load %arg5[%c0_74, %c0_75, %c0_76, %c0_77] : memref<1x8x8x128xbf16, #tpu.memory_space<vmem>>, vector<1x8x8x128xbf16>
    tpu.vector_store %arg5[%c0_74, %c0_75, %c0_76, %c0_77], %86 {strides = array<i32>} : memref<1x8x8x128xbf16, #tpu.memory_space<vmem>>, vector<1x8x8x128xbf16>,
    return
  }
  func.func @transform_0(%arg0: i32, %arg1: i32) -> (i32, i32, i32, i32) {
    %c0_i32 = arith.constant 0 : i32
    %c0_i32_0 = arith.constant 0 : i32
    %c0_i32_1 = arith.constant 0 : i32
    %c0_i32_2 = arith.constant 0 : i32
    return %arg0, %c0_i32, %c0_i32_0, %c0_i32_1 : i32, i32, i32, i32
  }
  func.func @transform_1(%arg0: i32, %arg1: i32) -> (i32, i32, i32) {
    %c0_i32 = arith.constant 0 : i32
    %c0_i32_0 = arith.constant 0 : i32
    %c0_i32_1 = arith.constant 0 : i32
    return %c0_i32, %c0_i32_0, %arg1 : i32, i32, i32
  }
  func.func @transform_2(%arg0: i32, %arg1: i32) -> (i32, i32) {
    %c0_i32 = arith.constant 0 : i32
    %c0_i32_0 = arith.constant 0 : i32
    return %c0_i32, %arg1 : i32, i32
  }
  func.func @transform_3(%arg0: i32, %arg1: i32) -> (i32, i32, i32, i32) {
    %c0_i32 = arith.constant 0 : i32
    %c0_i32_0 = arith.constant 0 : i32
    %c0_i32_1 = arith.constant 0 : i32
    return %arg0, %c0_i32, %c0_i32_0, %arg1 : i32, i32, i32, i32
  }
}

module attributes {stable_mosaic.version = 11 : i64} {
  func.func @_increase_residual_kernel(%arg0: i32, %arg1: i32, %arg2: memref<64x128xbf16, #tpu.memory_space<vmem>>, %arg3: memref<64x128xbf16, #tpu.memory_space<vmem>>, %arg4: memref<128x128xbf16, #tpu.memory_space<vmem>>, %arg5: memref<1x128xf32, #tpu.memory_space<vmem>>, %arg6: memref<128x128xbf16, #tpu.memory_space<vmem>>, %arg7: memref<1x128xf32, #tpu.memory_space<vmem>>, %arg8: memref<64x128xbf16, #tpu.memory_space<vmem>>) attributes {dimension_semantics = [#tpu.dimension_semantics<parallel>, #tpu.dimension_semantics<parallel>], iteration_bounds = array<i64: 2, 1>, scalar_prefetch = 0 : i64, scratch_operands = 0 : i64, tpu.core_type = #tpu.core_type<tc>, window_params = [{transform_indices = @transform_0, window_bounds = array<i64: 64, 128>}, {transform_indices = @transform_1, window_bounds = array<i64: 64, 128>}, {transform_indices = @transform_2, window_bounds = array<i64: 128, 128>}, {transform_indices = @transform_3, window_bounds = array<i64: 1, 128>}, {transform_indices = @transform_4, window_bounds = array<i64: 128, 128>}, {transform_indices = @transform_5, window_bounds = array<i64: 1, 128>}, {transform_indices = @transform_6, window_bounds = array<i64: 64, 128>}]} {
    %c0 = arith.constant 0 : index
    %c0_0 = arith.constant 0 : index
    %0 = vector.load %arg2[%c0, %c0_0] : memref<64x128xbf16, #tpu.memory_space<vmem>>, vector<64x128xbf16>
    %c0_1 = arith.constant 0 : index
    %c0_2 = arith.constant 0 : index
    %1 = vector.load %arg4[%c0_1, %c0_2] : memref<128x128xbf16, #tpu.memory_space<vmem>>, vector<128x128xbf16>
    %cst = arith.constant dense<0.000000e+00> : vector<64x128xf32>
    %2 = tpu.matmul %0, %1, %cst {dimension_numbers = #tpu.dot_dimension_numbers<[1], [0], [0], [1], [0, 0, 1, 1], [], []>} : vector<64x128xbf16>, vector<128x128xbf16>, vector<64x128xf32> -> vector<64x128xf32>
    %c0_3 = arith.constant 0 : index
    %c0_4 = arith.constant 0 : index
    %3 = vector.load %arg3[%c0_3, %c0_4] : memref<64x128xbf16, #tpu.memory_space<vmem>>, vector<64x128xbf16>
    %c0_5 = arith.constant 0 : index
    %c0_6 = arith.constant 0 : index
    %4 = vector.load %arg6[%c0_5, %c0_6] : memref<128x128xbf16, #tpu.memory_space<vmem>>, vector<128x128xbf16>
    %cst_7 = arith.constant dense<0.000000e+00> : vector<64x128xf32>
    %5 = tpu.matmul %3, %4, %cst_7 {dimension_numbers = #tpu.dot_dimension_numbers<[1], [0], [0], [1], [0, 0, 1, 1], [], []>} : vector<64x128xbf16>, vector<128x128xbf16>, vector<64x128xf32> -> vector<64x128xf32>
    %6 = arith.addf %2, %5 : vector<64x128xf32>
    %c0_8 = arith.constant 0 : index
    %c0_9 = arith.constant 0 : index
    %7 = vector.load %arg5[%c0_8, %c0_9] : memref<1x128xf32, #tpu.memory_space<vmem>>, vector<1x128xf32>
    %c0_10 = arith.constant 0 : index
    %c0_11 = arith.constant 0 : index
    %8 = vector.load %arg7[%c0_10, %c0_11] : memref<1x128xf32, #tpu.memory_space<vmem>>, vector<1x128xf32>
    %9 = arith.addf %7, %8 : vector<1x128xf32>
    %10 = vector.broadcast %9 : vector<1x128xf32> to vector<64x128xf32>
    %11 = arith.addf %6, %10 : vector<64x128xf32>
    %cst_12 = arith.constant 0.000000e+00 : f32
    %12 = vector.broadcast %cst_12 : f32 to vector<64x128xf32>
    %13 = arith.maximumf %11, %12 : vector<64x128xf32>
    %14 = arith.truncf %13 : vector<64x128xf32> to vector<64x128xbf16>
    %c0_13 = arith.constant 0 : index
    %c0_14 = arith.constant 0 : index
    %15 = vector.load %arg8[%c0_13, %c0_14] : memref<64x128xbf16, #tpu.memory_space<vmem>>, vector<64x128xbf16>
    tpu.vector_store %arg8[%c0_13, %c0_14], %14 {strides = array<i32>} : memref<64x128xbf16, #tpu.memory_space<vmem>>, vector<64x128xbf16>,
    return
  }
  func.func @transform_0(%arg0: i32, %arg1: i32) -> (i32, i32) {
    %c0_i32 = arith.constant 0 : i32
    %c0_i32_0 = arith.constant 0 : i32
    return %arg0, %c0_i32 : i32, i32
  }
  func.func @transform_1(%arg0: i32, %arg1: i32) -> (i32, i32) {
    %c0_i32 = arith.constant 0 : i32
    %c0_i32_0 = arith.constant 0 : i32
    return %arg0, %c0_i32 : i32, i32
  }
  func.func @transform_2(%arg0: i32, %arg1: i32) -> (i32, i32) {
    %c0_i32 = arith.constant 0 : i32
    %c0_i32_0 = arith.constant 0 : i32
    return %c0_i32, %arg1 : i32, i32
  }
  func.func @transform_3(%arg0: i32, %arg1: i32) -> (i32, i32) {
    %c0_i32 = arith.constant 0 : i32
    %c0_i32_0 = arith.constant 0 : i32
    return %c0_i32, %arg1 : i32, i32
  }
  func.func @transform_4(%arg0: i32, %arg1: i32) -> (i32, i32) {
    %c0_i32 = arith.constant 0 : i32
    %c0_i32_0 = arith.constant 0 : i32
    return %c0_i32, %arg1 : i32, i32
  }
  func.func @transform_5(%arg0: i32, %arg1: i32) -> (i32, i32) {
    %c0_i32 = arith.constant 0 : i32
    %c0_i32_0 = arith.constant 0 : i32
    return %c0_i32, %arg1 : i32, i32
  }
  func.func @transform_6(%arg0: i32, %arg1: i32) -> (i32, i32) {
    %c0_i32 = arith.constant 0 : i32
    return %arg0, %arg1 : i32, i32
  }
}

</mosaic_0001>

<llo_original>
// kernel: bottleneck_forward.3
$region0: #{bottleneck_forward.3}
  #allocation0 [shape = 'u32[]', space=smem, size = 0x4, offset = 0x4, fixed_abs, tag = 'smem constant byte address 0x4 - core index']
  #allocation1 [shape = 'u32[144,128]{1,0:T(1,128)}', space=vmem, size = 0x12000, scoped, tag = 'internal scratch']
  #allocation2 [shape = 'f32[64,128]{1,0:T(8,128)}', space=vmem, size = 0x8000, scoped, tag = 'scratch operand']
  %s0 = inlined_call_operand.vmem [shape: bf16[128,128], index: 0, kind: input, shape index: {}]
  %s1 = inlined_call_operand.vmem [shape: bf16[128,128], index: 1, kind: input, shape index: {}]
  %s2 = inlined_call_operand.vmem [shape: f32[1,128], index: 2, kind: input, shape index: {}]
  %s3 = inlined_call_operand.vmem [shape: bf16[128,128], index: 3, kind: output, shape index: {}]
  %s4 = sld [smem:[#allocation0]]
  $region53: #{bottleneck_forward.3} parent=0
    _
  %s6 = ssub.s32 1, %s4
  %s7 = scalar_select 0, %s6, %s4
  loop: start=0, step=1, limit=4
  $region2: #{bottleneck_forward.3} parent=0 // loop_pre_header
    _
  $region3: #{bottleneck_forward.3} parent=0 // loop_header
    %s9 = sphi 0, %s13
    %p10 = scmp.ge.s32.totalorder %s9, 4
    %s16 = sphi 0, %s28
    %s17 = sphi 0, %s24
    %s18 = sphi 0, %s16
    %s19 = sphi 0, %s17
    %s20 = sphi 0, %s18
    %s21 = sphi 0, %s19
    %s33 = sphi 0, %s35
    %s36 = sphi 0, %s33
    %s37 = sphi 0, %s36
    %s53 = sphi 0, %s37
    %s59 = sphi 0, %s61
    %s62 = sphi 0, %s59
    %s63 = sphi 0, %s62
    %s79 = sphi 0, %s63
    %s83 = sphi 0, %s83
    %s85 = sphi 0, %s83
    %s86 = sphi 0, %s85
    %s100 = sphi 0, %s86
    %s106 = sphi 0, %s108
    %s109 = sphi 0, %s106
    %s110 = sphi 0, %s109
    %s126 = sphi 0, %s110
  $region4: #{bottleneck_forward.3} parent=0 // loop_header_branch
    %12 = sbr.rel (%p10) target = $region8
  $region5: #{bottleneck_forward.3} parent=0 // loop_body
    %s14 = ssub.s32 %s9, 1
    %s15 = ssub.s32 %s9, 2
    %s22 = sadd.s32 1, %s17
    %p23 = scmp.ge.s32.totalorder %s22, 1
    %s24 = scalar_select %p23, 0, %s22
    %s25 = sadd.s32 1, %s16
    %s26 = scalar_select %p23, %s25, %s16
    %p27 = scmp.ge.s32.totalorder %s26, 2
    %s28 = scalar_select %p27, 0, %s26
    %s29 = ssub.s32 %s16, %s28
    %s30 = ssub.s32 %s17, %s24
    %s31 = sor.u32 %s29, %s30
    %p32 = scmp.eq.s32.totalorder %s31, 0
    %s34 = sadd.s32 %s33, 1
    %s35 = scalar_select %p32, %s33, %s34
    %p38 = pneg %p32
    %p39 = scmp.eq.s32.totalorder %s9, 1
    %p40 = por %p38, %p39
    %p41 = scmp.ne.s32.totalorder %s33, %s36
    %p42 = scmp.eq.s32.totalorder %s9, 0
    %p43 = por %p41, %p42
    %p44 = scmp.ne.s32.totalorder %s33, %s36
    %p45 = scmp.eq.s32.totalorder %s14, 1
    %p46 = por %p44, %p45
    %p47 = scmp.ne.s32.totalorder %s36, %s37
    %p48 = scmp.eq.s32.totalorder %s14, 0
    %p49 = por %p47, %p48
    %p50 = scmp.ne.s32.totalorder %s36, %s37
    %p51 = scmp.eq.s32.totalorder %s15, 1
    %p52 = por %p50, %p51
    %p54 = scmp.ne.s32.totalorder %s37, %s53
    %p55 = scmp.eq.s32.totalorder %s15, 0
    %p56 = por %p54, %p55
    %s57 = ssub.s32 %s17, %s24
    %p58 = scmp.eq.s32.totalorder %s57, 0
    %s60 = sadd.s32 %s59, 1
    %s61 = scalar_select %p58, %s59, %s60
    %p64 = pneg %p58
    %p65 = scmp.eq.s32.totalorder %s9, 1
    %p66 = por %p64, %p65
    %p67 = scmp.ne.s32.totalorder %s59, %s62
    %p68 = scmp.eq.s32.totalorder %s9, 0
    %p69 = por %p67, %p68
    %p70 = scmp.ne.s32.totalorder %s59, %s62
    %p71 = scmp.eq.s32.totalorder %s14, 1
    %p72 = por %p70, %p71
    %p73 = scmp.ne.s32.totalorder %s62, %s63
    %p74 = scmp.eq.s32.totalorder %s14, 0
    %p75 = por %p73, %p74
    %p76 = scmp.ne.s32.totalorder %s62, %s63
    %p77 = scmp.eq.s32.totalorder %s15, 1
    %p78 = por %p76, %p77
    %p80 = scmp.ne.s32.totalorder %s63, %s79
    %p81 = scmp.eq.s32.totalorder %s15, 0
    %p82 = por %p80, %p81
    %s84 = sadd.s32 %s83, 1
    %p87 = scmp.eq.s32.totalorder %s9, 1
    %p88 = scmp.ne.s32.totalorder %s83, %s85
    %p89 = scmp.eq.s32.totalorder %s9, 0
    %p90 = por %p88, %p89
    %p91 = scmp.ne.s32.totalorder %s83, %s85
    %p92 = scmp.eq.s32.totalorder %s14, 1
    %p93 = por %p91, %p92
    %p94 = scmp.ne.s32.totalorder %s85, %s86
    %p95 = scmp.eq.s32.totalorder %s14, 0
    %p96 = por %p94, %p95
    %p97 = scmp.ne.s32.totalorder %s85, %s86
    %p98 = scmp.eq.s32.totalorder %s15, 1
    %p99 = por %p97, %p98
    %p101 = scmp.ne.s32.totalorder %s86, %s100
    %p102 = scmp.eq.s32.totalorder %s15, 0
    %p103 = por %p101, %p102
    %s104 = ssub.s32 %s16, %s28
    %p105 = scmp.eq.s32.totalorder %s104, 0
    %s107 = sadd.s32 %s106, 1
    %s108 = scalar_select %p105, %s106, %s107
    %p111 = pneg %p105
    %p112 = scmp.eq.s32.totalorder %s9, 1
    %p113 = por %p111, %p112
    %p114 = scmp.ne.s32.totalorder %s106, %s109
    %p115 = scmp.eq.s32.totalorder %s9, 0
    %p116 = por %p114, %p115
    %p117 = scmp.ne.s32.totalorder %s106, %s109
    %p118 = scmp.eq.s32.totalorder %s14, 1
    %p119 = por %p117, %p118
    %p120 = scmp.ne.s32.totalorder %s109, %s110
    %p121 = scmp.eq.s32.totalorder %s14, 0
    %p122 = por %p120, %p121
    %p123 = scmp.ne.s32.totalorder %s109, %s110
    %p124 = scmp.eq.s32.totalorder %s15, 1
    %p125 = por %p123, %p124
    %p127 = scmp.ne.s32.totalorder %s110, %s126
    %p128 = scmp.eq.s32.totalorder %s15, 0
    %p129 = por %p127, %p128
    %p130 = scmp.le.s32.totalorder 1, %s9
    %p131 = scmp.lt.s32.totalorder %s9, 3
    %p132 = pnand %p130, %p131
    %p133 = pneg %p132
    // Predicated region
    $region9: #{bottleneck_forward.3} parent=5 // pred_check
      _
    $region10: #{bottleneck_forward.3} parent=5 // pred_check_branch
      %135 = sbr.rel (%p132) target = $region12
    $region11: #{bottleneck_forward.3} parent=5 // pred_region
      %s136 = ssub.s32 %s9, 1
      // Predicated region
      $region13: #{bottleneck_forward.3} parent=11 // pred_check
        %p137 = pneg %p75
      $region14: #{bottleneck_forward.3} parent=11 // pred_check_branch
        %139 = sbr.rel (%p137) target = $region16
      $region15: #{bottleneck_forward.3} parent=11 // pred_region
        %s140 = smul.u32 16, %s19
        %p141 = scmp.lt.s32.totalorder %s140, 15
        %s142 = scalar_select %p141, %s140, 15
        %s143 = smul.addr %s142, 4
        %s144 = scalar_lea.vmem %s1, %s143
        %s145 = smul.u32 16, %s19
      $region16: #{bottleneck_forward.3} parent=11 // pred_fallthru
        _
      // Predicated region
      $region17: #{bottleneck_forward.3} parent=11 // pred_check
        %p146 = pneg %p96
      $region18: #{bottleneck_forward.3} parent=11 // pred_check_branch
        %148 = sbr.rel (%p146) target = $region20
      $region19: #{bottleneck_forward.3} parent=11 // pred_region
        _
      $region20: #{bottleneck_forward.3} parent=11 // pred_fallthru
        _
    $region12: #{bottleneck_forward.3} parent=5 // pred_fallthru
      _
    %p149 = scmp.lt.s32.totalorder %s9, 2
    // Predicated region
    $region21: #{bottleneck_forward.3} parent=5 // pred_check
      %p150 = pneg %p149
    $region22: #{bottleneck_forward.3} parent=5 // pred_check_branch
      %152 = sbr.rel (%p150) target = $region24
    $region23: #{bottleneck_forward.3} parent=5 // pred_region
      // Predicated region
      $region25: #{bottleneck_forward.3} parent=23 // pred_check
        %p153 = pneg %p43
      $region26: #{bottleneck_forward.3} parent=23 // pred_check_branch
        %155 = sbr.rel (%p153) target = $region28
      $region27: #{bottleneck_forward.3} parent=23 // pred_region
        %s156 = smul.u32 8, %s16
        %p157 = scmp.lt.s32.totalorder %s156, 15
        %s158 = scalar_select %p157, %s156, 15
        %p159 = scmp.lt.s32.totalorder %s17, 0
        %s160 = scalar_select %p159, %s17, 0
        %s161 = sadd.s32 %s160, %s158
        %s162 = smul.addr %s161, 4
        %s163 = scalar_lea.vmem %s0, %s162
        %s164 = smul.u32 8, %s16
      $region28: #{bottleneck_forward.3} parent=23 // pred_fallthru
        _
    $region24: #{bottleneck_forward.3} parent=5 // pred_fallthru
      _
    %p165 = scmp.le.s32.totalorder 1, %s9
    %p166 = scmp.lt.s32.totalorder %s9, 3
    %p167 = pnand %p165, %p166
    %p168 = pneg %p167
    // Predicated region
    $region29: #{bottleneck_forward.3} parent=5 // pred_check
      _
    $region30: #{bottleneck_forward.3} parent=5 // pred_check_branch
      %170 = sbr.rel (%p167) target = $region32
    $region31: #{bottleneck_forward.3} parent=5 // pred_region
      %s171 = ssub.s32 %s9, 1
      %s172 = smul.u32 8, %s18
      %p173 = scmp.lt.s32.totalorder %s172, 15
      %s174 = scalar_select %p173, %s172, 15
      %p175 = scmp.lt.s32.totalorder %s19, 0
      %s176 = scalar_select %p175, %s19, 0
      %s177 = sadd.s32 %s176, %s174
      %s178 = smul.addr %s177, 4
      %s179 = scalar_lea.vmem %s0, %s178
      %p180 = pneg %p49
      %p181 = pneg %p46
      %s182 = smul.u32 16, %s19
      %p183 = scmp.lt.s32.totalorder %s182, 15
      %s184 = scalar_select %p183, %s182, 15
      %s185 = smul.addr %s184, 4
      %s186 = scalar_lea.vmem %s1, %s185
      %p187 = pneg %p75
      %p188 = pneg %p72
      %p189 = pneg %p96
      %p190 = pneg %p93
      %p191 = pneg %p122
      %p192 = pneg %p119
      %s193 = smul.u32 8, %s18
      %p194 = scmp.lt.s32.totalorder %s193, 15
      %s195 = scalar_select %p194, %s193, 15
      %s196 = smul.addr %s195, 4
      %s197 = scalar_lea.vmem %s3, %s196
      %s198 = smul.u32 8, %s18
      %p199 = scmp.lt.s32.totalorder %s198, 15
      %s200 = scalar_select %p199, %s198, 15
      %p201 = scmp.lt.s32.totalorder %s19, 0
      %s202 = scalar_select %p201, %s19, 0
      %s203 = sadd.s32 %s202, %s200
      %s204 = smul.addr %s203, 4
      %s205 = scalar_lea.vmem %s0, %s204
      %s206 = smul.u32 8, %s18
      %s207 = smul.u32 16, %s19
      %p208 = scmp.lt.s32.totalorder %s207, 15
      %s209 = scalar_select %p208, %s207, 15
      %s210 = smul.addr %s209, 4
      %s211 = scalar_lea.vmem %s1, %s210
      %s212 = smul.u32 16, %s19
      %s213 = smul.u32 8, %s18
      %p214 = scmp.lt.s32.totalorder %s213, 15
      %s215 = scalar_select %p214, %s213, 15
      %s216 = smul.addr %s215, 4
      %s217 = scalar_lea.vmem %s3, %s216
      %s218 = smul.u32 8, %s18
      %p220 = scmp.eq.s32.totalorder %s19, 0
      // Predicated region
      $region33: #{bottleneck_forward.3} parent=31 // pred_check
        %p221 = pneg %p220
      $region34: #{bottleneck_forward.3} parent=31 // pred_check_branch
        %223 = sbr.rel (%p221) target = $region36
      $region35: #{bottleneck_forward.3} parent=31 // pred_region
        %224 = vst [vmem:[#allocation2] sm:$0xff] 0.0
        %225 = vst [vmem:[#allocation2 + $0x8] sm:$0xff] 0.0
        %226 = vst [vmem:[#allocation2 + $0x10] sm:$0xff] 0.0
        %227 = vst [vmem:[#allocation2 + $0x18] sm:$0xff] 0.0
        %228 = vst [vmem:[#allocation2 + $0x20] sm:$0xff] 0.0
        %229 = vst [vmem:[#allocation2 + $0x28] sm:$0xff] 0.0
        %230 = vst [vmem:[#allocation2 + $0x30] sm:$0xff] 0.0
        %231 = vst [vmem:[#allocation2 + $0x38] sm:$0xff] 0.0
      $region36: #{bottleneck_forward.3} parent=31 // pred_fallthru
        _
      %v232 = vld [vmem:[#allocation2] sm:$0xff]
      %v233 = vld [vmem:[#allocation2 + $0x8] sm:$0xff]
      %v234 = vld [vmem:[#allocation2 + $0x10] sm:$0xff]
      %v235 = vld [vmem:[#allocation2 + $0x18] sm:$0xff]
      %v236 = vld [vmem:[#allocation2 + $0x20] sm:$0xff]
      %v237 = vld [vmem:[#allocation2 + $0x28] sm:$0xff]
      %v238 = vld [vmem:[#allocation2 + $0x30] sm:$0xff]
      %v239 = vld [vmem:[#allocation2 + $0x38] sm:$0xff]
      %v240 = vld [vmem:[%s205] sm:$0xf]
      %v241 = vld [vmem:[%s205 + $0x4] sm:$0xf]
      %v242 = vld [vmem:[%s205 + $0x8] sm:$0xf]
      %v243 = vld [vmem:[%s205 + $0xc] sm:$0xf]
      %v244 = vld [vmem:[%s205 + $0x10] sm:$0xf]
      %v245 = vld [vmem:[%s205 + $0x14] sm:$0xf]
      %v246 = vld [vmem:[%s205 + $0x18] sm:$0xf]
      %v247 = vld [vmem:[%s205 + $0x1c] sm:$0xf]
      %v248 = vld [vmem:[%s211] sm:$0xf]
      %v249 = vld [vmem:[%s211 + $0x4] sm:$0xf]
      %v250 = vld [vmem:[%s211 + $0x8] sm:$0xf]
      %v251 = vld [vmem:[%s211 + $0xc] sm:$0xf]
      %v252 = vld [vmem:[%s211 + $0x10] sm:$0xf]
      %v253 = vld [vmem:[%s211 + $0x14] sm:$0xf]
      %v254 = vld [vmem:[%s211 + $0x18] sm:$0xf]
      %v255 = vld [vmem:[%s211 + $0x1c] sm:$0xf]
      %v256 = vld [vmem:[%s211 + $0x20] sm:$0xf]
      %v257 = vld [vmem:[%s211 + $0x24] sm:$0xf]
      %v258 = vld [vmem:[%s211 + $0x28] sm:$0xf]
      %v259 = vld [vmem:[%s211 + $0x2c] sm:$0xf]
      %v260 = vld [vmem:[%s211 + $0x30] sm:$0xf]
      %v261 = vld [vmem:[%s211 + $0x34] sm:$0xf]
      %v262 = vld [vmem:[%s211 + $0x38] sm:$0xf]
      %v263 = vld [vmem:[%s211 + $0x3c] sm:$0xf]
      %v272 = vunpack.c.l.b16 %v240
      %v273 = vunpack.c.l.b16 %v241
      %v274 = vunpack.c.l.b16 %v242
      %v275 = vunpack.c.l.b16 %v243
      %v276 = vunpack.c.l.b16 %v244
      %v277 = vunpack.c.l.b16 %v245
      %v278 = vunpack.c.l.b16 %v246
      %v279 = vunpack.c.l.b16 %v247
      %v280 = vpack.c.b16 %v273, %v272
      %v281 = vpack.c.b16 %v275, %v274
      %v282 = vpack.c.b16 %v277, %v276
      %v283 = vpack.c.b16 %v279, %v278
      %v304 = vunpack.c.l.b16 %v248
      %v305 = vunpack.c.l.b16 %v249
      %v306 = vunpack.c.l.b16 %v250
      %v307 = vunpack.c.l.b16 %v251
      %v308 = vunpack.c.l.b16 %v252
      %v309 = vunpack.c.l.b16 %v253
      %v310 = vunpack.c.l.b16 %v254
      %v311 = vunpack.c.l.b16 %v255
      %v312 = vunpack.c.l.b16 %v256
      %v313 = vunpack.c.l.b16 %v257
      %v314 = vunpack.c.l.b16 %v258
      %v315 = vunpack.c.l.b16 %v259
      %v316 = vunpack.c.l.b16 %v260
      %v317 = vunpack.c.l.b16 %v261
      %v318 = vunpack.c.l.b16 %v262
      %v319 = vunpack.c.l.b16 %v263
      %v320 = vpack.c.b16 %v305, %v304
      %v321 = vpack.c.b16 %v307, %v306
      %v322 = vpack.c.b16 %v309, %v308
      %v323 = vpack.c.b16 %v311, %v310
      %v324 = vpack.c.b16 %v313, %v312
      %v325 = vpack.c.b16 %v315, %v314
      %v326 = vpack.c.b16 %v317, %v316
      %v327 = vpack.c.b16 %v319, %v318
      %336 = vmatprep.subr.bf16.mxu0 0
      %337 = vmatpush1.bf16.msra.mxu0 %v320
      %338 = vmatprep.subr.bf16.mxu0 0
      %339 = vmatpush1.bf16.msra.mxu0 %v321
      %340 = vmatprep.subr.bf16.mxu0 0
      %341 = vmatpush1.bf16.msra.mxu0 %v322
      %342 = vmatprep.subr.bf16.mxu0 0
      %343 = vmatpush1.bf16.msra.mxu0 %v323
      %344 = vmatprep.subr.bf16.mxu0 0
      %345 = vmatpush1.bf16.msra.mxu0 %v324
      %346 = vmatprep.subr.bf16.mxu0 0
      %347 = vmatpush1.bf16.msra.mxu0 %v325
      %348 = vmatprep.subr.bf16.mxu0 0
      %349 = vmatpush1.bf16.msra.mxu0 %v326
      %350 = vmatprep.subr.bf16.mxu0 0
      %351 = vmatpush1.bf16.msra.mxu0 %v327
      %352 = vmatprep.subr.bf16.mxu0 0
      %353 = vmatpush1.bf16.msra.mxu0 0
      %354 = vmatprep.subr.bf16.mxu0 0
      %355 = vmatpush1.bf16.msra.mxu0 0
      %356 = vmatprep.subr.bf16.mxu0 0
      %357 = vmatpush1.bf16.msra.mxu0 0
      %358 = vmatprep.subr.bf16.mxu0 0
      %359 = vmatpush1.bf16.msra.mxu0 0
      %360 = vmatprep.subr.bf16.mxu0 0
      %361 = vmatpush1.bf16.msra.mxu0 0
      %362 = vmatprep.subr.bf16.mxu0 0
      %363 = vmatpush1.bf16.msra.mxu0 0
      %364 = vmatprep.subr.bf16.mxu0 0
      %365 = vmatpush1.bf16.msra.mxu0 0
      %366 = vmatprep.subr.bf16.mxu0 0
      %367 = vmatpush1.bf16.msra.mxu0 0
      %368 = vmatprep.mubr.bf16.mxu0 0
      %369 = vmatmul.mubr.bf16.gmra.mrb[0].mxu0 %v280
      %v370 = vpop.f32.mrb[0].mxu0
      %v371 = vadd.f32 0.0, %v370
      %v372 = vpop.f32.mrb[0].mxu0
      %v373 = vpop.f32.mrb[0].mxu0
      %v374 = vadd.f32 0.0, %v373
      %v375 = vpop.f32.mrb[0].mxu0
      %376 = vmatprep.mubr.bf16.mxu0 0
      %377 = vmatmul.mubr.bf16.gmra.mrb[0].mxu0 %v281
      %v378 = vpop.f32.mrb[0].mxu0
      %v379 = vadd.f32 0.0, %v378
      %v380 = vpop.f32.mrb[0].mxu0
      %v381 = vpop.f32.mrb[0].mxu0
      %v382 = vadd.f32 0.0, %v381
      %v383 = vpop.f32.mrb[0].mxu0
      %384 = vmatprep.mubr.bf16.mxu0 0
      %385 = vmatmul.mubr.bf16.gmra.mrb[0].mxu0 %v282
      %v386 = vpop.f32.mrb[0].mxu0
      %v387 = vadd.f32 0.0, %v386
      %v388 = vpop.f32.mrb[0].mxu0
      %v389 = vpop.f32.mrb[0].mxu0
      %v390 = vadd.f32 0.0, %v389
      %v391 = vpop.f32.mrb[0].mxu0
      %392 = vmatprep.mubr.bf16.mxu0 0
      %393 = vmatmul.mubr.bf16.gmra.mrb[0].mxu0 %v283
      %v394 = vpop.f32.mrb[0].mxu0
      %v395 = vadd.f32 0.0, %v394
      %v396 = vpop.f32.mrb[0].mxu0
      %v397 = vpop.f32.mrb[0].mxu0
      %v398 = vadd.f32 0.0, %v397
      %v399 = vpop.f32.mrb[0].mxu0
      %400 = vdwg.mxu0
      %v401 = vadd.f32 %v232, %v371
      %v402 = vadd.f32 %v233, %v374
      %v403 = vadd.f32 %v234, %v379
      %v404 = vadd.f32 %v235, %v382
      %v405 = vadd.f32 %v236, %v387
      %v406 = vadd.f32 %v237, %v390
      %v407 = vadd.f32 %v238, %v395
      %v408 = vadd.f32 %v239, %v398
      %409 = vst [vmem:[#allocation2] sm:$0xff] %v401
      %410 = vst [vmem:[#allocation2 + $0x8] sm:$0xff] %v402
      %411 = vst [vmem:[#allocation2 + $0x10] sm:$0xff] %v403
      %412 = vst [vmem:[#allocation2 + $0x18] sm:$0xff] %v404
      %413 = vst [vmem:[#allocation2 + $0x20] sm:$0xff] %v405
      %414 = vst [vmem:[#allocation2 + $0x28] sm:$0xff] %v406
      %415 = vst [vmem:[#allocation2 + $0x30] sm:$0xff] %v407
      %416 = vst [vmem:[#allocation2 + $0x38] sm:$0xff] %v408
      // Predicated region
      $region37: #{bottleneck_forward.3} parent=31 // pred_check
        %p417 = pneg %p220
      $region38: #{bottleneck_forward.3} parent=31 // pred_check_branch
        %419 = sbr.rel (%p417) target = $region40
      $region39: #{bottleneck_forward.3} parent=31 // pred_region
        %v420 = vld [vmem:[#allocation2] sm:$0xff]
        %v421 = vld [vmem:[#allocation2 + $0x8] sm:$0xff]
        %v422 = vld [vmem:[#allocation2 + $0x10] sm:$0xff]
        %v423 = vld [vmem:[#allocation2 + $0x18] sm:$0xff]
        %v424 = vld [vmem:[#allocation2 + $0x20] sm:$0xff]
        %v425 = vld [vmem:[#allocation2 + $0x28] sm:$0xff]
        %v426 = vld [vmem:[#allocation2 + $0x30] sm:$0xff]
        %v427 = vld [vmem:[#allocation2 + $0x38] sm:$0xff]
        %v428 = vld [vmem:[%s2] sm:$0x1]
        %v430 = vlaneseq
        %v431 = vshrl.u32 %v430, 7
        %v432 = vsub.s32 0, %v431
        %v433 = vrot.slane %v428, %v432
        %v435 = vadd.f32 %v420, %v433
        %v436 = vadd.f32 %v421, %v433
        %v437 = vadd.f32 %v422, %v433
        %v438 = vadd.f32 %v423, %v433
        %v439 = vadd.f32 %v424, %v433
        %v440 = vadd.f32 %v425, %v433
        %v441 = vadd.f32 %v426, %v433
        %v442 = vadd.f32 %v427, %v433
        %v443 = vmax.f32 %v435, 0.0
        %v444 = vmax.f32 %v436, 0.0
        %v445 = vmax.f32 %v437, 0.0
        %v446 = vmax.f32 %v438, 0.0
        %v447 = vmax.f32 %v439, 0.0
        %v448 = vmax.f32 %v440, 0.0
        %v449 = vmax.f32 %v441, 0.0
        %v450 = vmax.f32 %v442, 0.0
        %v451 = vpack.c.bf16 %v444, %v443
        %v452 = vpack.c.bf16 %v446, %v445
        %v453 = vpack.c.bf16 %v448, %v447
        %v454 = vpack.c.bf16 %v450, %v449
        %v459 = vunpack.c.l.b16 %v451
        %v460 = vunpack.c.h.b16 %v451
        %v461 = vunpack.c.l.b16 %v452
        %v462 = vunpack.c.h.b16 %v452
        %v463 = vunpack.c.l.b16 %v453
        %v464 = vunpack.c.h.b16 %v453
        %v465 = vunpack.c.l.b16 %v454
        %v466 = vunpack.c.h.b16 %v454
        %v467 = vpack.c.b16 %v459, %v459
        %v468 = vpack.c.b16 %v460, %v460
        %v469 = vpack.c.b16 %v461, %v461
        %v470 = vpack.c.b16 %v462, %v462
        %v471 = vpack.c.b16 %v463, %v463
        %v472 = vpack.c.b16 %v464, %v464
        %v473 = vpack.c.b16 %v465, %v465
        %v474 = vpack.c.b16 %v466, %v466
        %483 = vst [vmem:[%s217] sm:$0xf] %v467
        %484 = vst [vmem:[%s217 + $0x4] sm:$0xf] %v468
        %485 = vst [vmem:[%s217 + $0x8] sm:$0xf] %v469
        %486 = vst [vmem:[%s217 + $0xc] sm:$0xf] %v470
        %487 = vst [vmem:[%s217 + $0x10] sm:$0xf] %v471
        %488 = vst [vmem:[%s217 + $0x14] sm:$0xf] %v472
        %489 = vst [vmem:[%s217 + $0x18] sm:$0xf] %v473
        %490 = vst [vmem:[%s217 + $0x1c] sm:$0xf] %v474
      $region40: #{bottleneck_forward.3} parent=31 // pred_fallthru
        _
      %s491 = smul.u32 8, %s18
      %p492 = scmp.lt.s32.totalorder %s491, 15
      %s493 = scalar_select %p492, %s491, 15
      %s494 = smul.addr %s493, 4
      %s495 = scalar_lea.vmem %s3, %s494
      // Predicated region
      $region41: #{bottleneck_forward.3} parent=31 // pred_check
        %p496 = pneg %p119
      $region42: #{bottleneck_forward.3} parent=31 // pred_check_branch
        %498 = sbr.rel (%p496) target = $region44
      $region43: #{bottleneck_forward.3} parent=31 // pred_region
        %s499 = smul.u32 8, %s18
      $region44: #{bottleneck_forward.3} parent=31 // pred_fallthru
        _
    $region32: #{bottleneck_forward.3} parent=5 // pred_fallthru
      _
    %p500 = scmp.le.s32.totalorder 2, %s9
    // Predicated region
    $region45: #{bottleneck_forward.3} parent=5 // pred_check
      %p501 = pneg %p500
    $region46: #{bottleneck_forward.3} parent=5 // pred_check_branch
      %503 = sbr.rel (%p501) target = $region48
    $region47: #{bottleneck_forward.3} parent=5 // pred_region
      %s504 = ssub.s32 %s9, 2
      // Predicated region
      $region49: #{bottleneck_forward.3} parent=47 // pred_check
        %p505 = pneg %p125
      $region50: #{bottleneck_forward.3} parent=47 // pred_check_branch
        %507 = sbr.rel (%p505) target = $region52
      $region51: #{bottleneck_forward.3} parent=47 // pred_region
        %s508 = smul.u32 8, %s20
        %p509 = scmp.lt.s32.totalorder %s508, 15
        %s510 = scalar_select %p509, %s508, 15
        %s511 = smul.addr %s510, 4
        %s512 = scalar_lea.vmem %s3, %s511
      $region52: #{bottleneck_forward.3} parent=47 // pred_fallthru
        _
    $region48: #{bottleneck_forward.3} parent=5 // pred_fallthru
      _
  $region6: #{bottleneck_forward.3} parent=0 // loop_footer
    %s13 = sadd.s32 1, %s9
  $region7: #{bottleneck_forward.3} parent=0 // loop_footer_branch
    %8 = sbr.rel target = $region3
  $region8: #{bottleneck_forward.3} parent=0 // loop_exit
    _

// kernel: bottleneck_forward.5
$region0: #{bottleneck_forward.5}
  #allocation0 [shape = 'u32[]', space=smem, size = 0x4, offset = 0x4, fixed_abs, tag = 'smem constant byte address 0x4 - core index']
  #allocation1 [shape = 'u32[144,128]{1,0:T(1,128)}', space=vmem, size = 0x12000, scoped, tag = 'internal scratch']
  %s0 = inlined_call_operand.vmem [shape: bf16[128,128], index: 0, kind: input, shape index: {}]
  %s1 = inlined_call_operand.vmem [shape: bf16[128,128], index: 1, kind: input, shape index: {}]
  %s2 = inlined_call_operand.vmem [shape: bf16[128,128], index: 2, kind: input, shape index: {}]
  %s3 = inlined_call_operand.vmem [shape: f32[1,128], index: 3, kind: input, shape index: {}]
  %s4 = inlined_call_operand.vmem [shape: bf16[128,128], index: 4, kind: input, shape index: {}]
  %s5 = inlined_call_operand.vmem [shape: f32[1,128], index: 5, kind: input, shape index: {}]
  %s6 = inlined_call_operand.vmem [shape: bf16[128,128], index: 6, kind: output, shape index: {}]
  %s7 = sld [smem:[#allocation0]]
  $region57: #{bottleneck_forward.5} parent=0
    _
  %s9 = ssub.s32 1, %s7
  %s10 = scalar_select 0, %s9, %s7
  loop: start=0, step=1, limit=4
  $region2: #{bottleneck_forward.5} parent=0 // loop_pre_header
    _
  $region3: #{bottleneck_forward.5} parent=0 // loop_header
    %s12 = sphi 0, %s16
    %p13 = scmp.ge.s32.totalorder %s12, 4
    %s19 = sphi 0, %s31
    %s20 = sphi 0, %s27
    %s21 = sphi 0, %s19
    %s22 = sphi 0, %s20
    %s23 = sphi 0, %s21
    %s24 = sphi 0, %s22
    %s34 = sphi 0, %s36
    %s37 = sphi 0, %s34
    %s38 = sphi 0, %s37
    %s54 = sphi 0, %s38
    %s60 = sphi 0, %s62
    %s63 = sphi 0, %s60
    %s64 = sphi 0, %s63
    %s80 = sphi 0, %s64
    %s86 = sphi 0, %s88
    %s89 = sphi 0, %s86
    %s90 = sphi 0, %s89
    %s106 = sphi 0, %s90
    %s112 = sphi 0, %s114
    %s115 = sphi 0, %s112
    %s116 = sphi 0, %s115
    %s132 = sphi 0, %s116
    %s138 = sphi 0, %s140
    %s141 = sphi 0, %s138
    %s142 = sphi 0, %s141
    %s158 = sphi 0, %s142
    %s164 = sphi 0, %s166
    %s167 = sphi 0, %s164
    %s168 = sphi 0, %s167
    %s184 = sphi 0, %s168
    %s192 = sphi 0, %s194
    %s195 = sphi 0, %s192
    %s196 = sphi 0, %s195
    %s212 = sphi 0, %s196
  $region4: #{bottleneck_forward.5} parent=0 // loop_header_branch
    %15 = sbr.rel (%p13) target = $region8
  $region5: #{bottleneck_forward.5} parent=0 // loop_body
    %s17 = ssub.s32 %s12, 1
    %s18 = ssub.s32 %s12, 2
    %s25 = sadd.s32 1, %s20
    %p26 = scmp.ge.s32.totalorder %s25, 1
    %s27 = scalar_select %p26, 0, %s25
    %s28 = sadd.s32 1, %s19
    %s29 = scalar_select %p26, %s28, %s19
    %p30 = scmp.ge.s32.totalorder %s29, 2
    %s31 = scalar_select %p30, 0, %s29
    %s32 = ssub.s32 %s19, %s31
    %p33 = scmp.eq.s32.totalorder %s32, 0
    %s35 = sadd.s32 %s34, 1
    %s36 = scalar_select %p33, %s34, %s35
    %p39 = pneg %p33
    %p40 = scmp.eq.s32.totalorder %s12, 1
    %p41 = por %p39, %p40
    %p42 = scmp.ne.s32.totalorder %s34, %s37
    %p43 = scmp.eq.s32.totalorder %s12, 0
    %p44 = por %p42, %p43
    %p45 = scmp.ne.s32.totalorder %s34, %s37
    %p46 = scmp.eq.s32.totalorder %s17, 1
    %p47 = por %p45, %p46
    %p48 = scmp.ne.s32.totalorder %s37, %s38
    %p49 = scmp.eq.s32.totalorder %s17, 0
    %p50 = por %p48, %p49
    %p51 = scmp.ne.s32.totalorder %s37, %s38
    %p52 = scmp.eq.s32.totalorder %s18, 1
    %p53 = por %p51, %p52
    %p55 = scmp.ne.s32.totalorder %s38, %s54
    %p56 = scmp.eq.s32.totalorder %s18, 0
    %p57 = por %p55, %p56
    %s58 = ssub.s32 %s19, %s31
    %p59 = scmp.eq.s32.totalorder %s58, 0
    %s61 = sadd.s32 %s60, 1
    %s62 = scalar_select %p59, %s60, %s61
    %p65 = pneg %p59
    %p66 = scmp.eq.s32.totalorder %s12, 1
    %p67 = por %p65, %p66
    %p68 = scmp.ne.s32.totalorder %s60, %s63
    %p69 = scmp.eq.s32.totalorder %s12, 0
    %p70 = por %p68, %p69
    %p71 = scmp.ne.s32.totalorder %s60, %s63
    %p72 = scmp.eq.s32.totalorder %s17, 1
    %p73 = por %p71, %p72
    %p74 = scmp.ne.s32.totalorder %s63, %s64
    %p75 = scmp.eq.s32.totalorder %s17, 0
    %p76 = por %p74, %p75
    %p77 = scmp.ne.s32.totalorder %s63, %s64
    %p78 = scmp.eq.s32.totalorder %s18, 1
    %p79 = por %p77, %p78
    %p81 = scmp.ne.s32.totalorder %s64, %s80
    %p82 = scmp.eq.s32.totalorder %s18, 0
    %p83 = por %p81, %p82
    %s84 = ssub.s32 %s20, %s27
    %p85 = scmp.eq.s32.totalorder %s84, 0
    %s87 = sadd.s32 %s86, 1
    %s88 = scalar_select %p85, %s86, %s87
    %p91 = pneg %p85
    %p92 = scmp.eq.s32.totalorder %s12, 1
    %p93 = por %p91, %p92
    %p94 = scmp.ne.s32.totalorder %s86, %s89
    %p95 = scmp.eq.s32.totalorder %s12, 0
    %p96 = por %p94, %p95
    %p97 = scmp.ne.s32.totalorder %s86, %s89
    %p98 = scmp.eq.s32.totalorder %s17, 1
    %p99 = por %p97, %p98
    %p100 = scmp.ne.s32.totalorder %s89, %s90
    %p101 = scmp.eq.s32.totalorder %s17, 0
    %p102 = por %p100, %p101
    %p103 = scmp.ne.s32.totalorder %s89, %s90
    %p104 = scmp.eq.s32.totalorder %s18, 1
    %p105 = por %p103, %p104
    %p107 = scmp.ne.s32.totalorder %s90, %s106
    %p108 = scmp.eq.s32.totalorder %s18, 0
    %p109 = por %p107, %p108
    %s110 = ssub.s32 %s20, %s27
    %p111 = scmp.eq.s32.totalorder %s110, 0
    %s113 = sadd.s32 %s112, 1
    %s114 = scalar_select %p111, %s112, %s113
    %p117 = pneg %p111
    %p118 = scmp.eq.s32.totalorder %s12, 1
    %p119 = por %p117, %p118
    %p120 = scmp.ne.s32.totalorder %s112, %s115
    %p121 = scmp.eq.s32.totalorder %s12, 0
    %p122 = por %p120, %p121
    %p123 = scmp.ne.s32.totalorder %s112, %s115
    %p124 = scmp.eq.s32.totalorder %s17, 1
    %p125 = por %p123, %p124
    %p126 = scmp.ne.s32.totalorder %s115, %s116
    %p127 = scmp.eq.s32.totalorder %s17, 0
    %p128 = por %p126, %p127
    %p129 = scmp.ne.s32.totalorder %s115, %s116
    %p130 = scmp.eq.s32.totalorder %s18, 1
    %p131 = por %p129, %p130
    %p133 = scmp.ne.s32.totalorder %s116, %s132
    %p134 = scmp.eq.s32.totalorder %s18, 0
    %p135 = por %p133, %p134
    %s136 = ssub.s32 %s20, %s27
    %p137 = scmp.eq.s32.totalorder %s136, 0
    %s139 = sadd.s32 %s138, 1
    %s140 = scalar_select %p137, %s138, %s139
    %p143 = pneg %p137
    %p144 = scmp.eq.s32.totalorder %s12, 1
    %p145 = por %p143, %p144
    %p146 = scmp.ne.s32.totalorder %s138, %s141
    %p147 = scmp.eq.s32.totalorder %s12, 0
    %p148 = por %p146, %p147
    %p149 = scmp.ne.s32.totalorder %s138, %s141
    %p150 = scmp.eq.s32.totalorder %s17, 1
    %p151 = por %p149, %p150
    %p152 = scmp.ne.s32.totalorder %s141, %s142
    %p153 = scmp.eq.s32.totalorder %s17, 0
    %p154 = por %p152, %p153
    %p155 = scmp.ne.s32.totalorder %s141, %s142
    %p156 = scmp.eq.s32.totalorder %s18, 1
    %p157 = por %p155, %p156
    %p159 = scmp.ne.s32.totalorder %s142, %s158
    %p160 = scmp.eq.s32.totalorder %s18, 0
    %p161 = por %p159, %p160
    %s162 = ssub.s32 %s20, %s27
    %p163 = scmp.eq.s32.totalorder %s162, 0
    %s165 = sadd.s32 %s164, 1
    %s166 = scalar_select %p163, %s164, %s165
    %p169 = pneg %p163
    %p170 = scmp.eq.s32.totalorder %s12, 1
    %p171 = por %p169, %p170
    %p172 = scmp.ne.s32.totalorder %s164, %s167
    %p173 = scmp.eq.s32.totalorder %s12, 0
    %p174 = por %p172, %p173
    %p175 = scmp.ne.s32.totalorder %s164, %s167
    %p176 = scmp.eq.s32.totalorder %s17, 1
    %p177 = por %p175, %p176
    %p178 = scmp.ne.s32.totalorder %s167, %s168
    %p179 = scmp.eq.s32.totalorder %s17, 0
    %p180 = por %p178, %p179
    %p181 = scmp.ne.s32.totalorder %s167, %s168
    %p182 = scmp.eq.s32.totalorder %s18, 1
    %p183 = por %p181, %p182
    %p185 = scmp.ne.s32.totalorder %s168, %s184
    %p186 = scmp.eq.s32.totalorder %s18, 0
    %p187 = por %p185, %p186
    %s188 = ssub.s32 %s19, %s31
    %s189 = ssub.s32 %s20, %s27
    %s190 = sor.u32 %s188, %s189
    %p191 = scmp.eq.s32.totalorder %s190, 0
    %s193 = sadd.s32 %s192, 1
    %s194 = scalar_select %p191, %s192, %s193
    %p197 = pneg %p191
    %p198 = scmp.eq.s32.totalorder %s12, 1
    %p199 = por %p197, %p198
    %p200 = scmp.ne.s32.totalorder %s192, %s195
    %p201 = scmp.eq.s32.totalorder %s12, 0
    %p202 = por %p200, %p201
    %p203 = scmp.ne.s32.totalorder %s192, %s195
    %p204 = scmp.eq.s32.totalorder %s17, 1
    %p205 = por %p203, %p204
    %p206 = scmp.ne.s32.totalorder %s195, %s196
    %p207 = scmp.eq.s32.totalorder %s17, 0
    %p208 = por %p206, %p207
    %p209 = scmp.ne.s32.totalorder %s195, %s196
    %p210 = scmp.eq.s32.totalorder %s18, 1
    %p211 = por %p209, %p210
    %p213 = scmp.ne.s32.totalorder %s196, %s212
    %p214 = scmp.eq.s32.totalorder %s18, 0
    %p215 = por %p213, %p214
    %p216 = scmp.le.s32.totalorder 1, %s12
    %p217 = scmp.lt.s32.totalorder %s12, 3
    %p218 = pnand %p216, %p217
    %p219 = pneg %p218
    // Predicated region
    $region9: #{bottleneck_forward.5} parent=5 // pred_check
      _
    $region10: #{bottleneck_forward.5} parent=5 // pred_check_branch
      %221 = sbr.rel (%p218) target = $region12
    $region11: #{bottleneck_forward.5} parent=5 // pred_region
      %s222 = ssub.s32 %s12, 1
      // Predicated region
      $region13: #{bottleneck_forward.5} parent=11 // pred_check
        %p223 = pneg %p102
      $region14: #{bottleneck_forward.5} parent=11 // pred_check_branch
        %225 = sbr.rel (%p223) target = $region16
      $region15: #{bottleneck_forward.5} parent=11 // pred_region
        %p226 = scmp.lt.s32.totalorder %s22, 0
        %s227 = scalar_select %p226, %s22, 0
        %s228 = smul.addr %s227, 4
        %s229 = scalar_lea.vmem %s2, %s228
      $region16: #{bottleneck_forward.5} parent=11 // pred_fallthru
        _
      // Predicated region
      $region17: #{bottleneck_forward.5} parent=11 // pred_check
        %p230 = pneg %p128
      $region18: #{bottleneck_forward.5} parent=11 // pred_check_branch
        %232 = sbr.rel (%p230) target = $region20
      $region19: #{bottleneck_forward.5} parent=11 // pred_region
        %p233 = scmp.lt.s32.totalorder %s22, 0
        %s234 = scalar_select %p233, %s22, 0
        %s235 = scalar_lea.vmem %s3, %s234
      $region20: #{bottleneck_forward.5} parent=11 // pred_fallthru
        _
      // Predicated region
      $region21: #{bottleneck_forward.5} parent=11 // pred_check
        %p236 = pneg %p154
      $region22: #{bottleneck_forward.5} parent=11 // pred_check_branch
        %238 = sbr.rel (%p236) target = $region24
      $region23: #{bottleneck_forward.5} parent=11 // pred_region
        %p239 = scmp.lt.s32.totalorder %s22, 0
        %s240 = scalar_select %p239, %s22, 0
        %s241 = smul.addr %s240, 4
        %s242 = scalar_lea.vmem %s4, %s241
      $region24: #{bottleneck_forward.5} parent=11 // pred_fallthru
        _
      // Predicated region
      $region25: #{bottleneck_forward.5} parent=11 // pred_check
        %p243 = pneg %p180
      $region26: #{bottleneck_forward.5} parent=11 // pred_check_branch
        %245 = sbr.rel (%p243) target = $region28
      $region27: #{bottleneck_forward.5} parent=11 // pred_region
        %p246 = scmp.lt.s32.totalorder %s22, 0
        %s247 = scalar_select %p246, %s22, 0
        %s248 = scalar_lea.vmem %s5, %s247
      $region28: #{bottleneck_forward.5} parent=11 // pred_fallthru
        _
    $region12: #{bottleneck_forward.5} parent=5 // pred_fallthru
      _
    %p249 = scmp.lt.s32.totalorder %s12, 2
    // Predicated region
    $region29: #{bottleneck_forward.5} parent=5 // pred_check
      %p250 = pneg %p249
    $region30: #{bottleneck_forward.5} parent=5 // pred_check_branch
      %252 = sbr.rel (%p250) target = $region32
    $region31: #{bottleneck_forward.5} parent=5 // pred_region
      // Predicated region
      $region33: #{bottleneck_forward.5} parent=31 // pred_check
        %p253 = pneg %p44
      $region34: #{bottleneck_forward.5} parent=31 // pred_check_branch
        %255 = sbr.rel (%p253) target = $region36
      $region35: #{bottleneck_forward.5} parent=31 // pred_region
        %s256 = smul.u32 8, %s19
        %p257 = scmp.lt.s32.totalorder %s256, 15
        %s258 = scalar_select %p257, %s256, 15
        %s259 = smul.addr %s258, 4
        %s260 = scalar_lea.vmem %s0, %s259
        %s261 = smul.u32 8, %s19
      $region36: #{bottleneck_forward.5} parent=31 // pred_fallthru
        _
      // Predicated region
      $region37: #{bottleneck_forward.5} parent=31 // pred_check
        %p262 = pneg %p70
      $region38: #{bottleneck_forward.5} parent=31 // pred_check_branch
        %264 = sbr.rel (%p262) target = $region40
      $region39: #{bottleneck_forward.5} parent=31 // pred_region
        %s265 = smul.u32 8, %s19
        %p266 = scmp.lt.s32.totalorder %s265, 15
        %s267 = scalar_select %p266, %s265, 15
        %s268 = smul.addr %s267, 4
        %s269 = scalar_lea.vmem %s1, %s268
        %s270 = smul.u32 8, %s19
      $region40: #{bottleneck_forward.5} parent=31 // pred_fallthru
        _
    $region32: #{bottleneck_forward.5} parent=5 // pred_fallthru
      _
    %p271 = scmp.le.s32.totalorder 1, %s12
    %p272 = scmp.lt.s32.totalorder %s12, 3
    %p273 = pnand %p271, %p272
    %p274 = pneg %p273
    // Predicated region
    $region41: #{bottleneck_forward.5} parent=5 // pred_check
      _
    $region42: #{bottleneck_forward.5} parent=5 // pred_check_branch
      %276 = sbr.rel (%p273) target = $region44
    $region43: #{bottleneck_forward.5} parent=5 // pred_region
      %s277 = ssub.s32 %s12, 1
      %s278 = smul.u32 8, %s21
      %p279 = scmp.lt.s32.totalorder %s278, 15
      %s280 = scalar_select %p279, %s278, 15
      %s281 = smul.addr %s280, 4
      %s282 = scalar_lea.vmem %s0, %s281
      %p283 = pneg %p50
      %p284 = pneg %p47
      %s285 = smul.u32 8, %s21
      %p286 = scmp.lt.s32.totalorder %s285, 15
      %s287 = scalar_select %p286, %s285, 15
      %s288 = smul.addr %s287, 4
      %s289 = scalar_lea.vmem %s1, %s288
      %p290 = pneg %p76
      %p291 = pneg %p73
      %p292 = scmp.lt.s32.totalorder %s22, 0
      %s293 = scalar_select %p292, %s22, 0
      %s294 = smul.addr %s293, 4
      %s295 = scalar_lea.vmem %s2, %s294
      %p296 = pneg %p102
      %p297 = pneg %p99
      %p298 = scmp.lt.s32.totalorder %s22, 0
      %s299 = scalar_select %p298, %s22, 0
      %s300 = scalar_lea.vmem %s3, %s299
      %p301 = pneg %p128
      %p302 = pneg %p125
      %p303 = scmp.lt.s32.totalorder %s22, 0
      %s304 = scalar_select %p303, %s22, 0
      %s305 = smul.addr %s304, 4
      %s306 = scalar_lea.vmem %s4, %s305
      %p307 = pneg %p154
      %p308 = pneg %p151
      %p309 = scmp.lt.s32.totalorder %s22, 0
      %s310 = scalar_select %p309, %s22, 0
      %s311 = scalar_lea.vmem %s5, %s310
      %p312 = pneg %p180
      %p313 = pneg %p177
      %p314 = pneg %p208
      %p315 = pneg %p205
      %s316 = smul.u32 8, %s21
      %p317 = scmp.lt.s32.totalorder %s316, 15
      %s318 = scalar_select %p317, %s316, 15
      %p319 = scmp.lt.s32.totalorder %s22, 0
      %s320 = scalar_select %p319, %s22, 0
      %s321 = sadd.s32 %s320, %s318
      %s322 = smul.addr %s321, 4
      %s323 = scalar_lea.vmem %s6, %s322
      %s324 = smul.u32 8, %s21
      %p325 = scmp.lt.s32.totalorder %s324, 15
      %s326 = scalar_select %p325, %s324, 15
      %s327 = smul.addr %s326, 4
      %s328 = scalar_lea.vmem %s0, %s327
      %s329 = smul.u32 8, %s21
      %s330 = smul.u32 8, %s21
      %p331 = scmp.lt.s32.totalorder %s330, 15
      %s332 = scalar_select %p331, %s330, 15
      %s333 = smul.addr %s332, 4
      %s334 = scalar_lea.vmem %s1, %s333
      %s335 = smul.u32 8, %s21
      %p336 = scmp.lt.s32.totalorder %s22, 0
      %s337 = scalar_select %p336, %s22, 0
      %s338 = smul.addr %s337, 4
      %s339 = scalar_lea.vmem %s2, %s338
      %p340 = scmp.lt.s32.totalorder %s22, 0
      %s341 = scalar_select %p340, %s22, 0
      %s342 = scalar_lea.vmem %s3, %s341
      %p343 = scmp.lt.s32.totalorder %s22, 0
      %s344 = scalar_select %p343, %s22, 0
      %s345 = smul.addr %s344, 4
      %s346 = scalar_lea.vmem %s4, %s345
      %p347 = scmp.lt.s32.totalorder %s22, 0
      %s348 = scalar_select %p347, %s22, 0
      %s349 = scalar_lea.vmem %s5, %s348
      %s350 = smul.u32 8, %s21
      %p351 = scmp.lt.s32.totalorder %s350, 15
      %s352 = scalar_select %p351, %s350, 15
      %p353 = scmp.lt.s32.totalorder %s22, 0
      %s354 = scalar_select %p353, %s22, 0
      %s355 = sadd.s32 %s354, %s352
      %s356 = smul.addr %s355, 4
      %s357 = scalar_lea.vmem %s6, %s356
      %s358 = smul.u32 8, %s21
      %v360 = vld [vmem:[%s328] sm:$0xf]
      %v361 = vld [vmem:[%s328 + $0x4] sm:$0xf]
      %v362 = vld [vmem:[%s328 + $0x8] sm:$0xf]
      %v363 = vld [vmem:[%s328 + $0xc] sm:$0xf]
      %v364 = vld [vmem:[%s328 + $0x10] sm:$0xf]
      %v365 = vld [vmem:[%s328 + $0x14] sm:$0xf]
      %v366 = vld [vmem:[%s328 + $0x18] sm:$0xf]
      %v367 = vld [vmem:[%s328 + $0x1c] sm:$0xf]
      %v368 = vld [vmem:[%s339] sm:$0xf]
      %v369 = vld [vmem:[%s339 + $0x4] sm:$0xf]
      %v370 = vld [vmem:[%s339 + $0x8] sm:$0xf]
      %v371 = vld [vmem:[%s339 + $0xc] sm:$0xf]
      %v372 = vld [vmem:[%s339 + $0x10] sm:$0xf]
      %v373 = vld [vmem:[%s339 + $0x14] sm:$0xf]
      %v374 = vld [vmem:[%s339 + $0x18] sm:$0xf]
      %v375 = vld [vmem:[%s339 + $0x1c] sm:$0xf]
      %v376 = vld [vmem:[%s339 + $0x20] sm:$0xf]
      %v377 = vld [vmem:[%s339 + $0x24] sm:$0xf]
      %v378 = vld [vmem:[%s339 + $0x28] sm:$0xf]
      %v379 = vld [vmem:[%s339 + $0x2c] sm:$0xf]
      %v380 = vld [vmem:[%s339 + $0x30] sm:$0xf]
      %v381 = vld [vmem:[%s339 + $0x34] sm:$0xf]
      %v382 = vld [vmem:[%s339 + $0x38] sm:$0xf]
      %v383 = vld [vmem:[%s339 + $0x3c] sm:$0xf]
      %v384 = vld [vmem:[%s334] sm:$0xf]
      %v385 = vld [vmem:[%s334 + $0x4] sm:$0xf]
      %v386 = vld [vmem:[%s334 + $0x8] sm:$0xf]
      %v387 = vld [vmem:[%s334 + $0xc] sm:$0xf]
      %v388 = vld [vmem:[%s334 + $0x10] sm:$0xf]
      %v389 = vld [vmem:[%s334 + $0x14] sm:$0xf]
      %v390 = vld [vmem:[%s334 + $0x18] sm:$0xf]
      %v391 = vld [vmem:[%s334 + $0x1c] sm:$0xf]
      %v392 = vld [vmem:[%s346] sm:$0xf]
      %v393 = vld [vmem:[%s346 + $0x4] sm:$0xf]
      %v394 = vld [vmem:[%s346 + $0x8] sm:$0xf]
      %v395 = vld [vmem:[%s346 + $0xc] sm:$0xf]
      %v396 = vld [vmem:[%s346 + $0x10] sm:$0xf]
      %v397 = vld [vmem:[%s346 + $0x14] sm:$0xf]
      %v398 = vld [vmem:[%s346 + $0x18] sm:$0xf]
      %v399 = vld [vmem:[%s346 + $0x1c] sm:$0xf]
      %v400 = vld [vmem:[%s346 + $0x20] sm:$0xf]
      %v401 = vld [vmem:[%s346 + $0x24] sm:$0xf]
      %v402 = vld [vmem:[%s346 + $0x28] sm:$0xf]
      %v403 = vld [vmem:[%s346 + $0x2c] sm:$0xf]
      %v404 = vld [vmem:[%s346 + $0x30] sm:$0xf]
      %v405 = vld [vmem:[%s346 + $0x34] sm:$0xf]
      %v406 = vld [vmem:[%s346 + $0x38] sm:$0xf]
      %v407 = vld [vmem:[%s346 + $0x3c] sm:$0xf]
      %v416 = vunpack.c.l.b16 %v384
      %v417 = vunpack.c.l.b16 %v385
      %v418 = vunpack.c.l.b16 %v386
      %v419 = vunpack.c.l.b16 %v387
      %v420 = vunpack.c.l.b16 %v388
      %v421 = vunpack.c.l.b16 %v389
      %v422 = vunpack.c.l.b16 %v390
      %v423 = vunpack.c.l.b16 %v391
      %v424 = vpack.c.b16 %v417, %v416
      %v425 = vpack.c.b16 %v419, %v418
      %v426 = vpack.c.b16 %v421, %v420
      %v427 = vpack.c.b16 %v423, %v422
      %v448 = vunpack.c.l.b16 %v392
      %v449 = vunpack.c.l.b16 %v393
      %v450 = vunpack.c.l.b16 %v394
      %v451 = vunpack.c.l.b16 %v395
      %v452 = vunpack.c.l.b16 %v396
      %v453 = vunpack.c.l.b16 %v397
      %v454 = vunpack.c.l.b16 %v398
      %v455 = vunpack.c.l.b16 %v399
      %v456 = vunpack.c.l.b16 %v400
      %v457 = vunpack.c.l.b16 %v401
      %v458 = vunpack.c.l.b16 %v402
      %v459 = vunpack.c.l.b16 %v403
      %v460 = vunpack.c.l.b16 %v404
      %v461 = vunpack.c.l.b16 %v405
      %v462 = vunpack.c.l.b16 %v406
      %v463 = vunpack.c.l.b16 %v407
      %v464 = vpack.c.b16 %v449, %v448
      %v465 = vpack.c.b16 %v451, %v450
      %v466 = vpack.c.b16 %v453, %v452
      %v467 = vpack.c.b16 %v455, %v454
      %v468 = vpack.c.b16 %v457, %v456
      %v469 = vpack.c.b16 %v459, %v458
      %v470 = vpack.c.b16 %v461, %v460
      %v471 = vpack.c.b16 %v463, %v462
      %480 = vmatprep.subr.bf16.mxu0 0
      %481 = vmatpush1.bf16.msra.mxu0 %v464
      %482 = vmatprep.subr.bf16.mxu0 0
      %483 = vmatpush1.bf16.msra.mxu0 %v465
      %484 = vmatprep.subr.bf16.mxu0 0
      %485 = vmatpush1.bf16.msra.mxu0 %v466
      %486 = vmatprep.subr.bf16.mxu0 0
      %487 = vmatpush1.bf16.msra.mxu0 %v467
      %488 = vmatprep.subr.bf16.mxu0 0
      %489 = vmatpush1.bf16.msra.mxu0 %v468
      %490 = vmatprep.subr.bf16.mxu0 0
      %491 = vmatpush1.bf16.msra.mxu0 %v469
      %492 = vmatprep.subr.bf16.mxu0 0
      %493 = vmatpush1.bf16.msra.mxu0 %v470
      %494 = vmatprep.subr.bf16.mxu0 0
      %495 = vmatpush1.bf16.msra.mxu0 %v471
      %496 = vmatprep.subr.bf16.mxu0 0
      %497 = vmatpush1.bf16.msra.mxu0 0
      %498 = vmatprep.subr.bf16.mxu0 0
      %499 = vmatpush1.bf16.msra.mxu0 0
      %500 = vmatprep.subr.bf16.mxu0 0
      %501 = vmatpush1.bf16.msra.mxu0 0
      %502 = vmatprep.subr.bf16.mxu0 0
      %503 = vmatpush1.bf16.msra.mxu0 0
      %504 = vmatprep.subr.bf16.mxu0 0
      %505 = vmatpush1.bf16.msra.mxu0 0
      %506 = vmatprep.subr.bf16.mxu0 0
      %507 = vmatpush1.bf16.msra.mxu0 0
      %508 = vmatprep.subr.bf16.mxu0 0
      %509 = vmatpush1.bf16.msra.mxu0 0
      %510 = vmatprep.subr.bf16.mxu0 0
      %511 = vmatpush1.bf16.msra.mxu0 0
      %512 = vmatprep.mubr.bf16.mxu0 0
      %513 = vmatmul.mubr.bf16.gmra.mrb[0].mxu0 %v424
      %v514 = vpop.f32.mrb[0].mxu0
      %v515 = vadd.f32 0.0, %v514
      %v516 = vpop.f32.mrb[0].mxu0
      %v517 = vpop.f32.mrb[0].mxu0
      %v518 = vadd.f32 0.0, %v517
      %v519 = vpop.f32.mrb[0].mxu0
      %520 = vmatprep.mubr.bf16.mxu0 0
      %521 = vmatmul.mubr.bf16.gmra.mrb[0].mxu0 %v425
      %v522 = vpop.f32.mrb[0].mxu0
      %v523 = vadd.f32 0.0, %v522
      %v524 = vpop.f32.mrb[0].mxu0
      %v525 = vpop.f32.mrb[0].mxu0
      %v526 = vadd.f32 0.0, %v525
      %v527 = vpop.f32.mrb[0].mxu0
      %528 = vmatprep.mubr.bf16.mxu0 0
      %529 = vmatmul.mubr.bf16.gmra.mrb[0].mxu0 %v426
      %v530 = vpop.f32.mrb[0].mxu0
      %v531 = vadd.f32 0.0, %v530
      %v532 = vpop.f32.mrb[0].mxu0
      %v533 = vpop.f32.mrb[0].mxu0
      %v534 = vadd.f32 0.0, %v533
      %v535 = vpop.f32.mrb[0].mxu0
      %536 = vmatprep.mubr.bf16.mxu0 0
      %537 = vmatmul.mubr.bf16.gmra.mrb[0].mxu0 %v427
      %v538 = vpop.f32.mrb[0].mxu0
      %v539 = vadd.f32 0.0, %v538
      %v540 = vpop.f32.mrb[0].mxu0
      %v541 = vpop.f32.mrb[0].mxu0
      %v542 = vadd.f32 0.0, %v541
      %v543 = vpop.f32.mrb[0].mxu0
      %544 = vdwg.mxu0
      %v553 = vunpack.c.l.b16 %v360
      %v554 = vunpack.c.l.b16 %v361
      %v555 = vunpack.c.l.b16 %v362
      %v556 = vunpack.c.l.b16 %v363
      %v557 = vunpack.c.l.b16 %v364
      %v558 = vunpack.c.l.b16 %v365
      %v559 = vunpack.c.l.b16 %v366
      %v560 = vunpack.c.l.b16 %v367
      %v561 = vpack.c.b16 %v554, %v553
      %v562 = vpack.c.b16 %v556, %v555
      %v563 = vpack.c.b16 %v558, %v557
      %v564 = vpack.c.b16 %v560, %v559
      %v585 = vunpack.c.l.b16 %v368
      %v586 = vunpack.c.l.b16 %v369
      %v587 = vunpack.c.l.b16 %v370
      %v588 = vunpack.c.l.b16 %v371
      %v589 = vunpack.c.l.b16 %v372
      %v590 = vunpack.c.l.b16 %v373
      %v591 = vunpack.c.l.b16 %v374
      %v592 = vunpack.c.l.b16 %v375
      %v593 = vunpack.c.l.b16 %v376
      %v594 = vunpack.c.l.b16 %v377
      %v595 = vunpack.c.l.b16 %v378
      %v596 = vunpack.c.l.b16 %v379
      %v597 = vunpack.c.l.b16 %v380
      %v598 = vunpack.c.l.b16 %v381
      %v599 = vunpack.c.l.b16 %v382
      %v600 = vunpack.c.l.b16 %v383
      %v601 = vpack.c.b16 %v586, %v585
      %v602 = vpack.c.b16 %v588, %v587
      %v603 = vpack.c.b16 %v590, %v589
      %v604 = vpack.c.b16 %v592, %v591
      %v605 = vpack.c.b16 %v594, %v593
      %v606 = vpack.c.b16 %v596, %v595
      %v607 = vpack.c.b16 %v598, %v597
      %v608 = vpack.c.b16 %v600, %v599
      %617 = vmatprep.subr.bf16.mxu0 0
      %618 = vmatpush1.bf16.msra.mxu0 %v601
      %619 = vmatprep.subr.bf16.mxu0 0
      %620 = vmatpush1.bf16.msra.mxu0 %v602
      %621 = vmatprep.subr.bf16.mxu0 0
      %622 = vmatpush1.bf16.msra.mxu0 %v603
      %623 = vmatprep.subr.bf16.mxu0 0
      %624 = vmatpush1.bf16.msra.mxu0 %v604
      %625 = vmatprep.subr.bf16.mxu0 0
      %626 = vmatpush1.bf16.msra.mxu0 %v605
      %627 = vmatprep.subr.bf16.mxu0 0
      %628 = vmatpush1.bf16.msra.mxu0 %v606
      %629 = vmatprep.subr.bf16.mxu0 0
      %630 = vmatpush1.bf16.msra.mxu0 %v607
      %631 = vmatprep.subr.bf16.mxu0 0
      %632 = vmatpush1.bf16.msra.mxu0 %v608
      %633 = vmatprep.subr.bf16.mxu0 0
      %634 = vmatpush1.bf16.msra.mxu0 0
      %635 = vmatprep.subr.bf16.mxu0 0
      %636 = vmatpush1.bf16.msra.mxu0 0
      %637 = vmatprep.subr.bf16.mxu0 0
      %638 = vmatpush1.bf16.msra.mxu0 0
      %639 = vmatprep.subr.bf16.mxu0 0
      %640 = vmatpush1.bf16.msra.mxu0 0
      %641 = vmatprep.subr.bf16.mxu0 0
      %642 = vmatpush1.bf16.msra.mxu0 0
      %643 = vmatprep.subr.bf16.mxu0 0
      %644 = vmatpush1.bf16.msra.mxu0 0
      %645 = vmatprep.subr.bf16.mxu0 0
      %646 = vmatpush1.bf16.msra.mxu0 0
      %647 = vmatprep.subr.bf16.mxu0 0
      %648 = vmatpush1.bf16.msra.mxu0 0
      %649 = vmatprep.mubr.bf16.mxu0 0
      %650 = vmatmul.mubr.bf16.gmra.mrb[0].mxu0 %v561
      %v651 = vpop.f32.mrb[0].mxu0
      %v652 = vadd.f32 %v515, %v651
      %v653 = vpop.f32.mrb[0].mxu0
      %v654 = vpop.f32.mrb[0].mxu0
      %v655 = vadd.f32 %v518, %v654
      %v656 = vpop.f32.mrb[0].mxu0
      %657 = vmatprep.mubr.bf16.mxu0 0
      %658 = vmatmul.mubr.bf16.gmra.mrb[0].mxu0 %v562
      %v659 = vpop.f32.mrb[0].mxu0
      %v660 = vadd.f32 %v523, %v659
      %v661 = vpop.f32.mrb[0].mxu0
      %v662 = vpop.f32.mrb[0].mxu0
      %v663 = vadd.f32 %v526, %v662
      %v664 = vpop.f32.mrb[0].mxu0
      %665 = vmatprep.mubr.bf16.mxu0 0
      %666 = vmatmul.mubr.bf16.gmra.mrb[0].mxu0 %v563
      %v667 = vpop.f32.mrb[0].mxu0
      %v668 = vadd.f32 %v531, %v667
      %v669 = vpop.f32.mrb[0].mxu0
      %v670 = vpop.f32.mrb[0].mxu0
      %v671 = vadd.f32 %v534, %v670
      %v672 = vpop.f32.mrb[0].mxu0
      %673 = vmatprep.mubr.bf16.mxu0 0
      %674 = vmatmul.mubr.bf16.gmra.mrb[0].mxu0 %v564
      %v675 = vpop.f32.mrb[0].mxu0
      %v676 = vadd.f32 %v539, %v675
      %v677 = vpop.f32.mrb[0].mxu0
      %v678 = vpop.f32.mrb[0].mxu0
      %v679 = vadd.f32 %v542, %v678
      %v680 = vpop.f32.mrb[0].mxu0
      %681 = vdwg.mxu0
      %v682 = vld [vmem:[%s342] sm:$0x1]
      %v683 = vld [vmem:[%s349] sm:$0x1]
      %v684 = vadd.f32 %v682, %v683
      %v686 = vlaneseq
      %v687 = vshrl.u32 %v686, 7
      %v688 = vsub.s32 0, %v687
      %v689 = vrot.slane %v684, %v688
      %v691 = vadd.f32 %v652, %v689
      %v692 = vadd.f32 %v655, %v689
      %v693 = vadd.f32 %v660, %v689
      %v694 = vadd.f32 %v663, %v689
      %v695 = vadd.f32 %v668, %v689
      %v696 = vadd.f32 %v671, %v689
      %v697 = vadd.f32 %v676, %v689
      %v698 = vadd.f32 %v679, %v689
      %v699 = vmax.f32 %v691, 0.0
      %v700 = vmax.f32 %v692, 0.0
      %v701 = vmax.f32 %v693, 0.0
      %v702 = vmax.f32 %v694, 0.0
      %v703 = vmax.f32 %v695, 0.0
      %v704 = vmax.f32 %v696, 0.0
      %v705 = vmax.f32 %v697, 0.0
      %v706 = vmax.f32 %v698, 0.0
      %v707 = vpack.c.bf16 %v700, %v699
      %v708 = vpack.c.bf16 %v702, %v701
      %v709 = vpack.c.bf16 %v704, %v703
      %v710 = vpack.c.bf16 %v706, %v705
      %v715 = vunpack.c.l.b16 %v707
      %v716 = vunpack.c.h.b16 %v707
      %v717 = vunpack.c.l.b16 %v708
      %v718 = vunpack.c.h.b16 %v708
      %v719 = vunpack.c.l.b16 %v709
      %v720 = vunpack.c.h.b16 %v709
      %v721 = vunpack.c.l.b16 %v710
      %v722 = vunpack.c.h.b16 %v710
      %v723 = vpack.c.b16 %v715, %v715
      %v724 = vpack.c.b16 %v716, %v716
      %v725 = vpack.c.b16 %v717, %v717
      %v726 = vpack.c.b16 %v718, %v718
      %v727 = vpack.c.b16 %v719, %v719
      %v728 = vpack.c.b16 %v720, %v720
      %v729 = vpack.c.b16 %v721, %v721
      %v730 = vpack.c.b16 %v722, %v722
      %739 = vst [vmem:[%s357] sm:$0xf] %v723
      %740 = vst [vmem:[%s357 + $0x4] sm:$0xf] %v724
      %741 = vst [vmem:[%s357 + $0x8] sm:$0xf] %v725
      %742 = vst [vmem:[%s357 + $0xc] sm:$0xf] %v726
      %743 = vst [vmem:[%s357 + $0x10] sm:$0xf] %v727
      %744 = vst [vmem:[%s357 + $0x14] sm:$0xf] %v728
      %745 = vst [vmem:[%s357 + $0x18] sm:$0xf] %v729
      %746 = vst [vmem:[%s357 + $0x1c] sm:$0xf] %v730
      %s747 = smul.u32 8, %s21
      %p748 = scmp.lt.s32.totalorder %s747, 15
      %s749 = scalar_select %p748, %s747, 15
      %p750 = scmp.lt.s32.totalorder %s22, 0
      %s751 = scalar_select %p750, %s22, 0
      %s752 = sadd.s32 %s751, %s749
      %s753 = smul.addr %s752, 4
      %s754 = scalar_lea.vmem %s6, %s753
      // Predicated region
      $region45: #{bottleneck_forward.5} parent=43 // pred_check
        %p755 = pneg %p205
      $region46: #{bottleneck_forward.5} parent=43 // pred_check_branch
        %757 = sbr.rel (%p755) target = $region48
      $region47: #{bottleneck_forward.5} parent=43 // pred_region
        %s758 = smul.u32 8, %s21
      $region48: #{bottleneck_forward.5} parent=43 // pred_fallthru
        _
    $region44: #{bottleneck_forward.5} parent=5 // pred_fallthru
      _
    %p759 = scmp.le.s32.totalorder 2, %s12
    // Predicated region
    $region49: #{bottleneck_forward.5} parent=5 // pred_check
      %p760 = pneg %p759
    $region50: #{bottleneck_forward.5} parent=5 // pred_check_branch
      %762 = sbr.rel (%p760) target = $region52
    $region51: #{bottleneck_forward.5} parent=5 // pred_region
      %s763 = ssub.s32 %s12, 2
      // Predicated region
      $region53: #{bottleneck_forward.5} parent=51 // pred_check
        %p764 = pneg %p211
      $region54: #{bottleneck_forward.5} parent=51 // pred_check_branch
        %766 = sbr.rel (%p764) target = $region56
      $region55: #{bottleneck_forward.5} parent=51 // pred_region
        %s767 = smul.u32 8, %s23
        %p768 = scmp.lt.s32.totalorder %s767, 15
        %s769 = scalar_select %p768, %s767, 15
        %p770 = scmp.lt.s32.totalorder %s24, 0
        %s771 = scalar_select %p770, %s24, 0
        %s772 = sadd.s32 %s771, %s769
        %s773 = smul.addr %s772, 4
        %s774 = scalar_lea.vmem %s6, %s773
      $region56: #{bottleneck_forward.5} parent=51 // pred_fallthru
        _
    $region52: #{bottleneck_forward.5} parent=5 // pred_fallthru
      _
  $region6: #{bottleneck_forward.5} parent=0 // loop_footer
    %s16 = sadd.s32 1, %s12
  $region7: #{bottleneck_forward.5} parent=0 // loop_footer_branch
    %11 = sbr.rel target = $region3
  $region8: #{bottleneck_forward.5} parent=0 // loop_exit
    _

// kernel: bottleneck_forward.4
$region0: #{bottleneck_forward.4}
  #allocation0 [shape = 'u32[]', space=smem, size = 0x4, offset = 0x4, fixed_abs, tag = 'smem constant byte address 0x4 - core index']
  #allocation1 [shape = 'u32[144,128]{1,0:T(1,128)}', space=vmem, size = 0x12000, scoped, tag = 'internal scratch']
  #allocation2 [shape = 'f32[64,128]{1,0:T(8,128)}', space=vmem, size = 0x8000, scoped, tag = 'scratch operand']
  %s0 = inlined_call_operand.vmem [shape: bf16[2,12,12,128], index: 0, kind: input, shape index: {}]
  %s1 = inlined_call_operand.vmem [shape: bf16[9,128,128], index: 1, kind: input, shape index: {}]
  %s2 = inlined_call_operand.vmem [shape: f32[1,128], index: 2, kind: input, shape index: {}]
  %s3 = inlined_call_operand.vmem [shape: bf16[2,8,8,128], index: 3, kind: output, shape index: {}]
  %s4 = sld [smem:[#allocation0]]
  $region45: #{bottleneck_forward.4} parent=0
    _
  %s6 = ssub.s32 1, %s4
  %s7 = scalar_select 0, %s6, %s4
  loop: start=0, step=1, limit=4
  $region2: #{bottleneck_forward.4} parent=0 // loop_pre_header
    _
  $region3: #{bottleneck_forward.4} parent=0 // loop_header
    %s9 = sphi 0, %s13
    %p10 = scmp.ge.s32.totalorder %s9, 4
    %s16 = sphi 0, %s28
    %s17 = sphi 0, %s24
    %s18 = sphi 0, %s16
    %s19 = sphi 0, %s17
    %s20 = sphi 0, %s18
    %s21 = sphi 0, %s19
    %s31 = sphi 0, %s33
    %s34 = sphi 0, %s31
    %s35 = sphi 0, %s34
    %s51 = sphi 0, %s35
    %s57 = sphi 0, %s59
    %s60 = sphi 0, %s57
    %s61 = sphi 0, %s60
    %s77 = sphi 0, %s61
    %s83 = sphi 0, %s85
    %s86 = sphi 0, %s83
    %s87 = sphi 0, %s86
    %s103 = sphi 0, %s87
    %s111 = sphi 0, %s113
    %s114 = sphi 0, %s111
    %s115 = sphi 0, %s114
    %s131 = sphi 0, %s115
  $region4: #{bottleneck_forward.4} parent=0 // loop_header_branch
    %12 = sbr.rel (%p10) target = $region8
  $region5: #{bottleneck_forward.4} parent=0 // loop_body
    %s14 = ssub.s32 %s9, 1
    %s15 = ssub.s32 %s9, 2
    %s22 = sadd.s32 1, %s17
    %p23 = scmp.ge.s32.totalorder %s22, 1
    %s24 = scalar_select %p23, 0, %s22
    %s25 = sadd.s32 1, %s16
    %s26 = scalar_select %p23, %s25, %s16
    %p27 = scmp.ge.s32.totalorder %s26, 2
    %s28 = scalar_select %p27, 0, %s26
    %s29 = ssub.s32 %s16, %s28
    %p30 = scmp.eq.s32.totalorder %s29, 0
    %s32 = sadd.s32 %s31, 1
    %s33 = scalar_select %p30, %s31, %s32
    %p36 = pneg %p30
    %p37 = scmp.eq.s32.totalorder %s9, 1
    %p38 = por %p36, %p37
    %p39 = scmp.ne.s32.totalorder %s31, %s34
    %p40 = scmp.eq.s32.totalorder %s9, 0
    %p41 = por %p39, %p40
    %p42 = scmp.ne.s32.totalorder %s31, %s34
    %p43 = scmp.eq.s32.totalorder %s14, 1
    %p44 = por %p42, %p43
    %p45 = scmp.ne.s32.totalorder %s34, %s35
    %p46 = scmp.eq.s32.totalorder %s14, 0
    %p47 = por %p45, %p46
    %p48 = scmp.ne.s32.totalorder %s34, %s35
    %p49 = scmp.eq.s32.totalorder %s15, 1
    %p50 = por %p48, %p49
    %p52 = scmp.ne.s32.totalorder %s35, %s51
    %p53 = scmp.eq.s32.totalorder %s15, 0
    %p54 = por %p52, %p53
    %s55 = ssub.s32 %s17, %s24
    %p56 = scmp.eq.s32.totalorder %s55, 0
    %s58 = sadd.s32 %s57, 1
    %s59 = scalar_select %p56, %s57, %s58
    %p62 = pneg %p56
    %p63 = scmp.eq.s32.totalorder %s9, 1
    %p64 = por %p62, %p63
    %p65 = scmp.ne.s32.totalorder %s57, %s60
    %p66 = scmp.eq.s32.totalorder %s9, 0
    %p67 = por %p65, %p66
    %p68 = scmp.ne.s32.totalorder %s57, %s60
    %p69 = scmp.eq.s32.totalorder %s14, 1
    %p70 = por %p68, %p69
    %p71 = scmp.ne.s32.totalorder %s60, %s61
    %p72 = scmp.eq.s32.totalorder %s14, 0
    %p73 = por %p71, %p72
    %p74 = scmp.ne.s32.totalorder %s60, %s61
    %p75 = scmp.eq.s32.totalorder %s15, 1
    %p76 = por %p74, %p75
    %p78 = scmp.ne.s32.totalorder %s61, %s77
    %p79 = scmp.eq.s32.totalorder %s15, 0
    %p80 = por %p78, %p79
    %s81 = ssub.s32 %s17, %s24
    %p82 = scmp.eq.s32.totalorder %s81, 0
    %s84 = sadd.s32 %s83, 1
    %s85 = scalar_select %p82, %s83, %s84
    %p88 = pneg %p82
    %p89 = scmp.eq.s32.totalorder %s9, 1
    %p90 = por %p88, %p89
    %p91 = scmp.ne.s32.totalorder %s83, %s86
    %p92 = scmp.eq.s32.totalorder %s9, 0
    %p93 = por %p91, %p92
    %p94 = scmp.ne.s32.totalorder %s83, %s86
    %p95 = scmp.eq.s32.totalorder %s14, 1
    %p96 = por %p94, %p95
    %p97 = scmp.ne.s32.totalorder %s86, %s87
    %p98 = scmp.eq.s32.totalorder %s14, 0
    %p99 = por %p97, %p98
    %p100 = scmp.ne.s32.totalorder %s86, %s87
    %p101 = scmp.eq.s32.totalorder %s15, 1
    %p102 = por %p100, %p101
    %p104 = scmp.ne.s32.totalorder %s87, %s103
    %p105 = scmp.eq.s32.totalorder %s15, 0
    %p106 = por %p104, %p105
    %s107 = ssub.s32 %s16, %s28
    %s108 = ssub.s32 %s17, %s24
    %s109 = sor.u32 %s107, %s108
    %p110 = scmp.eq.s32.totalorder %s109, 0
    %s112 = sadd.s32 %s111, 1
    %s113 = scalar_select %p110, %s111, %s112
    %p116 = pneg %p110
    %p117 = scmp.eq.s32.totalorder %s9, 1
    %p118 = por %p116, %p117
    %p119 = scmp.ne.s32.totalorder %s111, %s114
    %p120 = scmp.eq.s32.totalorder %s9, 0
    %p121 = por %p119, %p120
    %p122 = scmp.ne.s32.totalorder %s111, %s114
    %p123 = scmp.eq.s32.totalorder %s14, 1
    %p124 = por %p122, %p123
    %p125 = scmp.ne.s32.totalorder %s114, %s115
    %p126 = scmp.eq.s32.totalorder %s14, 0
    %p127 = por %p125, %p126
    %p128 = scmp.ne.s32.totalorder %s114, %s115
    %p129 = scmp.eq.s32.totalorder %s15, 1
    %p130 = por %p128, %p129
    %p132 = scmp.ne.s32.totalorder %s115, %s131
    %p133 = scmp.eq.s32.totalorder %s15, 0
    %p134 = por %p132, %p133
    %p135 = scmp.le.s32.totalorder 1, %s9
    %p136 = scmp.lt.s32.totalorder %s9, 3
    %p137 = pnand %p135, %p136
    %p138 = pneg %p137
    // Predicated region
    $region9: #{bottleneck_forward.4} parent=5 // pred_check
      _
    $region10: #{bottleneck_forward.4} parent=5 // pred_check_branch
      %140 = sbr.rel (%p137) target = $region12
    $region11: #{bottleneck_forward.4} parent=5 // pred_region
      %s141 = ssub.s32 %s9, 1
      // Predicated region
      $region13: #{bottleneck_forward.4} parent=11 // pred_check
        %p142 = pneg %p73
      $region14: #{bottleneck_forward.4} parent=11 // pred_check_branch
        %144 = sbr.rel (%p142) target = $region16
      $region15: #{bottleneck_forward.4} parent=11 // pred_region
        %p145 = scmp.lt.s32.totalorder %s19, 0
        %s146 = scalar_select %p145, %s19, 0
        %s147 = smul.addr %s146, 4
        %s148 = scalar_lea.vmem %s1, %s147
      $region16: #{bottleneck_forward.4} parent=11 // pred_fallthru
        _
      // Predicated region
      $region17: #{bottleneck_forward.4} parent=11 // pred_check
        %p149 = pneg %p99
      $region18: #{bottleneck_forward.4} parent=11 // pred_check_branch
        %151 = sbr.rel (%p149) target = $region20
      $region19: #{bottleneck_forward.4} parent=11 // pred_region
        %p152 = scmp.lt.s32.totalorder %s19, 0
        %s153 = scalar_select %p152, %s19, 0
        %s154 = scalar_lea.vmem %s2, %s153
      $region20: #{bottleneck_forward.4} parent=11 // pred_fallthru
        _
    $region12: #{bottleneck_forward.4} parent=5 // pred_fallthru
      _
    %p155 = scmp.lt.s32.totalorder %s9, 2
    // Predicated region
    $region21: #{bottleneck_forward.4} parent=5 // pred_check
      %p156 = pneg %p155
    $region22: #{bottleneck_forward.4} parent=5 // pred_check_branch
      %158 = sbr.rel (%p156) target = $region24
    $region23: #{bottleneck_forward.4} parent=5 // pred_region
      // Predicated region
      $region25: #{bottleneck_forward.4} parent=23 // pred_check
        %p159 = pneg %p41
      $region26: #{bottleneck_forward.4} parent=23 // pred_check_branch
        %161 = sbr.rel (%p159) target = $region28
      $region27: #{bottleneck_forward.4} parent=23 // pred_region
        %p162 = scmp.lt.s32.totalorder %s16, 1
        %s163 = scalar_select %p162, %s16, 1
        %s164 = smul.addr %s163, 24
        %s165 = smul.addr %s164, 4
        %s166 = scalar_lea.vmem %s0, %s165
      $region28: #{bottleneck_forward.4} parent=23 // pred_fallthru
        _
    $region24: #{bottleneck_forward.4} parent=5 // pred_fallthru
      _
    %p167 = scmp.le.s32.totalorder 1, %s9
    %p168 = scmp.lt.s32.totalorder %s9, 3
    %p169 = pnand %p167, %p168
    %p170 = pneg %p169
    // Predicated region
    $region29: #{bottleneck_forward.4} parent=5 // pred_check
      _
    $region30: #{bottleneck_forward.4} parent=5 // pred_check_branch
      %172 = sbr.rel (%p169) target = $region32
    $region31: #{bottleneck_forward.4} parent=5 // pred_region
      %s173 = ssub.s32 %s9, 1
      %p174 = scmp.lt.s32.totalorder %s18, 1
      %s175 = scalar_select %p174, %s18, 1
      %s176 = smul.addr %s175, 24
      %s177 = smul.addr %s176, 4
      %s178 = scalar_lea.vmem %s0, %s177
      %p179 = pneg %p47
      %p180 = pneg %p44
      %p181 = scmp.lt.s32.totalorder %s19, 0
      %s182 = scalar_select %p181, %s19, 0
      %s183 = smul.addr %s182, 4
      %s184 = scalar_lea.vmem %s1, %s183
      %p185 = pneg %p73
      %p186 = pneg %p70
      %p187 = scmp.lt.s32.totalorder %s19, 0
      %s188 = scalar_select %p187, %s19, 0
      %s189 = scalar_lea.vmem %s2, %s188
      %p190 = pneg %p99
      %p191 = pneg %p96
      %p192 = pneg %p127
      %p193 = pneg %p124
      %p194 = scmp.lt.s32.totalorder %s18, 1
      %s195 = scalar_select %p194, %s18, 1
      %p196 = scmp.lt.s32.totalorder %s19, 0
      %s197 = scalar_select %p196, %s19, 0
      %s198 = smul.addr %s195, 8
      %s199 = sadd.s32 %s197, %s198
      %s200 = smul.addr %s199, 4
      %s201 = scalar_lea.vmem %s3, %s200
      %p202 = scmp.lt.s32.totalorder %s18, 1
      %s203 = scalar_select %p202, %s18, 1
      %s204 = smul.addr %s203, 24
      %s205 = smul.addr %s204, 4
      %s206 = scalar_lea.vmem %s0, %s205
      %p207 = scmp.lt.s32.totalorder %s19, 0
      %s208 = scalar_select %p207, %s19, 0
      %s209 = smul.addr %s208, 4
      %s210 = scalar_lea.vmem %s1, %s209
      %p211 = scmp.lt.s32.totalorder %s19, 0
      %s212 = scalar_select %p211, %s19, 0
      %s213 = scalar_lea.vmem %s2, %s212
      %p214 = scmp.lt.s32.totalorder %s18, 1
      %s215 = scalar_select %p214, %s18, 1
      %p216 = scmp.lt.s32.totalorder %s19, 0
      %s217 = scalar_select %p216, %s19, 0
      %s218 = smul.addr %s215, 8
      %s219 = sadd.s32 %s217, %s218
      %s220 = smul.addr %s219, 4
      %s221 = scalar_lea.vmem %s3, %s220
      %v223 = vld [vmem:[%s206] sm:$0xf]
      %v224 = vld [vmem:[%s206 + $0x4] sm:$0x3]
      %v225 = vld [vmem:[%s206 + $0x8] sm:$0xf]
      %v226 = vld [vmem:[%s206 + $0xc] sm:$0x3]
      %v227 = vld [vmem:[%s206 + $0x10] sm:$0xf]
      %v228 = vld [vmem:[%s206 + $0x14] sm:$0x3]
      %v229 = vld [vmem:[%s206 + $0x18] sm:$0xf]
      %v230 = vld [vmem:[%s206 + $0x1c] sm:$0x3]
      %v231 = vld [vmem:[%s206 + $0x20] sm:$0xf]
      %v232 = vld [vmem:[%s206 + $0x24] sm:$0x3]
      %v233 = vld [vmem:[%s206 + $0x28] sm:$0xf]
      %v234 = vld [vmem:[%s206 + $0x2c] sm:$0x3]
      %v235 = vld [vmem:[%s206 + $0x30] sm:$0xf]
      %v236 = vld [vmem:[%s206 + $0x34] sm:$0x3]
      %v237 = vld [vmem:[%s206 + $0x38] sm:$0xf]
      %v238 = vld [vmem:[%s206 + $0x3c] sm:$0x3]
      %v239 = vld [vmem:[%s206 + $0x40] sm:$0xf]
      %v240 = vld [vmem:[%s206 + $0x44] sm:$0x3]
      %v241 = vld [vmem:[%s206 + $0x48] sm:$0xf]
      %v242 = vld [vmem:[%s206 + $0x4c] sm:$0x3]
      %v243 = vld [vmem:[%s206 + $0x50] sm:$0xf]
      %v244 = vld [vmem:[%s206 + $0x54] sm:$0x3]
      %v245 = vld [vmem:[%s206 + $0x58] sm:$0xf]
      %v246 = vld [vmem:[%s206 + $0x5c] sm:$0x3]
      %247 = vst [vmem:[#allocation2] sm:$0xff] 0.0
      %248 = vst [vmem:[#allocation2 + $0x8] sm:$0xff] 0.0
      %249 = vst [vmem:[#allocation2 + $0x10] sm:$0xff] 0.0
      %250 = vst [vmem:[#allocation2 + $0x18] sm:$0xff] 0.0
      %251 = vst [vmem:[#allocation2 + $0x20] sm:$0xff] 0.0
      %252 = vst [vmem:[#allocation2 + $0x28] sm:$0xff] 0.0
      %253 = vst [vmem:[#allocation2 + $0x30] sm:$0xff] 0.0
      %254 = vst [vmem:[#allocation2 + $0x38] sm:$0xff] 0.0
      %v255 = vld [vmem:[#allocation2] sm:$0xff]
      %v256 = vld [vmem:[#allocation2 + $0x8] sm:$0xff]
      %v257 = vld [vmem:[#allocation2 + $0x10] sm:$0xff]
      %v258 = vld [vmem:[#allocation2 + $0x18] sm:$0xff]
      %v259 = vld [vmem:[#allocation2 + $0x20] sm:$0xff]
      %v260 = vld [vmem:[#allocation2 + $0x28] sm:$0xff]
      %v261 = vld [vmem:[#allocation2 + $0x30] sm:$0xff]
      %v262 = vld [vmem:[#allocation2 + $0x38] sm:$0xff]
      %v263 = vld [vmem:[%s210] sm:$0xf]
      %v264 = vld [vmem:[%s210 + $0x4] sm:$0xf]
      %v265 = vld [vmem:[%s210 + $0x8] sm:$0xf]
      %v266 = vld [vmem:[%s210 + $0xc] sm:$0xf]
      %v267 = vld [vmem:[%s210 + $0x10] sm:$0xf]
      %v268 = vld [vmem:[%s210 + $0x14] sm:$0xf]
      %v269 = vld [vmem:[%s210 + $0x18] sm:$0xf]
      %v270 = vld [vmem:[%s210 + $0x1c] sm:$0xf]
      %v271 = vld [vmem:[%s210 + $0x20] sm:$0xf]
      %v272 = vld [vmem:[%s210 + $0x24] sm:$0xf]
      %v273 = vld [vmem:[%s210 + $0x28] sm:$0xf]
      %v274 = vld [vmem:[%s210 + $0x2c] sm:$0xf]
      %v275 = vld [vmem:[%s210 + $0x30] sm:$0xf]
      %v276 = vld [vmem:[%s210 + $0x34] sm:$0xf]
      %v277 = vld [vmem:[%s210 + $0x38] sm:$0xf]
      %v278 = vld [vmem:[%s210 + $0x3c] sm:$0xf]
      %v287 = vunpack.c.l.b16 %v223
      %v288 = vunpack.c.l.b16 %v225
      %v289 = vunpack.c.l.b16 %v227
      %v290 = vunpack.c.l.b16 %v229
      %v291 = vunpack.c.l.b16 %v231
      %v292 = vunpack.c.l.b16 %v233
      %v293 = vunpack.c.l.b16 %v235
      %v294 = vunpack.c.l.b16 %v237
      %v295 = vpack.c.b16 %v288, %v287
      %v296 = vpack.c.b16 %v290, %v289
      %v297 = vpack.c.b16 %v292, %v291
      %v298 = vpack.c.b16 %v294, %v293
      %v319 = vunpack.c.l.b16 %v263
      %v320 = vunpack.c.l.b16 %v264
      %v321 = vunpack.c.l.b16 %v265
      %v322 = vunpack.c.l.b16 %v266
      %v323 = vunpack.c.l.b16 %v267
      %v324 = vunpack.c.l.b16 %v268
      %v325 = vunpack.c.l.b16 %v269
      %v326 = vunpack.c.l.b16 %v270
      %v327 = vunpack.c.l.b16 %v271
      %v328 = vunpack.c.l.b16 %v272
      %v329 = vunpack.c.l.b16 %v273
      %v330 = vunpack.c.l.b16 %v274
      %v331 = vunpack.c.l.b16 %v275
      %v332 = vunpack.c.l.b16 %v276
      %v333 = vunpack.c.l.b16 %v277
      %v334 = vunpack.c.l.b16 %v278
      %v335 = vpack.c.b16 %v320, %v319
      %v336 = vpack.c.b16 %v322, %v321
      %v337 = vpack.c.b16 %v324, %v323
      %v338 = vpack.c.b16 %v326, %v325
      %v339 = vpack.c.b16 %v328, %v327
      %v340 = vpack.c.b16 %v330, %v329
      %v341 = vpack.c.b16 %v332, %v331
      %v342 = vpack.c.b16 %v334, %v333
      %351 = vmatprep.subr.bf16.mxu0 0
      %352 = vmatpush1.bf16.msra.mxu0 %v335
      %353 = vmatprep.subr.bf16.mxu0 0
      %354 = vmatpush1.bf16.msra.mxu0 %v336
      %355 = vmatprep.subr.bf16.mxu0 0
      %356 = vmatpush1.bf16.msra.mxu0 %v337
      %357 = vmatprep.subr.bf16.mxu0 0
      %358 = vmatpush1.bf16.msra.mxu0 %v338
      %359 = vmatprep.subr.bf16.mxu0 0
      %360 = vmatpush1.bf16.msra.mxu0 %v339
      %361 = vmatprep.subr.bf16.mxu0 0
      %362 = vmatpush1.bf16.msra.mxu0 %v340
      %363 = vmatprep.subr.bf16.mxu0 0
      %364 = vmatpush1.bf16.msra.mxu0 %v341
      %365 = vmatprep.subr.bf16.mxu0 0
      %366 = vmatpush1.bf16.msra.mxu0 %v342
      %367 = vmatprep.subr.bf16.mxu0 0
      %368 = vmatpush1.bf16.msra.mxu0 0
      %369 = vmatprep.subr.bf16.mxu0 0
      %370 = vmatpush1.bf16.msra.mxu0 0
      %371 = vmatprep.subr.bf16.mxu0 0
      %372 = vmatpush1.bf16.msra.mxu0 0
      %373 = vmatprep.subr.bf16.mxu0 0
      %374 = vmatpush1.bf16.msra.mxu0 0
      %375 = vmatprep.subr.bf16.mxu0 0
      %376 = vmatpush1.bf16.msra.mxu0 0
      %377 = vmatprep.subr.bf16.mxu0 0
      %378 = vmatpush1.bf16.msra.mxu0 0
      %379 = vmatprep.subr.bf16.mxu0 0
      %380 = vmatpush1.bf16.msra.mxu0 0
      %381 = vmatprep.subr.bf16.mxu0 0
      %382 = vmatpush1.bf16.msra.mxu0 0
      %383 = vmatprep.mubr.bf16.mxu0 0
      %384 = vmatmul.mubr.bf16.gmra.mrb[0].mxu0 %v295
      %v385 = vpop.f32.mrb[0].mxu0
      %v386 = vadd.f32 0.0, %v385
      %v387 = vpop.f32.mrb[0].mxu0
      %v388 = vpop.f32.mrb[0].mxu0
      %v389 = vadd.f32 0.0, %v388
      %v390 = vpop.f32.mrb[0].mxu0
      %391 = vmatprep.mubr.bf16.mxu0 0
      %392 = vmatmul.mubr.bf16.gmra.mrb[0].mxu0 %v296
      %v393 = vpop.f32.mrb[0].mxu0
      %v394 = vadd.f32 0.0, %v393
      %v395 = vpop.f32.mrb[0].mxu0
      %v396 = vpop.f32.mrb[0].mxu0
      %v397 = vadd.f32 0.0, %v396
      %v398 = vpop.f32.mrb[0].mxu0
      %399 = vmatprep.mubr.bf16.mxu0 0
      %400 = vmatmul.mubr.bf16.gmra.mrb[0].mxu0 %v297
      %v401 = vpop.f32.mrb[0].mxu0
      %v402 = vadd.f32 0.0, %v401
      %v403 = vpop.f32.mrb[0].mxu0
      %v404 = vpop.f32.mrb[0].mxu0
      %v405 = vadd.f32 0.0, %v404
      %v406 = vpop.f32.mrb[0].mxu0
      %407 = vmatprep.mubr.bf16.mxu0 0
      %408 = vmatmul.mubr.bf16.gmra.mrb[0].mxu0 %v298
      %v409 = vpop.f32.mrb[0].mxu0
      %v410 = vadd.f32 0.0, %v409
      %v411 = vpop.f32.mrb[0].mxu0
      %v412 = vpop.f32.mrb[0].mxu0
      %v413 = vadd.f32 0.0, %v412
      %v414 = vpop.f32.mrb[0].mxu0
      %415 = vdwg.mxu0
      %v416 = vadd.f32 %v255, %v386
      %v417 = vadd.f32 %v256, %v389
      %v418 = vadd.f32 %v257, %v394
      %v419 = vadd.f32 %v258, %v397
      %v420 = vadd.f32 %v259, %v402
      %v421 = vadd.f32 %v260, %v405
      %v422 = vadd.f32 %v261, %v410
      %v423 = vadd.f32 %v262, %v413
      %424 = vst [vmem:[#allocation2] sm:$0xff] %v416
      %425 = vst [vmem:[#allocation2 + $0x8] sm:$0xff] %v417
      %426 = vst [vmem:[#allocation2 + $0x10] sm:$0xff] %v418
      %427 = vst [vmem:[#allocation2 + $0x18] sm:$0xff] %v419
      %428 = vst [vmem:[#allocation2 + $0x20] sm:$0xff] %v420
      %429 = vst [vmem:[#allocation2 + $0x28] sm:$0xff] %v421
      %430 = vst [vmem:[#allocation2 + $0x30] sm:$0xff] %v422
      %431 = vst [vmem:[#allocation2 + $0x38] sm:$0xff] %v423
      %vm440 = vcmask 1042432
      %vm441 = vcmask 1046532
      %vm442 = vmor %vm440, %vm441
      %v443 = vrot.slane %v223, 5
      %v444 = vrot.slane %v443, 4
      %v445 = vrot.slane %v224, 5
      %v446 = vsel %vm442, %v444, %v445
      %v447 = vrot.slane %v225, 5
      %v448 = vrot.slane %v447, 4
      %v449 = vrot.slane %v226, 5
      %v450 = vsel %vm442, %v448, %v449
      %v451 = vrot.slane %v227, 5
      %v452 = vrot.slane %v451, 4
      %v453 = vrot.slane %v228, 5
      %v454 = vsel %vm442, %v452, %v453
      %v455 = vrot.slane %v229, 5
      %v456 = vrot.slane %v455, 4
      %v457 = vrot.slane %v230, 5
      %v458 = vsel %vm442, %v456, %v457
      %v459 = vrot.slane %v231, 5
      %v460 = vrot.slane %v459, 4
      %v461 = vrot.slane %v232, 5
      %v462 = vsel %vm442, %v460, %v461
      %v463 = vrot.slane %v233, 5
      %v464 = vrot.slane %v463, 4
      %v465 = vrot.slane %v234, 5
      %v466 = vsel %vm442, %v464, %v465
      %v467 = vrot.slane %v235, 5
      %v468 = vrot.slane %v467, 4
      %v469 = vrot.slane %v236, 5
      %v470 = vsel %vm442, %v468, %v469
      %v471 = vrot.slane %v237, 5
      %v472 = vrot.slane %v471, 4
      %v473 = vrot.slane %v238, 5
      %v474 = vsel %vm442, %v472, %v473
      %v475 = vld [vmem:[#allocation2] sm:$0xff]
      %v476 = vld [vmem:[#allocation2 + $0x8] sm:$0xff]
      %v477 = vld [vmem:[#allocation2 + $0x10] sm:$0xff]
      %v478 = vld [vmem:[#allocation2 + $0x18] sm:$0xff]
      %v479 = vld [vmem:[#allocation2 + $0x20] sm:$0xff]
      %v480 = vld [vmem:[#allocation2 + $0x28] sm:$0xff]
      %v481 = vld [vmem:[#allocation2 + $0x30] sm:$0xff]
      %v482 = vld [vmem:[#allocation2 + $0x38] sm:$0xff]
      %s483 = scalar_lea.vmem %s210, 64
      %v484 = vld [vmem:[%s483] sm:$0xf]
      %v485 = vld [vmem:[%s483 + $0x4] sm:$0xf]
      %v486 = vld [vmem:[%s483 + $0x8] sm:$0xf]
      %v487 = vld [vmem:[%s483 + $0xc] sm:$0xf]
      %v488 = vld [vmem:[%s483 + $0x10] sm:$0xf]
      %v489 = vld [vmem:[%s483 + $0x14] sm:$0xf]
      %v490 = vld [vmem:[%s483 + $0x18] sm:$0xf]
      %v491 = vld [vmem:[%s483 + $0x1c] sm:$0xf]
      %v492 = vld [vmem:[%s483 + $0x20] sm:$0xf]
      %v493 = vld [vmem:[%s483 + $0x24] sm:$0xf]
      %v494 = vld [vmem:[%s483 + $0x28] sm:$0xf]
      %v495 = vld [vmem:[%s483 + $0x2c] sm:$0xf]
      %v496 = vld [vmem:[%s483 + $0x30] sm:$0xf]
      %v497 = vld [vmem:[%s483 + $0x34] sm:$0xf]
      %v498 = vld [vmem:[%s483 + $0x38] sm:$0xf]
      %v499 = vld [vmem:[%s483 + $0x3c] sm:$0xf]
      %v500 = vunpack.c.l.b16 %v446
      %v501 = vunpack.c.l.b16 %v450
      %v502 = vunpack.c.l.b16 %v454
      %v503 = vunpack.c.l.b16 %v458
      %v504 = vunpack.c.l.b16 %v462
      %v505 = vunpack.c.l.b16 %v466
      %v506 = vunpack.c.l.b16 %v470
      %v507 = vunpack.c.l.b16 %v474
      %v508 = vpack.c.b16 %v501, %v500
      %v509 = vpack.c.b16 %v503, %v502
      %v510 = vpack.c.b16 %v505, %v504
      %v511 = vpack.c.b16 %v507, %v506
      %v532 = vunpack.c.l.b16 %v484
      %v533 = vunpack.c.l.b16 %v485
      %v534 = vunpack.c.l.b16 %v486
      %v535 = vunpack.c.l.b16 %v487
      %v536 = vunpack.c.l.b16 %v488
      %v537 = vunpack.c.l.b16 %v489
      %v538 = vunpack.c.l.b16 %v490
      %v539 = vunpack.c.l.b16 %v491
      %v540 = vunpack.c.l.b16 %v492
      %v541 = vunpack.c.l.b16 %v493
      %v542 = vunpack.c.l.b16 %v494
      %v543 = vunpack.c.l.b16 %v495
      %v544 = vunpack.c.l.b16 %v496
      %v545 = vunpack.c.l.b16 %v497
      %v546 = vunpack.c.l.b16 %v498
      %v547 = vunpack.c.l.b16 %v499
      %v548 = vpack.c.b16 %v533, %v532
      %v549 = vpack.c.b16 %v535, %v534
      %v550 = vpack.c.b16 %v537, %v536
      %v551 = vpack.c.b16 %v539, %v538
      %v552 = vpack.c.b16 %v541, %v540
      %v553 = vpack.c.b16 %v543, %v542
      %v554 = vpack.c.b16 %v545, %v544
      %v555 = vpack.c.b16 %v547, %v546
      %564 = vmatprep.subr.bf16.mxu0 0
      %565 = vmatpush1.bf16.msra.mxu0 %v548
      %566 = vmatprep.subr.bf16.mxu0 0
      %567 = vmatpush1.bf16.msra.mxu0 %v549
      %568 = vmatprep.subr.bf16.mxu0 0
      %569 = vmatpush1.bf16.msra.mxu0 %v550
      %570 = vmatprep.subr.bf16.mxu0 0
      %571 = vmatpush1.bf16.msra.mxu0 %v551
      %572 = vmatprep.subr.bf16.mxu0 0
      %573 = vmatpush1.bf16.msra.mxu0 %v552
      %574 = vmatprep.subr.bf16.mxu0 0
      %575 = vmatpush1.bf16.msra.mxu0 %v553
      %576 = vmatprep.subr.bf16.mxu0 0
      %577 = vmatpush1.bf16.msra.mxu0 %v554
      %578 = vmatprep.subr.bf16.mxu0 0
      %579 = vmatpush1.bf16.msra.mxu0 %v555
      %580 = vmatprep.subr.bf16.mxu0 0
      %581 = vmatpush1.bf16.msra.mxu0 0
      %582 = vmatprep.subr.bf16.mxu0 0
      %583 = vmatpush1.bf16.msra.mxu0 0
      %584 = vmatprep.subr.bf16.mxu0 0
      %585 = vmatpush1.bf16.msra.mxu0 0
      %586 = vmatprep.subr.bf16.mxu0 0
      %587 = vmatpush1.bf16.msra.mxu0 0
      %588 = vmatprep.subr.bf16.mxu0 0
      %589 = vmatpush1.bf16.msra.mxu0 0
      %590 = vmatprep.subr.bf16.mxu0 0
      %591 = vmatpush1.bf16.msra.mxu0 0
      %592 = vmatprep.subr.bf16.mxu0 0
      %593 = vmatpush1.bf16.msra.mxu0 0
      %594 = vmatprep.subr.bf16.mxu0 0
      %595 = vmatpush1.bf16.msra.mxu0 0
      %596 = vmatprep.mubr.bf16.mxu0 0
      %597 = vmatmul.mubr.bf16.gmra.mrb[0].mxu0 %v508
      %v598 = vpop.f32.mrb[0].mxu0
      %v599 = vadd.f32 0.0, %v598
      %v600 = vpop.f32.mrb[0].mxu0
      %v601 = vpop.f32.mrb[0].mxu0
      %v602 = vadd.f32 0.0, %v601
      %v603 = vpop.f32.mrb[0].mxu0
      %604 = vmatprep.mubr.bf16.mxu0 0
      %605 = vmatmul.mubr.bf16.gmra.mrb[0].mxu0 %v509
      %v606 = vpop.f32.mrb[0].mxu0
      %v607 = vadd.f32 0.0, %v606
      %v608 = vpop.f32.mrb[0].mxu0
      %v609 = vpop.f32.mrb[0].mxu0
      %v610 = vadd.f32 0.0, %v609
      %v611 = vpop.f32.mrb[0].mxu0
      %612 = vmatprep.mubr.bf16.mxu0 0
      %613 = vmatmul.mubr.bf16.gmra.mrb[0].mxu0 %v510
      %v614 = vpop.f32.mrb[0].mxu0
      %v615 = vadd.f32 0.0, %v614
      %v616 = vpop.f32.mrb[0].mxu0
      %v617 = vpop.f32.mrb[0].mxu0
      %v618 = vadd.f32 0.0, %v617
      %v619 = vpop.f32.mrb[0].mxu0
      %620 = vmatprep.mubr.bf16.mxu0 0
      %621 = vmatmul.mubr.bf16.gmra.mrb[0].mxu0 %v511
      %v622 = vpop.f32.mrb[0].mxu0
      %v623 = vadd.f32 0.0, %v622
      %v624 = vpop.f32.mrb[0].mxu0
      %v625 = vpop.f32.mrb[0].mxu0
      %v626 = vadd.f32 0.0, %v625
      %v627 = vpop.f32.mrb[0].mxu0
      %628 = vdwg.mxu0
      %v629 = vadd.f32 %v475, %v599
      %v630 = vadd.f32 %v476, %v602
      %v631 = vadd.f32 %v477, %v607
      %v632 = vadd.f32 %v478, %v610
      %v633 = vadd.f32 %v479, %v615
      %v634 = vadd.f32 %v480, %v618
      %v635 = vadd.f32 %v481, %v623
      %v636 = vadd.f32 %v482, %v626
      %637 = vst [vmem:[#allocation2] sm:$0xff] %v629
      %638 = vst [vmem:[#allocation2 + $0x8] sm:$0xff] %v630
      %639 = vst [vmem:[#allocation2 + $0x10] sm:$0xff] %v631
      %640 = vst [vmem:[#allocation2 + $0x18] sm:$0xff] %v632
      %641 = vst [vmem:[#allocation2 + $0x20] sm:$0xff] %v633
      %642 = vst [vmem:[#allocation2 + $0x28] sm:$0xff] %v634
      %643 = vst [vmem:[#allocation2 + $0x30] sm:$0xff] %v635
      %644 = vst [vmem:[#allocation2 + $0x38] sm:$0xff] %v636
      %vm645 = vcmask 1041408
      %vm646 = vcmask 1045508
      %vm647 = vmor %vm645, %vm646
      %v648 = vrot.slane %v223, 6
      %v649 = vrot.slane %v648, 4
      %v650 = vrot.slane %v224, 6
      %v651 = vsel %vm647, %v649, %v650
      %v652 = vrot.slane %v225, 6
      %v653 = vrot.slane %v652, 4
      %v654 = vrot.slane %v226, 6
      %v655 = vsel %vm647, %v653, %v654
      %v656 = vrot.slane %v227, 6
      %v657 = vrot.slane %v656, 4
      %v658 = vrot.slane %v228, 6
      %v659 = vsel %vm647, %v657, %v658
      %v660 = vrot.slane %v229, 6
      %v661 = vrot.slane %v660, 4
      %v662 = vrot.slane %v230, 6
      %v663 = vsel %vm647, %v661, %v662
      %v664 = vrot.slane %v231, 6
      %v665 = vrot.slane %v664, 4
      %v666 = vrot.slane %v232, 6
      %v667 = vsel %vm647, %v665, %v666
      %v668 = vrot.slane %v233, 6
      %v669 = vrot.slane %v668, 4
      %v670 = vrot.slane %v234, 6
      %v671 = vsel %vm647, %v669, %v670
      %v672 = vrot.slane %v235, 6
      %v673 = vrot.slane %v672, 4
      %v674 = vrot.slane %v236, 6
      %v675 = vsel %vm647, %v673, %v674
      %v676 = vrot.slane %v237, 6
      %v677 = vrot.slane %v676, 4
      %v678 = vrot.slane %v238, 6
      %v679 = vsel %vm647, %v677, %v678
      %v680 = vld [vmem:[#allocation2] sm:$0xff]
      %v681 = vld [vmem:[#allocation2 + $0x8] sm:$0xff]
      %v682 = vld [vmem:[#allocation2 + $0x10] sm:$0xff]
      %v683 = vld [vmem:[#allocation2 + $0x18] sm:$0xff]
      %v684 = vld [vmem:[#allocation2 + $0x20] sm:$0xff]
      %v685 = vld [vmem:[#allocation2 + $0x28] sm:$0xff]
      %v686 = vld [vmem:[#allocation2 + $0x30] sm:$0xff]
      %v687 = vld [vmem:[#allocation2 + $0x38] sm:$0xff]
      %s688 = scalar_lea.vmem %s210, 128
      %v689 = vld [vmem:[%s688] sm:$0xf]
      %v690 = vld [vmem:[%s688 + $0x4] sm:$0xf]
      %v691 = vld [vmem:[%s688 + $0x8] sm:$0xf]
      %v692 = vld [vmem:[%s688 + $0xc] sm:$0xf]
      %v693 = vld [vmem:[%s688 + $0x10] sm:$0xf]
      %v694 = vld [vmem:[%s688 + $0x14] sm:$0xf]
      %v695 = vld [vmem:[%s688 + $0x18] sm:$0xf]
      %v696 = vld [vmem:[%s688 + $0x1c] sm:$0xf]
      %v697 = vld [vmem:[%s688 + $0x20] sm:$0xf]
      %v698 = vld [vmem:[%s688 + $0x24] sm:$0xf]
      %v699 = vld [vmem:[%s688 + $0x28] sm:$0xf]
      %v700 = vld [vmem:[%s688 + $0x2c] sm:$0xf]
      %v701 = vld [vmem:[%s688 + $0x30] sm:$0xf]
      %v702 = vld [vmem:[%s688 + $0x34] sm:$0xf]
      %v703 = vld [vmem:[%s688 + $0x38] sm:$0xf]
      %v704 = vld [vmem:[%s688 + $0x3c] sm:$0xf]
      %v705 = vunpack.c.l.b16 %v651
      %v706 = vunpack.c.l.b16 %v655
      %v707 = vunpack.c.l.b16 %v659
      %v708 = vunpack.c.l.b16 %v663
      %v709 = vunpack.c.l.b16 %v667
      %v710 = vunpack.c.l.b16 %v671
      %v711 = vunpack.c.l.b16 %v675
      %v712 = vunpack.c.l.b16 %v679
      %v713 = vpack.c.b16 %v706, %v705
      %v714 = vpack.c.b16 %v708, %v707
      %v715 = vpack.c.b16 %v710, %v709
      %v716 = vpack.c.b16 %v712, %v711
      %v737 = vunpack.c.l.b16 %v689
      %v738 = vunpack.c.l.b16 %v690
      %v739 = vunpack.c.l.b16 %v691
      %v740 = vunpack.c.l.b16 %v692
      %v741 = vunpack.c.l.b16 %v693
      %v742 = vunpack.c.l.b16 %v694
      %v743 = vunpack.c.l.b16 %v695
      %v744 = vunpack.c.l.b16 %v696
      %v745 = vunpack.c.l.b16 %v697
      %v746 = vunpack.c.l.b16 %v698
      %v747 = vunpack.c.l.b16 %v699
      %v748 = vunpack.c.l.b16 %v700
      %v749 = vunpack.c.l.b16 %v701
      %v750 = vunpack.c.l.b16 %v702
      %v751 = vunpack.c.l.b16 %v703
      %v752 = vunpack.c.l.b16 %v704
      %v753 = vpack.c.b16 %v738, %v737
      %v754 = vpack.c.b16 %v740, %v739
      %v755 = vpack.c.b16 %v742, %v741
      %v756 = vpack.c.b16 %v744, %v743
      %v757 = vpack.c.b16 %v746, %v745
      %v758 = vpack.c.b16 %v748, %v747
      %v759 = vpack.c.b16 %v750, %v749
      %v760 = vpack.c.b16 %v752, %v751
      %769 = vmatprep.subr.bf16.mxu0 0
      %770 = vmatpush1.bf16.msra.mxu0 %v753
      %771 = vmatprep.subr.bf16.mxu0 0
      %772 = vmatpush1.bf16.msra.mxu0 %v754
      %773 = vmatprep.subr.bf16.mxu0 0
      %774 = vmatpush1.bf16.msra.mxu0 %v755
      %775 = vmatprep.subr.bf16.mxu0 0
      %776 = vmatpush1.bf16.msra.mxu0 %v756
      %777 = vmatprep.subr.bf16.mxu0 0
      %778 = vmatpush1.bf16.msra.mxu0 %v757
      %779 = vmatprep.subr.bf16.mxu0 0
      %780 = vmatpush1.bf16.msra.mxu0 %v758
      %781 = vmatprep.subr.bf16.mxu0 0
      %782 = vmatpush1.bf16.msra.mxu0 %v759
      %783 = vmatprep.subr.bf16.mxu0 0
      %784 = vmatpush1.bf16.msra.mxu0 %v760
      %785 = vmatprep.subr.bf16.mxu0 0
      %786 = vmatpush1.bf16.msra.mxu0 0
      %787 = vmatprep.subr.bf16.mxu0 0
      %788 = vmatpush1.bf16.msra.mxu0 0
      %789 = vmatprep.subr.bf16.mxu0 0
      %790 = vmatpush1.bf16.msra.mxu0 0
      %791 = vmatprep.subr.bf16.mxu0 0
      %792 = vmatpush1.bf16.msra.mxu0 0
      %793 = vmatprep.subr.bf16.mxu0 0
      %794 = vmatpush1.bf16.msra.mxu0 0
      %795 = vmatprep.subr.bf16.mxu0 0
      %796 = vmatpush1.bf16.msra.mxu0 0
      %797 = vmatprep.subr.bf16.mxu0 0
      %798 = vmatpush1.bf16.msra.mxu0 0
      %799 = vmatprep.subr.bf16.mxu0 0
      %800 = vmatpush1.bf16.msra.mxu0 0
      %801 = vmatprep.mubr.bf16.mxu0 0
      %802 = vmatmul.mubr.bf16.gmra.mrb[0].mxu0 %v713
      %v803 = vpop.f32.mrb[0].mxu0
      %v804 = vadd.f32 0.0, %v803
      %v805 = vpop.f32.mrb[0].mxu0
      %v806 = vpop.f32.mrb[0].mxu0
      %v807 = vadd.f32 0.0, %v806
      %v808 = vpop.f32.mrb[0].mxu0
      %809 = vmatprep.mubr.bf16.mxu0 0
      %810 = vmatmul.mubr.bf16.gmra.mrb[0].mxu0 %v714
      %v811 = vpop.f32.mrb[0].mxu0
      %v812 = vadd.f32 0.0, %v811
      %v813 = vpop.f32.mrb[0].mxu0
      %v814 = vpop.f32.mrb[0].mxu0
      %v815 = vadd.f32 0.0, %v814
      %v816 = vpop.f32.mrb[0].mxu0
      %817 = vmatprep.mubr.bf16.mxu0 0
      %818 = vmatmul.mubr.bf16.gmra.mrb[0].mxu0 %v715
      %v819 = vpop.f32.mrb[0].mxu0
      %v820 = vadd.f32 0.0, %v819
      %v821 = vpop.f32.mrb[0].mxu0
      %v822 = vpop.f32.mrb[0].mxu0
      %v823 = vadd.f32 0.0, %v822
      %v824 = vpop.f32.mrb[0].mxu0
      %825 = vmatprep.mubr.bf16.mxu0 0
      %826 = vmatmul.mubr.bf16.gmra.mrb[0].mxu0 %v716
      %v827 = vpop.f32.mrb[0].mxu0
      %v828 = vadd.f32 0.0, %v827
      %v829 = vpop.f32.mrb[0].mxu0
      %v830 = vpop.f32.mrb[0].mxu0
      %v831 = vadd.f32 0.0, %v830
      %v832 = vpop.f32.mrb[0].mxu0
      %833 = vdwg.mxu0
      %v834 = vadd.f32 %v680, %v804
      %v835 = vadd.f32 %v681, %v807
      %v836 = vadd.f32 %v682, %v812
      %v837 = vadd.f32 %v683, %v815
      %v838 = vadd.f32 %v684, %v820
      %v839 = vadd.f32 %v685, %v823
      %v840 = vadd.f32 %v686, %v828
      %v841 = vadd.f32 %v687, %v831
      %842 = vst [vmem:[#allocation2] sm:$0xff] %v834
      %843 = vst [vmem:[#allocation2 + $0x8] sm:$0xff] %v835
      %844 = vst [vmem:[#allocation2 + $0x10] sm:$0xff] %v836
      %845 = vst [vmem:[#allocation2 + $0x18] sm:$0xff] %v837
      %846 = vst [vmem:[#allocation2 + $0x20] sm:$0xff] %v838
      %847 = vst [vmem:[#allocation2 + $0x28] sm:$0xff] %v839
      %848 = vst [vmem:[#allocation2 + $0x30] sm:$0xff] %v840
      %849 = vst [vmem:[#allocation2 + $0x38] sm:$0xff] %v841
      %v850 = vld [vmem:[#allocation2] sm:$0xff]
      %v851 = vld [vmem:[#allocation2 + $0x8] sm:$0xff]
      %v852 = vld [vmem:[#allocation2 + $0x10] sm:$0xff]
      %v853 = vld [vmem:[#allocation2 + $0x18] sm:$0xff]
      %v854 = vld [vmem:[#allocation2 + $0x20] sm:$0xff]
      %v855 = vld [vmem:[#allocation2 + $0x28] sm:$0xff]
      %v856 = vld [vmem:[#allocation2 + $0x30] sm:$0xff]
      %v857 = vld [vmem:[#allocation2 + $0x38] sm:$0xff]
      %s858 = scalar_lea.vmem %s210, 192
      %v859 = vld [vmem:[%s858] sm:$0xf]
      %v860 = vld [vmem:[%s858 + $0x4] sm:$0xf]
      %v861 = vld [vmem:[%s858 + $0x8] sm:$0xf]
      %v862 = vld [vmem:[%s858 + $0xc] sm:$0xf]
      %v863 = vld [vmem:[%s858 + $0x10] sm:$0xf]
      %v864 = vld [vmem:[%s858 + $0x14] sm:$0xf]
      %v865 = vld [vmem:[%s858 + $0x18] sm:$0xf]
      %v866 = vld [vmem:[%s858 + $0x1c] sm:$0xf]
      %v867 = vld [vmem:[%s858 + $0x20] sm:$0xf]
      %v868 = vld [vmem:[%s858 + $0x24] sm:$0xf]
      %v869 = vld [vmem:[%s858 + $0x28] sm:$0xf]
      %v870 = vld [vmem:[%s858 + $0x2c] sm:$0xf]
      %v871 = vld [vmem:[%s858 + $0x30] sm:$0xf]
      %v872 = vld [vmem:[%s858 + $0x34] sm:$0xf]
      %v873 = vld [vmem:[%s858 + $0x38] sm:$0xf]
      %v874 = vld [vmem:[%s858 + $0x3c] sm:$0xf]
      %v877 = vunpack.c.l.b16 %v239
      %v878 = vunpack.c.l.b16 %v241
      %v879 = vpack.c.b16 %v878, %v877
      %v897 = vunpack.c.l.b16 %v859
      %v898 = vunpack.c.l.b16 %v860
      %v899 = vunpack.c.l.b16 %v861
      %v900 = vunpack.c.l.b16 %v862
      %v901 = vunpack.c.l.b16 %v863
      %v902 = vunpack.c.l.b16 %v864
      %v903 = vunpack.c.l.b16 %v865
      %v904 = vunpack.c.l.b16 %v866
      %v905 = vunpack.c.l.b16 %v867
      %v906 = vunpack.c.l.b16 %v868
      %v907 = vunpack.c.l.b16 %v869
      %v908 = vunpack.c.l.b16 %v870
      %v909 = vunpack.c.l.b16 %v871
      %v910 = vunpack.c.l.b16 %v872
      %v911 = vunpack.c.l.b16 %v873
      %v912 = vunpack.c.l.b16 %v874
      %v913 = vpack.c.b16 %v898, %v897
      %v914 = vpack.c.b16 %v900, %v899
      %v915 = vpack.c.b16 %v902, %v901
      %v916 = vpack.c.b16 %v904, %v903
      %v917 = vpack.c.b16 %v906, %v905
      %v918 = vpack.c.b16 %v908, %v907
      %v919 = vpack.c.b16 %v910, %v909
      %v920 = vpack.c.b16 %v912, %v911
      %929 = vmatprep.subr.bf16.mxu0 0
      %930 = vmatpush1.bf16.msra.mxu0 %v913
      %931 = vmatprep.subr.bf16.mxu0 0
      %932 = vmatpush1.bf16.msra.mxu0 %v914
      %933 = vmatprep.subr.bf16.mxu0 0
      %934 = vmatpush1.bf16.msra.mxu0 %v915
      %935 = vmatprep.subr.bf16.mxu0 0
      %936 = vmatpush1.bf16.msra.mxu0 %v916
      %937 = vmatprep.subr.bf16.mxu0 0
      %938 = vmatpush1.bf16.msra.mxu0 %v917
      %939 = vmatprep.subr.bf16.mxu0 0
      %940 = vmatpush1.bf16.msra.mxu0 %v918
      %941 = vmatprep.subr.bf16.mxu0 0
      %942 = vmatpush1.bf16.msra.mxu0 %v919
      %943 = vmatprep.subr.bf16.mxu0 0
      %944 = vmatpush1.bf16.msra.mxu0 %v920
      %945 = vmatprep.subr.bf16.mxu0 0
      %946 = vmatpush1.bf16.msra.mxu0 0
      %947 = vmatprep.subr.bf16.mxu0 0
      %948 = vmatpush1.bf16.msra.mxu0 0
      %949 = vmatprep.subr.bf16.mxu0 0
      %950 = vmatpush1.bf16.msra.mxu0 0
      %951 = vmatprep.subr.bf16.mxu0 0
      %952 = vmatpush1.bf16.msra.mxu0 0
      %953 = vmatprep.subr.bf16.mxu0 0
      %954 = vmatpush1.bf16.msra.mxu0 0
      %955 = vmatprep.subr.bf16.mxu0 0
      %956 = vmatpush1.bf16.msra.mxu0 0
      %957 = vmatprep.subr.bf16.mxu0 0
      %958 = vmatpush1.bf16.msra.mxu0 0
      %959 = vmatprep.subr.bf16.mxu0 0
      %960 = vmatpush1.bf16.msra.mxu0 0
      %961 = vmatprep.mubr.bf16.mxu0 0
      %962 = vmatmul.mubr.bf16.gmra.mrb[0].mxu0 %v296
      %v963 = vpop.f32.mrb[0].mxu0
      %v964 = vadd.f32 0.0, %v963
      %v965 = vpop.f32.mrb[0].mxu0
      %v966 = vpop.f32.mrb[0].mxu0
      %v967 = vadd.f32 0.0, %v966
      %v968 = vpop.f32.mrb[0].mxu0
      %969 = vmatprep.mubr.bf16.mxu0 0
      %970 = vmatmul.mubr.bf16.gmra.mrb[0].mxu0 %v297
      %v971 = vpop.f32.mrb[0].mxu0
      %v972 = vadd.f32 0.0, %v971
      %v973 = vpop.f32.mrb[0].mxu0
      %v974 = vpop.f32.mrb[0].mxu0
      %v975 = vadd.f32 0.0, %v974
      %v976 = vpop.f32.mrb[0].mxu0
      %977 = vmatprep.mubr.bf16.mxu0 0
      %978 = vmatmul.mubr.bf16.gmra.mrb[0].mxu0 %v298
      %v979 = vpop.f32.mrb[0].mxu0
      %v980 = vadd.f32 0.0, %v979
      %v981 = vpop.f32.mrb[0].mxu0
      %v982 = vpop.f32.mrb[0].mxu0
      %v983 = vadd.f32 0.0, %v982
      %v984 = vpop.f32.mrb[0].mxu0
      %985 = vmatprep.mubr.bf16.mxu0 0
      %986 = vmatmul.mubr.bf16.gmra.mrb[0].mxu0 %v879
      %v987 = vpop.f32.mrb[0].mxu0
      %v988 = vadd.f32 0.0, %v987
      %v989 = vpop.f32.mrb[0].mxu0
      %v990 = vpop.f32.mrb[0].mxu0
      %v991 = vadd.f32 0.0, %v990
      %v992 = vpop.f32.mrb[0].mxu0
      %993 = vdwg.mxu0
      %v994 = vadd.f32 %v850, %v964
      %v995 = vadd.f32 %v851, %v967
      %v996 = vadd.f32 %v852, %v972
      %v997 = vadd.f32 %v853, %v975
      %v998 = vadd.f32 %v854, %v980
      %v999 = vadd.f32 %v855, %v983
      %v1000 = vadd.f32 %v856, %v988
      %v1001 = vadd.f32 %v857, %v991
      %1002 = vst [vmem:[#allocation2] sm:$0xff] %v994
      %1003 = vst [vmem:[#allocation2 + $0x8] sm:$0xff] %v995
      %1004 = vst [vmem:[#allocation2 + $0x10] sm:$0xff] %v996
      %1005 = vst [vmem:[#allocation2 + $0x18] sm:$0xff] %v997
      %1006 = vst [vmem:[#allocation2 + $0x20] sm:$0xff] %v998
      %1007 = vst [vmem:[#allocation2 + $0x28] sm:$0xff] %v999
      %1008 = vst [vmem:[#allocation2 + $0x30] sm:$0xff] %v1000
      %1009 = vst [vmem:[#allocation2 + $0x38] sm:$0xff] %v1001
      %v1012 = vrot.slane %v239, 5
      %v1013 = vrot.slane %v1012, 4
      %v1014 = vrot.slane %v240, 5
      %v1015 = vsel %vm442, %v1013, %v1014
      %v1016 = vrot.slane %v241, 5
      %v1017 = vrot.slane %v1016, 4
      %v1018 = vrot.slane %v242, 5
      %v1019 = vsel %vm442, %v1017, %v1018
      %v1020 = vld [vmem:[#allocation2] sm:$0xff]
      %v1021 = vld [vmem:[#allocation2 + $0x8] sm:$0xff]
      %v1022 = vld [vmem:[#allocation2 + $0x10] sm:$0xff]
      %v1023 = vld [vmem:[#allocation2 + $0x18] sm:$0xff]
      %v1024 = vld [vmem:[#allocation2 + $0x20] sm:$0xff]
      %v1025 = vld [vmem:[#allocation2 + $0x28] sm:$0xff]
      %v1026 = vld [vmem:[#allocation2 + $0x30] sm:$0xff]
      %v1027 = vld [vmem:[#allocation2 + $0x38] sm:$0xff]
      %s1028 = scalar_lea.vmem %s210, 256
      %v1029 = vld [vmem:[%s1028] sm:$0xf]
      %v1030 = vld [vmem:[%s1028 + $0x4] sm:$0xf]
      %v1031 = vld [vmem:[%s1028 + $0x8] sm:$0xf]
      %v1032 = vld [vmem:[%s1028 + $0xc] sm:$0xf]
      %v1033 = vld [vmem:[%s1028 + $0x10] sm:$0xf]
      %v1034 = vld [vmem:[%s1028 + $0x14] sm:$0xf]
      %v1035 = vld [vmem:[%s1028 + $0x18] sm:$0xf]
      %v1036 = vld [vmem:[%s1028 + $0x1c] sm:$0xf]
      %v1037 = vld [vmem:[%s1028 + $0x20] sm:$0xf]
      %v1038 = vld [vmem:[%s1028 + $0x24] sm:$0xf]
      %v1039 = vld [vmem:[%s1028 + $0x28] sm:$0xf]
      %v1040 = vld [vmem:[%s1028 + $0x2c] sm:$0xf]
      %v1041 = vld [vmem:[%s1028 + $0x30] sm:$0xf]
      %v1042 = vld [vmem:[%s1028 + $0x34] sm:$0xf]
      %v1043 = vld [vmem:[%s1028 + $0x38] sm:$0xf]
      %v1044 = vld [vmem:[%s1028 + $0x3c] sm:$0xf]
      %v1045 = vunpack.c.l.b16 %v1015
      %v1046 = vunpack.c.l.b16 %v1019
      %v1047 = vpack.c.b16 %v1046, %v1045
      %v1065 = vunpack.c.l.b16 %v1029
      %v1066 = vunpack.c.l.b16 %v1030
      %v1067 = vunpack.c.l.b16 %v1031
      %v1068 = vunpack.c.l.b16 %v1032
      %v1069 = vunpack.c.l.b16 %v1033
      %v1070 = vunpack.c.l.b16 %v1034
      %v1071 = vunpack.c.l.b16 %v1035
      %v1072 = vunpack.c.l.b16 %v1036
      %v1073 = vunpack.c.l.b16 %v1037
      %v1074 = vunpack.c.l.b16 %v1038
      %v1075 = vunpack.c.l.b16 %v1039
      %v1076 = vunpack.c.l.b16 %v1040
      %v1077 = vunpack.c.l.b16 %v1041
      %v1078 = vunpack.c.l.b16 %v1042
      %v1079 = vunpack.c.l.b16 %v1043
      %v1080 = vunpack.c.l.b16 %v1044
      %v1081 = vpack.c.b16 %v1066, %v1065
      %v1082 = vpack.c.b16 %v1068, %v1067
      %v1083 = vpack.c.b16 %v1070, %v1069
      %v1084 = vpack.c.b16 %v1072, %v1071
      %v1085 = vpack.c.b16 %v1074, %v1073
      %v1086 = vpack.c.b16 %v1076, %v1075
      %v1087 = vpack.c.b16 %v1078, %v1077
      %v1088 = vpack.c.b16 %v1080, %v1079
      %1097 = vmatprep.subr.bf16.mxu0 0
      %1098 = vmatpush1.bf16.msra.mxu0 %v1081
      %1099 = vmatprep.subr.bf16.mxu0 0
      %1100 = vmatpush1.bf16.msra.mxu0 %v1082
      %1101 = vmatprep.subr.bf16.mxu0 0
      %1102 = vmatpush1.bf16.msra.mxu0 %v1083
      %1103 = vmatprep.subr.bf16.mxu0 0
      %1104 = vmatpush1.bf16.msra.mxu0 %v1084
      %1105 = vmatprep.subr.bf16.mxu0 0
      %1106 = vmatpush1.bf16.msra.mxu0 %v1085
      %1107 = vmatprep.subr.bf16.mxu0 0
      %1108 = vmatpush1.bf16.msra.mxu0 %v1086
      %1109 = vmatprep.subr.bf16.mxu0 0
      %1110 = vmatpush1.bf16.msra.mxu0 %v1087
      %1111 = vmatprep.subr.bf16.mxu0 0
      %1112 = vmatpush1.bf16.msra.mxu0 %v1088
      %1113 = vmatprep.subr.bf16.mxu0 0
      %1114 = vmatpush1.bf16.msra.mxu0 0
      %1115 = vmatprep.subr.bf16.mxu0 0
      %1116 = vmatpush1.bf16.msra.mxu0 0
      %1117 = vmatprep.subr.bf16.mxu0 0
      %1118 = vmatpush1.bf16.msra.mxu0 0
      %1119 = vmatprep.subr.bf16.mxu0 0
      %1120 = vmatpush1.bf16.msra.mxu0 0
      %1121 = vmatprep.subr.bf16.mxu0 0
      %1122 = vmatpush1.bf16.msra.mxu0 0
      %1123 = vmatprep.subr.bf16.mxu0 0
      %1124 = vmatpush1.bf16.msra.mxu0 0
      %1125 = vmatprep.subr.bf16.mxu0 0
      %1126 = vmatpush1.bf16.msra.mxu0 0
      %1127 = vmatprep.subr.bf16.mxu0 0
      %1128 = vmatpush1.bf16.msra.mxu0 0
      %1129 = vmatprep.mubr.bf16.mxu0 0
      %1130 = vmatmul.mubr.bf16.gmra.mrb[0].mxu0 %v509
      %v1131 = vpop.f32.mrb[0].mxu0
      %v1132 = vadd.f32 0.0, %v1131
      %v1133 = vpop.f32.mrb[0].mxu0
      %v1134 = vpop.f32.mrb[0].mxu0
      %v1135 = vadd.f32 0.0, %v1134
      %v1136 = vpop.f32.mrb[0].mxu0
      %1137 = vmatprep.mubr.bf16.mxu0 0
      %1138 = vmatmul.mubr.bf16.gmra.mrb[0].mxu0 %v510
      %v1139 = vpop.f32.mrb[0].mxu0
      %v1140 = vadd.f32 0.0, %v1139
      %v1141 = vpop.f32.mrb[0].mxu0
      %v1142 = vpop.f32.mrb[0].mxu0
      %v1143 = vadd.f32 0.0, %v1142
      %v1144 = vpop.f32.mrb[0].mxu0
      %1145 = vmatprep.mubr.bf16.mxu0 0
      %1146 = vmatmul.mubr.bf16.gmra.mrb[0].mxu0 %v511
      %v1147 = vpop.f32.mrb[0].mxu0
      %v1148 = vadd.f32 0.0, %v1147
      %v1149 = vpop.f32.mrb[0].mxu0
      %v1150 = vpop.f32.mrb[0].mxu0
      %v1151 = vadd.f32 0.0, %v1150
      %v1152 = vpop.f32.mrb[0].mxu0
      %1153 = vmatprep.mubr.bf16.mxu0 0
      %1154 = vmatmul.mubr.bf16.gmra.mrb[0].mxu0 %v1047
      %v1155 = vpop.f32.mrb[0].mxu0
      %v1156 = vadd.f32 0.0, %v1155
      %v1157 = vpop.f32.mrb[0].mxu0
      %v1158 = vpop.f32.mrb[0].mxu0
      %v1159 = vadd.f32 0.0, %v1158
      %v1160 = vpop.f32.mrb[0].mxu0
      %1161 = vdwg.mxu0
      %v1162 = vadd.f32 %v1020, %v1132
      %v1163 = vadd.f32 %v1021, %v1135
      %v1164 = vadd.f32 %v1022, %v1140
      %v1165 = vadd.f32 %v1023, %v1143
      %v1166 = vadd.f32 %v1024, %v1148
      %v1167 = vadd.f32 %v1025, %v1151
      %v1168 = vadd.f32 %v1026, %v1156
      %v1169 = vadd.f32 %v1027, %v1159
      %1170 = vst [vmem:[#allocation2] sm:$0xff] %v1162
      %1171 = vst [vmem:[#allocation2 + $0x8] sm:$0xff] %v1163
      %1172 = vst [vmem:[#allocation2 + $0x10] sm:$0xff] %v1164
      %1173 = vst [vmem:[#allocation2 + $0x18] sm:$0xff] %v1165
      %1174 = vst [vmem:[#allocation2 + $0x20] sm:$0xff] %v1166
      %1175 = vst [vmem:[#allocation2 + $0x28] sm:$0xff] %v1167
      %1176 = vst [vmem:[#allocation2 + $0x30] sm:$0xff] %v1168
      %1177 = vst [vmem:[#allocation2 + $0x38] sm:$0xff] %v1169
      %v1178 = vrot.slane %v239, 6
      %v1179 = vrot.slane %v1178, 4
      %v1180 = vrot.slane %v240, 6
      %v1181 = vsel %vm647, %v1179, %v1180
      %v1182 = vrot.slane %v241, 6
      %v1183 = vrot.slane %v1182, 4
      %v1184 = vrot.slane %v242, 6
      %v1185 = vsel %vm647, %v1183, %v1184
      %v1186 = vld [vmem:[#allocation2] sm:$0xff]
      %v1187 = vld [vmem:[#allocation2 + $0x8] sm:$0xff]
      %v1188 = vld [vmem:[#allocation2 + $0x10] sm:$0xff]
      %v1189 = vld [vmem:[#allocation2 + $0x18] sm:$0xff]
      %v1190 = vld [vmem:[#allocation2 + $0x20] sm:$0xff]
      %v1191 = vld [vmem:[#allocation2 + $0x28] sm:$0xff]
      %v1192 = vld [vmem:[#allocation2 + $0x30] sm:$0xff]
      %v1193 = vld [vmem:[#allocation2 + $0x38] sm:$0xff]
      %s1194 = scalar_lea.vmem %s210, 320
      %v1195 = vld [vmem:[%s1194] sm:$0xf]
      %v1196 = vld [vmem:[%s1194 + $0x4] sm:$0xf]
      %v1197 = vld [vmem:[%s1194 + $0x8] sm:$0xf]
      %v1198 = vld [vmem:[%s1194 + $0xc] sm:$0xf]
      %v1199 = vld [vmem:[%s1194 + $0x10] sm:$0xf]
      %v1200 = vld [vmem:[%s1194 + $0x14] sm:$0xf]
      %v1201 = vld [vmem:[%s1194 + $0x18] sm:$0xf]
      %v1202 = vld [vmem:[%s1194 + $0x1c] sm:$0xf]
      %v1203 = vld [vmem:[%s1194 + $0x20] sm:$0xf]
      %v1204 = vld [vmem:[%s1194 + $0x24] sm:$0xf]
      %v1205 = vld [vmem:[%s1194 + $0x28] sm:$0xf]
      %v1206 = vld [vmem:[%s1194 + $0x2c] sm:$0xf]
      %v1207 = vld [vmem:[%s1194 + $0x30] sm:$0xf]
      %v1208 = vld [vmem:[%s1194 + $0x34] sm:$0xf]
      %v1209 = vld [vmem:[%s1194 + $0x38] sm:$0xf]
      %v1210 = vld [vmem:[%s1194 + $0x3c] sm:$0xf]
      %v1211 = vunpack.c.l.b16 %v1181
      %v1212 = vunpack.c.l.b16 %v1185
      %v1213 = vpack.c.b16 %v1212, %v1211
      %v1231 = vunpack.c.l.b16 %v1195
      %v1232 = vunpack.c.l.b16 %v1196
      %v1233 = vunpack.c.l.b16 %v1197
      %v1234 = vunpack.c.l.b16 %v1198
      %v1235 = vunpack.c.l.b16 %v1199
      %v1236 = vunpack.c.l.b16 %v1200
      %v1237 = vunpack.c.l.b16 %v1201
      %v1238 = vunpack.c.l.b16 %v1202
      %v1239 = vunpack.c.l.b16 %v1203
      %v1240 = vunpack.c.l.b16 %v1204
      %v1241 = vunpack.c.l.b16 %v1205
      %v1242 = vunpack.c.l.b16 %v1206
      %v1243 = vunpack.c.l.b16 %v1207
      %v1244 = vunpack.c.l.b16 %v1208
      %v1245 = vunpack.c.l.b16 %v1209
      %v1246 = vunpack.c.l.b16 %v1210
      %v1247 = vpack.c.b16 %v1232, %v1231
      %v1248 = vpack.c.b16 %v1234, %v1233
      %v1249 = vpack.c.b16 %v1236, %v1235
      %v1250 = vpack.c.b16 %v1238, %v1237
      %v1251 = vpack.c.b16 %v1240, %v1239
      %v1252 = vpack.c.b16 %v1242, %v1241
      %v1253 = vpack.c.b16 %v1244, %v1243
      %v1254 = vpack.c.b16 %v1246, %v1245
      %1263 = vmatprep.subr.bf16.mxu0 0
      %1264 = vmatpush1.bf16.msra.mxu0 %v1247
      %1265 = vmatprep.subr.bf16.mxu0 0
      %1266 = vmatpush1.bf16.msra.mxu0 %v1248
      %1267 = vmatprep.subr.bf16.mxu0 0
      %1268 = vmatpush1.bf16.msra.mxu0 %v1249
      %1269 = vmatprep.subr.bf16.mxu0 0
      %1270 = vmatpush1.bf16.msra.mxu0 %v1250
      %1271 = vmatprep.subr.bf16.mxu0 0
      %1272 = vmatpush1.bf16.msra.mxu0 %v1251
      %1273 = vmatprep.subr.bf16.mxu0 0
      %1274 = vmatpush1.bf16.msra.mxu0 %v1252
      %1275 = vmatprep.subr.bf16.mxu0 0
      %1276 = vmatpush1.bf16.msra.mxu0 %v1253
      %1277 = vmatprep.subr.bf16.mxu0 0
      %1278 = vmatpush1.bf16.msra.mxu0 %v1254
      %1279 = vmatprep.subr.bf16.mxu0 0
      %1280 = vmatpush1.bf16.msra.mxu0 0
      %1281 = vmatprep.subr.bf16.mxu0 0
      %1282 = vmatpush1.bf16.msra.mxu0 0
      %1283 = vmatprep.subr.bf16.mxu0 0
      %1284 = vmatpush1.bf16.msra.mxu0 0
      %1285 = vmatprep.subr.bf16.mxu0 0
      %1286 = vmatpush1.bf16.msra.mxu0 0
      %1287 = vmatprep.subr.bf16.mxu0 0
      %1288 = vmatpush1.bf16.msra.mxu0 0
      %1289 = vmatprep.subr.bf16.mxu0 0
      %1290 = vmatpush1.bf16.msra.mxu0 0
      %1291 = vmatprep.subr.bf16.mxu0 0
      %1292 = vmatpush1.bf16.msra.mxu0 0
      %1293 = vmatprep.subr.bf16.mxu0 0
      %1294 = vmatpush1.bf16.msra.mxu0 0
      %1295 = vmatprep.mubr.bf16.mxu0 0
      %1296 = vmatmul.mubr.bf16.gmra.mrb[0].mxu0 %v714
      %v1297 = vpop.f32.mrb[0].mxu0
      %v1298 = vadd.f32 0.0, %v1297
      %v1299 = vpop.f32.mrb[0].mxu0
      %v1300 = vpop.f32.mrb[0].mxu0
      %v1301 = vadd.f32 0.0, %v1300
      %v1302 = vpop.f32.mrb[0].mxu0
      %1303 = vmatprep.mubr.bf16.mxu0 0
      %1304 = vmatmul.mubr.bf16.gmra.mrb[0].mxu0 %v715
      %v1305 = vpop.f32.mrb[0].mxu0
      %v1306 = vadd.f32 0.0, %v1305
      %v1307 = vpop.f32.mrb[0].mxu0
      %v1308 = vpop.f32.mrb[0].mxu0
      %v1309 = vadd.f32 0.0, %v1308
      %v1310 = vpop.f32.mrb[0].mxu0
      %1311 = vmatprep.mubr.bf16.mxu0 0
      %1312 = vmatmul.mubr.bf16.gmra.mrb[0].mxu0 %v716
      %v1313 = vpop.f32.mrb[0].mxu0
      %v1314 = vadd.f32 0.0, %v1313
      %v1315 = vpop.f32.mrb[0].mxu0
      %v1316 = vpop.f32.mrb[0].mxu0
      %v1317 = vadd.f32 0.0, %v1316
      %v1318 = vpop.f32.mrb[0].mxu0
      %1319 = vmatprep.mubr.bf16.mxu0 0
      %1320 = vmatmul.mubr.bf16.gmra.mrb[0].mxu0 %v1213
      %v1321 = vpop.f32.mrb[0].mxu0
      %v1322 = vadd.f32 0.0, %v1321
      %v1323 = vpop.f32.mrb[0].mxu0
      %v1324 = vpop.f32.mrb[0].mxu0
      %v1325 = vadd.f32 0.0, %v1324
      %v1326 = vpop.f32.mrb[0].mxu0
      %1327 = vdwg.mxu0
      %v1328 = vadd.f32 %v1186, %v1298
      %v1329 = vadd.f32 %v1187, %v1301
      %v1330 = vadd.f32 %v1188, %v1306
      %v1331 = vadd.f32 %v1189, %v1309
      %v1332 = vadd.f32 %v1190, %v1314
      %v1333 = vadd.f32 %v1191, %v1317
      %v1334 = vadd.f32 %v1192, %v1322
      %v1335 = vadd.f32 %v1193, %v1325
      %1336 = vst [vmem:[#allocation2] sm:$0xff] %v1328
      %1337 = vst [vmem:[#allocation2 + $0x8] sm:$0xff] %v1329
      %1338 = vst [vmem:[#allocation2 + $0x10] sm:$0xff] %v1330
      %1339 = vst [vmem:[#allocation2 + $0x18] sm:$0xff] %v1331
      %1340 = vst [vmem:[#allocation2 + $0x20] sm:$0xff] %v1332
      %1341 = vst [vmem:[#allocation2 + $0x28] sm:$0xff] %v1333
      %1342 = vst [vmem:[#allocation2 + $0x30] sm:$0xff] %v1334
      %1343 = vst [vmem:[#allocation2 + $0x38] sm:$0xff] %v1335
      %v1344 = vld [vmem:[#allocation2] sm:$0xff]
      %v1345 = vld [vmem:[#allocation2 + $0x8] sm:$0xff]
      %v1346 = vld [vmem:[#allocation2 + $0x10] sm:$0xff]
      %v1347 = vld [vmem:[#allocation2 + $0x18] sm:$0xff]
      %v1348 = vld [vmem:[#allocation2 + $0x20] sm:$0xff]
      %v1349 = vld [vmem:[#allocation2 + $0x28] sm:$0xff]
      %v1350 = vld [vmem:[#allocation2 + $0x30] sm:$0xff]
      %v1351 = vld [vmem:[#allocation2 + $0x38] sm:$0xff]
      %s1352 = scalar_lea.vmem %s210, 384
      %v1353 = vld [vmem:[%s1352] sm:$0xf]
      %v1354 = vld [vmem:[%s1352 + $0x4] sm:$0xf]
      %v1355 = vld [vmem:[%s1352 + $0x8] sm:$0xf]
      %v1356 = vld [vmem:[%s1352 + $0xc] sm:$0xf]
      %v1357 = vld [vmem:[%s1352 + $0x10] sm:$0xf]
      %v1358 = vld [vmem:[%s1352 + $0x14] sm:$0xf]
      %v1359 = vld [vmem:[%s1352 + $0x18] sm:$0xf]
      %v1360 = vld [vmem:[%s1352 + $0x1c] sm:$0xf]
      %v1361 = vld [vmem:[%s1352 + $0x20] sm:$0xf]
      %v1362 = vld [vmem:[%s1352 + $0x24] sm:$0xf]
      %v1363 = vld [vmem:[%s1352 + $0x28] sm:$0xf]
      %v1364 = vld [vmem:[%s1352 + $0x2c] sm:$0xf]
      %v1365 = vld [vmem:[%s1352 + $0x30] sm:$0xf]
      %v1366 = vld [vmem:[%s1352 + $0x34] sm:$0xf]
      %v1367 = vld [vmem:[%s1352 + $0x38] sm:$0xf]
      %v1368 = vld [vmem:[%s1352 + $0x3c] sm:$0xf]
      %v1371 = vunpack.c.l.b16 %v243
      %v1372 = vunpack.c.l.b16 %v245
      %v1373 = vpack.c.b16 %v1372, %v1371
      %v1391 = vunpack.c.l.b16 %v1353
      %v1392 = vunpack.c.l.b16 %v1354
      %v1393 = vunpack.c.l.b16 %v1355
      %v1394 = vunpack.c.l.b16 %v1356
      %v1395 = vunpack.c.l.b16 %v1357
      %v1396 = vunpack.c.l.b16 %v1358
      %v1397 = vunpack.c.l.b16 %v1359
      %v1398 = vunpack.c.l.b16 %v1360
      %v1399 = vunpack.c.l.b16 %v1361
      %v1400 = vunpack.c.l.b16 %v1362
      %v1401 = vunpack.c.l.b16 %v1363
      %v1402 = vunpack.c.l.b16 %v1364
      %v1403 = vunpack.c.l.b16 %v1365
      %v1404 = vunpack.c.l.b16 %v1366
      %v1405 = vunpack.c.l.b16 %v1367
      %v1406 = vunpack.c.l.b16 %v1368
      %v1407 = vpack.c.b16 %v1392, %v1391
      %v1408 = vpack.c.b16 %v1394, %v1393
      %v1409 = vpack.c.b16 %v1396, %v1395
      %v1410 = vpack.c.b16 %v1398, %v1397
      %v1411 = vpack.c.b16 %v1400, %v1399
      %v1412 = vpack.c.b16 %v1402, %v1401
      %v1413 = vpack.c.b16 %v1404, %v1403
      %v1414 = vpack.c.b16 %v1406, %v1405
      %1423 = vmatprep.subr.bf16.mxu0 0
      %1424 = vmatpush1.bf16.msra.mxu0 %v1407
      %1425 = vmatprep.subr.bf16.mxu0 0
      %1426 = vmatpush1.bf16.msra.mxu0 %v1408
      %1427 = vmatprep.subr.bf16.mxu0 0
      %1428 = vmatpush1.bf16.msra.mxu0 %v1409
      %1429 = vmatprep.subr.bf16.mxu0 0
      %1430 = vmatpush1.bf16.msra.mxu0 %v1410
      %1431 = vmatprep.subr.bf16.mxu0 0
      %1432 = vmatpush1.bf16.msra.mxu0 %v1411
      %1433 = vmatprep.subr.bf16.mxu0 0
      %1434 = vmatpush1.bf16.msra.mxu0 %v1412
      %1435 = vmatprep.subr.bf16.mxu0 0
      %1436 = vmatpush1.bf16.msra.mxu0 %v1413
      %1437 = vmatprep.subr.bf16.mxu0 0
      %1438 = vmatpush1.bf16.msra.mxu0 %v1414
      %1439 = vmatprep.subr.bf16.mxu0 0
      %1440 = vmatpush1.bf16.msra.mxu0 0
      %1441 = vmatprep.subr.bf16.mxu0 0
      %1442 = vmatpush1.bf16.msra.mxu0 0
      %1443 = vmatprep.subr.bf16.mxu0 0
      %1444 = vmatpush1.bf16.msra.mxu0 0
      %1445 = vmatprep.subr.bf16.mxu0 0
      %1446 = vmatpush1.bf16.msra.mxu0 0
      %1447 = vmatprep.subr.bf16.mxu0 0
      %1448 = vmatpush1.bf16.msra.mxu0 0
      %1449 = vmatprep.subr.bf16.mxu0 0
      %1450 = vmatpush1.bf16.msra.mxu0 0
      %1451 = vmatprep.subr.bf16.mxu0 0
      %1452 = vmatpush1.bf16.msra.mxu0 0
      %1453 = vmatprep.subr.bf16.mxu0 0
      %1454 = vmatpush1.bf16.msra.mxu0 0
      %1455 = vmatprep.mubr.bf16.mxu0 0
      %1456 = vmatmul.mubr.bf16.gmra.mrb[0].mxu0 %v297
      %v1457 = vpop.f32.mrb[0].mxu0
      %v1458 = vadd.f32 0.0, %v1457
      %v1459 = vpop.f32.mrb[0].mxu0
      %v1460 = vpop.f32.mrb[0].mxu0
      %v1461 = vadd.f32 0.0, %v1460
      %v1462 = vpop.f32.mrb[0].mxu0
      %1463 = vmatprep.mubr.bf16.mxu0 0
      %1464 = vmatmul.mubr.bf16.gmra.mrb[0].mxu0 %v298
      %v1465 = vpop.f32.mrb[0].mxu0
      %v1466 = vadd.f32 0.0, %v1465
      %v1467 = vpop.f32.mrb[0].mxu0
      %v1468 = vpop.f32.mrb[0].mxu0
      %v1469 = vadd.f32 0.0, %v1468
      %v1470 = vpop.f32.mrb[0].mxu0
      %1471 = vmatprep.mubr.bf16.mxu0 0
      %1472 = vmatmul.mubr.bf16.gmra.mrb[0].mxu0 %v879
      %v1473 = vpop.f32.mrb[0].mxu0
      %v1474 = vadd.f32 0.0, %v1473
      %v1475 = vpop.f32.mrb[0].mxu0
      %v1476 = vpop.f32.mrb[0].mxu0
      %v1477 = vadd.f32 0.0, %v1476
      %v1478 = vpop.f32.mrb[0].mxu0
      %1479 = vmatprep.mubr.bf16.mxu0 0
      %1480 = vmatmul.mubr.bf16.gmra.mrb[0].mxu0 %v1373
      %v1481 = vpop.f32.mrb[0].mxu0
      %v1482 = vadd.f32 0.0, %v1481
      %v1483 = vpop.f32.mrb[0].mxu0
      %v1484 = vpop.f32.mrb[0].mxu0
      %v1485 = vadd.f32 0.0, %v1484
      %v1486 = vpop.f32.mrb[0].mxu0
      %1487 = vdwg.mxu0
      %v1488 = vadd.f32 %v1344, %v1458
      %v1489 = vadd.f32 %v1345, %v1461
      %v1490 = vadd.f32 %v1346, %v1466
      %v1491 = vadd.f32 %v1347, %v1469
      %v1492 = vadd.f32 %v1348, %v1474
      %v1493 = vadd.f32 %v1349, %v1477
      %v1494 = vadd.f32 %v1350, %v1482
      %v1495 = vadd.f32 %v1351, %v1485
      %1496 = vst [vmem:[#allocation2] sm:$0xff] %v1488
      %1497 = vst [vmem:[#allocation2 + $0x8] sm:$0xff] %v1489
      %1498 = vst [vmem:[#allocation2 + $0x10] sm:$0xff] %v1490
      %1499 = vst [vmem:[#allocation2 + $0x18] sm:$0xff] %v1491
      %1500 = vst [vmem:[#allocation2 + $0x20] sm:$0xff] %v1492
      %1501 = vst [vmem:[#allocation2 + $0x28] sm:$0xff] %v1493
      %1502 = vst [vmem:[#allocation2 + $0x30] sm:$0xff] %v1494
      %1503 = vst [vmem:[#allocation2 + $0x38] sm:$0xff] %v1495
      %v1506 = vrot.slane %v243, 5
      %v1507 = vrot.slane %v1506, 4
      %v1508 = vrot.slane %v244, 5
      %v1509 = vsel %vm442, %v1507, %v1508
      %v1510 = vrot.slane %v245, 5
      %v1511 = vrot.slane %v1510, 4
      %v1512 = vrot.slane %v246, 5
      %v1513 = vsel %vm442, %v1511, %v1512
      %v1514 = vld [vmem:[#allocation2] sm:$0xff]
      %v1515 = vld [vmem:[#allocation2 + $0x8] sm:$0xff]
      %v1516 = vld [vmem:[#allocation2 + $0x10] sm:$0xff]
      %v1517 = vld [vmem:[#allocation2 + $0x18] sm:$0xff]
      %v1518 = vld [vmem:[#allocation2 + $0x20] sm:$0xff]
      %v1519 = vld [vmem:[#allocation2 + $0x28] sm:$0xff]
      %v1520 = vld [vmem:[#allocation2 + $0x30] sm:$0xff]
      %v1521 = vld [vmem:[#allocation2 + $0x38] sm:$0xff]
      %s1522 = scalar_lea.vmem %s210, 448
      %v1523 = vld [vmem:[%s1522] sm:$0xf]
      %v1524 = vld [vmem:[%s1522 + $0x4] sm:$0xf]
      %v1525 = vld [vmem:[%s1522 + $0x8] sm:$0xf]
      %v1526 = vld [vmem:[%s1522 + $0xc] sm:$0xf]
      %v1527 = vld [vmem:[%s1522 + $0x10] sm:$0xf]
      %v1528 = vld [vmem:[%s1522 + $0x14] sm:$0xf]
      %v1529 = vld [vmem:[%s1522 + $0x18] sm:$0xf]
      %v1530 = vld [vmem:[%s1522 + $0x1c] sm:$0xf]
      %v1531 = vld [vmem:[%s1522 + $0x20] sm:$0xf]
      %v1532 = vld [vmem:[%s1522 + $0x24] sm:$0xf]
      %v1533 = vld [vmem:[%s1522 + $0x28] sm:$0xf]
      %v1534 = vld [vmem:[%s1522 + $0x2c] sm:$0xf]
      %v1535 = vld [vmem:[%s1522 + $0x30] sm:$0xf]
      %v1536 = vld [vmem:[%s1522 + $0x34] sm:$0xf]
      %v1537 = vld [vmem:[%s1522 + $0x38] sm:$0xf]
      %v1538 = vld [vmem:[%s1522 + $0x3c] sm:$0xf]
      %v1539 = vunpack.c.l.b16 %v1509
      %v1540 = vunpack.c.l.b16 %v1513
      %v1541 = vpack.c.b16 %v1540, %v1539
      %v1559 = vunpack.c.l.b16 %v1523
      %v1560 = vunpack.c.l.b16 %v1524
      %v1561 = vunpack.c.l.b16 %v1525
      %v1562 = vunpack.c.l.b16 %v1526
      %v1563 = vunpack.c.l.b16 %v1527
      %v1564 = vunpack.c.l.b16 %v1528
      %v1565 = vunpack.c.l.b16 %v1529
      %v1566 = vunpack.c.l.b16 %v1530
      %v1567 = vunpack.c.l.b16 %v1531
      %v1568 = vunpack.c.l.b16 %v1532
      %v1569 = vunpack.c.l.b16 %v1533
      %v1570 = vunpack.c.l.b16 %v1534
      %v1571 = vunpack.c.l.b16 %v1535
      %v1572 = vunpack.c.l.b16 %v1536
      %v1573 = vunpack.c.l.b16 %v1537
      %v1574 = vunpack.c.l.b16 %v1538
      %v1575 = vpack.c.b16 %v1560, %v1559
      %v1576 = vpack.c.b16 %v1562, %v1561
      %v1577 = vpack.c.b16 %v1564, %v1563
      %v1578 = vpack.c.b16 %v1566, %v1565
      %v1579 = vpack.c.b16 %v1568, %v1567
      %v1580 = vpack.c.b16 %v1570, %v1569
      %v1581 = vpack.c.b16 %v1572, %v1571
      %v1582 = vpack.c.b16 %v1574, %v1573
      %1591 = vmatprep.subr.bf16.mxu0 0
      %1592 = vmatpush1.bf16.msra.mxu0 %v1575
      %1593 = vmatprep.subr.bf16.mxu0 0
      %1594 = vmatpush1.bf16.msra.mxu0 %v1576
      %1595 = vmatprep.subr.bf16.mxu0 0
      %1596 = vmatpush1.bf16.msra.mxu0 %v1577
      %1597 = vmatprep.subr.bf16.mxu0 0
      %1598 = vmatpush1.bf16.msra.mxu0 %v1578
      %1599 = vmatprep.subr.bf16.mxu0 0
      %1600 = vmatpush1.bf16.msra.mxu0 %v1579
      %1601 = vmatprep.subr.bf16.mxu0 0
      %1602 = vmatpush1.bf16.msra.mxu0 %v1580
      %1603 = vmatprep.subr.bf16.mxu0 0
      %1604 = vmatpush1.bf16.msra.mxu0 %v1581
      %1605 = vmatprep.subr.bf16.mxu0 0
      %1606 = vmatpush1.bf16.msra.mxu0 %v1582
      %1607 = vmatprep.subr.bf16.mxu0 0
      %1608 = vmatpush1.bf16.msra.mxu0 0
      %1609 = vmatprep.subr.bf16.mxu0 0
      %1610 = vmatpush1.bf16.msra.mxu0 0
      %1611 = vmatprep.subr.bf16.mxu0 0
      %1612 = vmatpush1.bf16.msra.mxu0 0
      %1613 = vmatprep.subr.bf16.mxu0 0
      %1614 = vmatpush1.bf16.msra.mxu0 0
      %1615 = vmatprep.subr.bf16.mxu0 0
      %1616 = vmatpush1.bf16.msra.mxu0 0
      %1617 = vmatprep.subr.bf16.mxu0 0
      %1618 = vmatpush1.bf16.msra.mxu0 0
      %1619 = vmatprep.subr.bf16.mxu0 0
      %1620 = vmatpush1.bf16.msra.mxu0 0
      %1621 = vmatprep.subr.bf16.mxu0 0
      %1622 = vmatpush1.bf16.msra.mxu0 0
      %1623 = vmatprep.mubr.bf16.mxu0 0
      %1624 = vmatmul.mubr.bf16.gmra.mrb[0].mxu0 %v510
      %v1625 = vpop.f32.mrb[0].mxu0
      %v1626 = vadd.f32 0.0, %v1625
      %v1627 = vpop.f32.mrb[0].mxu0
      %v1628 = vpop.f32.mrb[0].mxu0
      %v1629 = vadd.f32 0.0, %v1628
      %v1630 = vpop.f32.mrb[0].mxu0
      %1631 = vmatprep.mubr.bf16.mxu0 0
      %1632 = vmatmul.mubr.bf16.gmra.mrb[0].mxu0 %v511
      %v1633 = vpop.f32.mrb[0].mxu0
      %v1634 = vadd.f32 0.0, %v1633
      %v1635 = vpop.f32.mrb[0].mxu0
      %v1636 = vpop.f32.mrb[0].mxu0
      %v1637 = vadd.f32 0.0, %v1636
      %v1638 = vpop.f32.mrb[0].mxu0
      %1639 = vmatprep.mubr.bf16.mxu0 0
      %1640 = vmatmul.mubr.bf16.gmra.mrb[0].mxu0 %v1047
      %v1641 = vpop.f32.mrb[0].mxu0
      %v1642 = vadd.f32 0.0, %v1641
      %v1643 = vpop.f32.mrb[0].mxu0
      %v1644 = vpop.f32.mrb[0].mxu0
      %v1645 = vadd.f32 0.0, %v1644
      %v1646 = vpop.f32.mrb[0].mxu0
      %1647 = vmatprep.mubr.bf16.mxu0 0
      %1648 = vmatmul.mubr.bf16.gmra.mrb[0].mxu0 %v1541
      %v1649 = vpop.f32.mrb[0].mxu0
      %v1650 = vadd.f32 0.0, %v1649
      %v1651 = vpop.f32.mrb[0].mxu0
      %v1652 = vpop.f32.mrb[0].mxu0
      %v1653 = vadd.f32 0.0, %v1652
      %v1654 = vpop.f32.mrb[0].mxu0
      %1655 = vdwg.mxu0
      %v1656 = vadd.f32 %v1514, %v1626
      %v1657 = vadd.f32 %v1515, %v1629
      %v1658 = vadd.f32 %v1516, %v1634
      %v1659 = vadd.f32 %v1517, %v1637
      %v1660 = vadd.f32 %v1518, %v1642
      %v1661 = vadd.f32 %v1519, %v1645
      %v1662 = vadd.f32 %v1520, %v1650
      %v1663 = vadd.f32 %v1521, %v1653
      %1664 = vst [vmem:[#allocation2] sm:$0xff] %v1656
      %1665 = vst [vmem:[#allocation2 + $0x8] sm:$0xff] %v1657
      %1666 = vst [vmem:[#allocation2 + $0x10] sm:$0xff] %v1658
      %1667 = vst [vmem:[#allocation2 + $0x18] sm:$0xff] %v1659
      %1668 = vst [vmem:[#allocation2 + $0x20] sm:$0xff] %v1660
      %1669 = vst [vmem:[#allocation2 + $0x28] sm:$0xff] %v1661
      %1670 = vst [vmem:[#allocation2 + $0x30] sm:$0xff] %v1662
      %1671 = vst [vmem:[#allocation2 + $0x38] sm:$0xff] %v1663
      %v1672 = vrot.slane %v243, 6
      %v1673 = vrot.slane %v1672, 4
      %v1674 = vrot.slane %v244, 6
      %v1675 = vsel %vm647, %v1673, %v1674
      %v1676 = vrot.slane %v245, 6
      %v1677 = vrot.slane %v1676, 4
      %v1678 = vrot.slane %v246, 6
      %v1679 = vsel %vm647, %v1677, %v1678
      %v1680 = vld [vmem:[#allocation2] sm:$0xff]
      %v1681 = vld [vmem:[#allocation2 + $0x8] sm:$0xff]
      %v1682 = vld [vmem:[#allocation2 + $0x10] sm:$0xff]
      %v1683 = vld [vmem:[#allocation2 + $0x18] sm:$0xff]
      %v1684 = vld [vmem:[#allocation2 + $0x20] sm:$0xff]
      %v1685 = vld [vmem:[#allocation2 + $0x28] sm:$0xff]
      %v1686 = vld [vmem:[#allocation2 + $0x30] sm:$0xff]
      %v1687 = vld [vmem:[#allocation2 + $0x38] sm:$0xff]
      %s1688 = scalar_lea.vmem %s210, 512
      %v1689 = vld [vmem:[%s1688] sm:$0xf]
      %v1690 = vld [vmem:[%s1688 + $0x4] sm:$0xf]
      %v1691 = vld [vmem:[%s1688 + $0x8] sm:$0xf]
      %v1692 = vld [vmem:[%s1688 + $0xc] sm:$0xf]
      %v1693 = vld [vmem:[%s1688 + $0x10] sm:$0xf]
      %v1694 = vld [vmem:[%s1688 + $0x14] sm:$0xf]
      %v1695 = vld [vmem:[%s1688 + $0x18] sm:$0xf]
      %v1696 = vld [vmem:[%s1688 + $0x1c] sm:$0xf]
      %v1697 = vld [vmem:[%s1688 + $0x20] sm:$0xf]
      %v1698 = vld [vmem:[%s1688 + $0x24] sm:$0xf]
      %v1699 = vld [vmem:[%s1688 + $0x28] sm:$0xf]
      %v1700 = vld [vmem:[%s1688 + $0x2c] sm:$0xf]
      %v1701 = vld [vmem:[%s1688 + $0x30] sm:$0xf]
      %v1702 = vld [vmem:[%s1688 + $0x34] sm:$0xf]
      %v1703 = vld [vmem:[%s1688 + $0x38] sm:$0xf]
      %v1704 = vld [vmem:[%s1688 + $0x3c] sm:$0xf]
      %v1705 = vunpack.c.l.b16 %v1675
      %v1706 = vunpack.c.l.b16 %v1679
      %v1707 = vpack.c.b16 %v1706, %v1705
      %v1725 = vunpack.c.l.b16 %v1689
      %v1726 = vunpack.c.l.b16 %v1690
      %v1727 = vunpack.c.l.b16 %v1691
      %v1728 = vunpack.c.l.b16 %v1692
      %v1729 = vunpack.c.l.b16 %v1693
      %v1730 = vunpack.c.l.b16 %v1694
      %v1731 = vunpack.c.l.b16 %v1695
      %v1732 = vunpack.c.l.b16 %v1696
      %v1733 = vunpack.c.l.b16 %v1697
      %v1734 = vunpack.c.l.b16 %v1698
      %v1735 = vunpack.c.l.b16 %v1699
      %v1736 = vunpack.c.l.b16 %v1700
      %v1737 = vunpack.c.l.b16 %v1701
      %v1738 = vunpack.c.l.b16 %v1702
      %v1739 = vunpack.c.l.b16 %v1703
      %v1740 = vunpack.c.l.b16 %v1704
      %v1741 = vpack.c.b16 %v1726, %v1725
      %v1742 = vpack.c.b16 %v1728, %v1727
      %v1743 = vpack.c.b16 %v1730, %v1729
      %v1744 = vpack.c.b16 %v1732, %v1731
      %v1745 = vpack.c.b16 %v1734, %v1733
      %v1746 = vpack.c.b16 %v1736, %v1735
      %v1747 = vpack.c.b16 %v1738, %v1737
      %v1748 = vpack.c.b16 %v1740, %v1739
      %1757 = vmatprep.subr.bf16.mxu0 0
      %1758 = vmatpush1.bf16.msra.mxu0 %v1741
      %1759 = vmatprep.subr.bf16.mxu0 0
      %1760 = vmatpush1.bf16.msra.mxu0 %v1742
      %1761 = vmatprep.subr.bf16.mxu0 0
      %1762 = vmatpush1.bf16.msra.mxu0 %v1743
      %1763 = vmatprep.subr.bf16.mxu0 0
      %1764 = vmatpush1.bf16.msra.mxu0 %v1744
      %1765 = vmatprep.subr.bf16.mxu0 0
      %1766 = vmatpush1.bf16.msra.mxu0 %v1745
      %1767 = vmatprep.subr.bf16.mxu0 0
      %1768 = vmatpush1.bf16.msra.mxu0 %v1746
      %1769 = vmatprep.subr.bf16.mxu0 0
      %1770 = vmatpush1.bf16.msra.mxu0 %v1747
      %1771 = vmatprep.subr.bf16.mxu0 0
      %1772 = vmatpush1.bf16.msra.mxu0 %v1748
      %1773 = vmatprep.subr.bf16.mxu0 0
      %1774 = vmatpush1.bf16.msra.mxu0 0
      %1775 = vmatprep.subr.bf16.mxu0 0
      %1776 = vmatpush1.bf16.msra.mxu0 0
      %1777 = vmatprep.subr.bf16.mxu0 0
      %1778 = vmatpush1.bf16.msra.mxu0 0
      %1779 = vmatprep.subr.bf16.mxu0 0
      %1780 = vmatpush1.bf16.msra.mxu0 0
      %1781 = vmatprep.subr.bf16.mxu0 0
      %1782 = vmatpush1.bf16.msra.mxu0 0
      %1783 = vmatprep.subr.bf16.mxu0 0
      %1784 = vmatpush1.bf16.msra.mxu0 0
      %1785 = vmatprep.subr.bf16.mxu0 0
      %1786 = vmatpush1.bf16.msra.mxu0 0
      %1787 = vmatprep.subr.bf16.mxu0 0
      %1788 = vmatpush1.bf16.msra.mxu0 0
      %1789 = vmatprep.mubr.bf16.mxu0 0
      %1790 = vmatmul.mubr.bf16.gmra.mrb[0].mxu0 %v715
      %v1791 = vpop.f32.mrb[0].mxu0
      %v1792 = vadd.f32 0.0, %v1791
      %v1793 = vpop.f32.mrb[0].mxu0
      %v1794 = vpop.f32.mrb[0].mxu0
      %v1795 = vadd.f32 0.0, %v1794
      %v1796 = vpop.f32.mrb[0].mxu0
      %1797 = vmatprep.mubr.bf16.mxu0 0
      %1798 = vmatmul.mubr.bf16.gmra.mrb[0].mxu0 %v716
      %v1799 = vpop.f32.mrb[0].mxu0
      %v1800 = vadd.f32 0.0, %v1799
      %v1801 = vpop.f32.mrb[0].mxu0
      %v1802 = vpop.f32.mrb[0].mxu0
      %v1803 = vadd.f32 0.0, %v1802
      %v1804 = vpop.f32.mrb[0].mxu0
      %1805 = vmatprep.mubr.bf16.mxu0 0
      %1806 = vmatmul.mubr.bf16.gmra.mrb[0].mxu0 %v1213
      %v1807 = vpop.f32.mrb[0].mxu0
      %v1808 = vadd.f32 0.0, %v1807
      %v1809 = vpop.f32.mrb[0].mxu0
      %v1810 = vpop.f32.mrb[0].mxu0
      %v1811 = vadd.f32 0.0, %v1810
      %v1812 = vpop.f32.mrb[0].mxu0
      %1813 = vmatprep.mubr.bf16.mxu0 0
      %1814 = vmatmul.mubr.bf16.gmra.mrb[0].mxu0 %v1707
      %v1815 = vpop.f32.mrb[0].mxu0
      %v1816 = vadd.f32 0.0, %v1815
      %v1817 = vpop.f32.mrb[0].mxu0
      %v1818 = vpop.f32.mrb[0].mxu0
      %v1819 = vadd.f32 0.0, %v1818
      %v1820 = vpop.f32.mrb[0].mxu0
      %1821 = vdwg.mxu0
      %v1822 = vadd.f32 %v1680, %v1792
      %v1823 = vadd.f32 %v1681, %v1795
      %v1824 = vadd.f32 %v1682, %v1800
      %v1825 = vadd.f32 %v1683, %v1803
      %v1826 = vadd.f32 %v1684, %v1808
      %v1827 = vadd.f32 %v1685, %v1811
      %v1828 = vadd.f32 %v1686, %v1816
      %v1829 = vadd.f32 %v1687, %v1819
      %1830 = vst [vmem:[#allocation2] sm:$0xff] %v1822
      %1831 = vst [vmem:[#allocation2 + $0x8] sm:$0xff] %v1823
      %1832 = vst [vmem:[#allocation2 + $0x10] sm:$0xff] %v1824
      %1833 = vst [vmem:[#allocation2 + $0x18] sm:$0xff] %v1825
      %1834 = vst [vmem:[#allocation2 + $0x20] sm:$0xff] %v1826
      %1835 = vst [vmem:[#allocation2 + $0x28] sm:$0xff] %v1827
      %1836 = vst [vmem:[#allocation2 + $0x30] sm:$0xff] %v1828
      %1837 = vst [vmem:[#allocation2 + $0x38] sm:$0xff] %v1829
      %v1838 = vld [vmem:[#allocation2] sm:$0xff]
      %v1839 = vld [vmem:[#allocation2 + $0x8] sm:$0xff]
      %v1840 = vld [vmem:[#allocation2 + $0x10] sm:$0xff]
      %v1841 = vld [vmem:[#allocation2 + $0x18] sm:$0xff]
      %v1842 = vld [vmem:[#allocation2 + $0x20] sm:$0xff]
      %v1843 = vld [vmem:[#allocation2 + $0x28] sm:$0xff]
      %v1844 = vld [vmem:[#allocation2 + $0x30] sm:$0xff]
      %v1845 = vld [vmem:[#allocation2 + $0x38] sm:$0xff]
      %v1846 = vld [vmem:[%s213] sm:$0x1]
      %v1848 = vlaneseq
      %v1849 = vshrl.u32 %v1848, 7
      %v1850 = vsub.s32 0, %v1849
      %v1851 = vrot.slane %v1846, %v1850
      %v1853 = vadd.f32 %v1838, %v1851
      %v1854 = vadd.f32 %v1839, %v1851
      %v1855 = vadd.f32 %v1840, %v1851
      %v1856 = vadd.f32 %v1841, %v1851
      %v1857 = vadd.f32 %v1842, %v1851
      %v1858 = vadd.f32 %v1843, %v1851
      %v1859 = vadd.f32 %v1844, %v1851
      %v1860 = vadd.f32 %v1845, %v1851
      %v1861 = vmax.f32 %v1853, 0.0
      %v1862 = vmax.f32 %v1854, 0.0
      %v1863 = vmax.f32 %v1855, 0.0
      %v1864 = vmax.f32 %v1856, 0.0
      %v1865 = vmax.f32 %v1857, 0.0
      %v1866 = vmax.f32 %v1858, 0.0
      %v1867 = vmax.f32 %v1859, 0.0
      %v1868 = vmax.f32 %v1860, 0.0
      %v1869 = vpack.c.bf16 %v1861, %v1861
      %v1870 = vpack.c.bf16 %v1862, %v1862
      %v1871 = vpack.c.bf16 %v1863, %v1863
      %v1872 = vpack.c.bf16 %v1864, %v1864
      %v1873 = vpack.c.bf16 %v1865, %v1865
      %v1874 = vpack.c.bf16 %v1866, %v1866
      %v1875 = vpack.c.bf16 %v1867, %v1867
      %v1876 = vpack.c.bf16 %v1868, %v1868
      %1877 = vst [vmem:[%s221] sm:$0xf] %v1869
      %1878 = vst [vmem:[%s221 + $0x4] sm:$0xf] %v1870
      %1879 = vst [vmem:[%s221 + $0x8] sm:$0xf] %v1871
      %1880 = vst [vmem:[%s221 + $0xc] sm:$0xf] %v1872
      %1881 = vst [vmem:[%s221 + $0x10] sm:$0xf] %v1873
      %1882 = vst [vmem:[%s221 + $0x14] sm:$0xf] %v1874
      %1883 = vst [vmem:[%s221 + $0x18] sm:$0xf] %v1875
      %1884 = vst [vmem:[%s221 + $0x1c] sm:$0xf] %v1876
      %p1885 = scmp.lt.s32.totalorder %s18, 1
      %s1886 = scalar_select %p1885, %s18, 1
      %p1887 = scmp.lt.s32.totalorder %s19, 0
      %s1888 = scalar_select %p1887, %s19, 0
      %s1889 = smul.addr %s1886, 8
      %s1890 = sadd.s32 %s1888, %s1889
      %s1891 = smul.addr %s1890, 4
      %s1892 = scalar_lea.vmem %s3, %s1891
      // Predicated region
      $region33: #{bottleneck_forward.4} parent=31 // pred_check
        %p1893 = pneg %p124
      $region34: #{bottleneck_forward.4} parent=31 // pred_check_branch
        %1895 = sbr.rel (%p1893) target = $region36
      $region35: #{bottleneck_forward.4} parent=31 // pred_region
        _
      $region36: #{bottleneck_forward.4} parent=31 // pred_fallthru
        _
    $region32: #{bottleneck_forward.4} parent=5 // pred_fallthru
      _
    %p1896 = scmp.le.s32.totalorder 2, %s9
    // Predicated region
    $region37: #{bottleneck_forward.4} parent=5 // pred_check
      %p1897 = pneg %p1896
    $region38: #{bottleneck_forward.4} parent=5 // pred_check_branch
      %1899 = sbr.rel (%p1897) target = $region40
    $region39: #{bottleneck_forward.4} parent=5 // pred_region
      %s1900 = ssub.s32 %s9, 2
      // Predicated region
      $region41: #{bottleneck_forward.4} parent=39 // pred_check
        %p1901 = pneg %p130
      $region42: #{bottleneck_forward.4} parent=39 // pred_check_branch
        %1903 = sbr.rel (%p1901) target = $region44
      $region43: #{bottleneck_forward.4} parent=39 // pred_region
        %p1904 = scmp.lt.s32.totalorder %s20, 1
        %s1905 = scalar_select %p1904, %s20, 1
        %p1906 = scmp.lt.s32.totalorder %s21, 0
        %s1907 = scalar_select %p1906, %s21, 0
        %s1908 = smul.addr %s1905, 8
        %s1909 = sadd.s32 %s1907, %s1908
        %s1910 = smul.addr %s1909, 4
        %s1911 = scalar_lea.vmem %s3, %s1910
      $region44: #{bottleneck_forward.4} parent=39 // pred_fallthru
        _
    $region40: #{bottleneck_forward.4} parent=5 // pred_fallthru
      _
  $region6: #{bottleneck_forward.4} parent=0 // loop_footer
    %s13 = sadd.s32 1, %s9
  $region7: #{bottleneck_forward.4} parent=0 // loop_footer_branch
    %8 = sbr.rel target = $region3
  $region8: #{bottleneck_forward.4} parent=0 // loop_exit
    _

</llo_original>
